<compile_context>
chip_gen: v7x
topology: tpu7x:2x2x1
jax: 0.10.0
libtpu: 0.0.40
codegen_flags: <defaults>
</compile_context>

<pallas_src>
import functools

import jax
import jax.numpy as jnp
from jax import lax
from jax.experimental import pallas as pl
from jax.experimental.pallas import tpu as pltpu


# ---------------------------------------------------------------------------
# VMEM budget: use most of physical VMEM (tile size is the main mem-bound
# lever), leaving headroom for Mosaic-internal scratch.
# ---------------------------------------------------------------------------
def _compute_vmem_limit():
    try:
        cap = pltpu.get_tpu_info().vmem_capacity_bytes
        return int(min(cap - 16 * 1024 * 1024, 100 * 1024 * 1024))
    except Exception:
        return None          # fall back to the compiler default


_VMEM_LIMIT = _compute_vmem_limit()


# ---------------------------------------------------------------------------
# In-kernel helpers (pure jnp, traced inside the Pallas kernels)
# ---------------------------------------------------------------------------
def _rmsnorm(x, w, eps=1e-5):
    # x: (T, D) f32, w: (D,) f32.  rsqrt goes to the EUP slot.
    return x * lax.rsqrt(jnp.mean(x * x, axis=-1, keepdims=True) + eps) * w


def _gelu(x):
    # Exact erf GELU (matches the reference module; tanh approx would change
    # semantics): x * (1 + erf(x / sqrt(2))) / 2
    return x * (1.0 + lax.erf(x * jnp.float32(0.7071067811865476))) * 0.5


# ---------------------------------------------------------------------------
# Pallas kernels
# ---------------------------------------------------------------------------
def transformer_block_kernel(x_ref, mask_ref, ln1_ref, ln2_ref, wqkv_ref,
                             wo_ref, w1_ref, w2_ref, o_ref, *, num_heads):
    # x block: (1, T, D) f32; mask: (T, T) f32 additive; weights are bf16.
    x = x_ref[0]                                   # (T, D) f32
    T, D = x.shape
    dk = D // num_heads

    # --- sub-layer 1: RMSNorm -> fused-QKV causal MHSA -> residual ----------
    h = _rmsnorm(x, ln1_ref[0]).astype(jnp.bfloat16)
    # One wide MXU pass (N = 3D); 1/sqrt(dk) is baked into the Wq columns.
    qkv = jnp.dot(h, wqkv_ref[...], preferred_element_type=jnp.float32)  # (T, 3D)
    q3 = qkv[:, :D].reshape(T, num_heads, dk).astype(jnp.bfloat16)
    k3 = qkv[:, D:2 * D].reshape(T, num_heads, dk).astype(jnp.bfloat16)
    v3 = qkv[:, 2 * D:].reshape(T, num_heads, dk).astype(jnp.bfloat16)

    # Head-batched attention (dot_general batch dim = h).
    s = jnp.einsum("qhd,khd->hqk", q3, k3,
                   preferred_element_type=jnp.float32)           # (H, T, T) f32
    s = s + mask_ref[...][None, :, :]                            # causal mask
    s = s - jnp.max(s, axis=-1, keepdims=True)
    e = jnp.exp(s)
    # Division replaced by EUP reciprocal.
    p = e * pl.reciprocal(jnp.sum(e, axis=-1, keepdims=True), approx=True)
    ctx = jnp.einsum("hqk,khd->qhd", p.astype(jnp.bfloat16), v3,
                     preferred_element_type=jnp.float32)         # (T, H, dk)
    attn = jnp.dot(ctx.reshape(T, D).astype(jnp.bfloat16), wo_ref[...],
                   preferred_element_type=jnp.float32)
    # attn_pdrop / residual_pdrop are 0.0 -> dropout identity.
    x1 = x + attn

    # --- sub-layer 2: RMSNorm -> FFN (exact-erf GELU) -> residual ------------
    h2 = _rmsnorm(x1, ln2_ref[0]).astype(jnp.bfloat16)
    f = jnp.dot(h2, w1_ref[...], preferred_element_type=jnp.float32)
    f = _gelu(f)
    f = jnp.dot(f.astype(jnp.bfloat16), w2_ref[...],
                preferred_element_type=jnp.float32)
    o_ref[0] = x1 + f


def final_head_kernel(x_ref, lnf_ref, lmw_ref, o_ref):
    # x block: (1, T, D) f32; lmw block: (D, tv) bf16; out block: (1, T, tv).
    # TODO(synk): emit bf16 logits (halves writeback HBM traffic) once the
    # downstream loss accepts it; kept f32 to match the reference dtype.
    h = _rmsnorm(x_ref[0], lnf_ref[0])
    o_ref[0] = jnp.dot(h.astype(jnp.bfloat16), lmw_ref[...],
                       preferred_element_type=jnp.float32)


# ---------------------------------------------------------------------------
# Wrappers (pallas_call plumbing)
# ---------------------------------------------------------------------------
def run_transformer_block(x, mask, lp, num_heads):
    B, T, D = x.shape
    d_fnn = lp["w1"].shape[1]
    kernel = functools.partial(transformer_block_kernel, num_heads=num_heads)

    def const(shape):
        # Block index constant across the grid -> fetch once, single buffer.
        nd = len(shape)
        return pl.BlockSpec(shape, lambda b: (0,) * nd,
                            pipeline_mode=pl.Buffered(1))

    return pl.pallas_call(
        kernel,
        out_shape=jax.ShapeDtypeStruct((B, T, D), jnp.float32),
        grid=(B,),
        in_specs=[
            pl.BlockSpec((1, T, D), lambda b: (b, 0, 0)),
            const((T, T)),              # additive causal mask (f32)
            const((1, D)),              # ln1 (f32)
            const((1, D)),              # ln2 (f32)
            const((D, 3 * D)),          # fused wqkv (bf16, scale baked in)
            const((D, D)),              # wo  (bf16)
            const((D, d_fnn)),          # w1  (bf16)
            const((d_fnn, D)),          # w2  (bf16)
        ],
        out_specs=pl.BlockSpec((1, T, D), lambda b: (b, 0, 0)),
        compiler_params=pltpu.CompilerParams(
            dimension_semantics=("parallel",),
            vmem_limit_bytes=_VMEM_LIMIT),
    )(x, mask, lp["ln1"], lp["ln2"], lp["wqkv"], lp["wo"], lp["w1"], lp["w2"])


def _pick_vocab_tile(V, target=512):
    # Largest multiple-of-128 divisor of V that is <= target (lane-dense
    # stores, >=512 fills the 256-wide MXU, fewer grid steps).
    best = None
    for cand in range(128, min(V, target) + 1, 128):
        if V % cand == 0:
            best = cand
    # TODO(synk): pad the vocab to a multiple of 128 when no such tile exists.
    return best if best is not None else V


def run_final_head(x, ln_final, lm_head_w):
    B, T, D = x.shape
    V = lm_head_w.shape[1]
    tv = _pick_vocab_tile(V)
    return pl.pallas_call(
        final_head_kernel,
        out_shape=jax.ShapeDtypeStruct((B, T, V), jnp.float32),
        grid=(B, V // tv),
        in_specs=[
            pl.BlockSpec((1, T, D), lambda b, v: (b, 0, 0)),
            pl.BlockSpec((1, D), lambda b, v: (0, 0),
                         pipeline_mode=pl.Buffered(1)),
            pl.BlockSpec((D, tv), lambda b, v: (0, v)),
        ],
        out_specs=pl.BlockSpec((1, T, tv), lambda b, v: (b, 0, v)),
        compiler_params=pltpu.CompilerParams(
            dimension_semantics=("parallel", "parallel"),
            vmem_limit_bytes=_VMEM_LIMIT),
    )(x, ln_final, lm_head_w)


def transformer_lm_forward(tokens, params, num_heads):
    # Embedding lookup (gather) is glue in plain JAX.
    B, T = tokens.shape
    tok_emb = params["token_emb"][tokens]                    # (B, T, D)
    pos_emb = params["pos_emb"][jnp.arange(T)][None, :, :]   # (1, T, D)
    x = tok_emb + pos_emb                                    # dropout p=0 -> identity
    # Additive causal mask, built once per forward (not per grid step).
    row = jnp.arange(T)[:, None]
    col = jnp.arange(T)[None, :]
    mask = jnp.where(col > row, jnp.float32(-1e30), jnp.float32(0.0))  # (T, T)
    for lp in params["layers"]:
        x = run_transformer_block(x, mask, lp, num_heads)
    return run_final_head(x, params["ln_final"], params["lm_head"])


# ---------------------------------------------------------------------------
# One-time parameter preparation: fuse QKV, bake attention scale, cast to bf16
# ---------------------------------------------------------------------------
def prepare_params(raw, num_heads):
    d_model = raw["token_emb"].shape[1]
    dk = d_model // num_heads
    scale = jnp.float32(1.0 / (dk ** 0.5))
    out = {
        "token_emb": raw["token_emb"],
        "pos_emb": raw["pos_emb"],
        "ln_final": raw["ln_final"],
        "lm_head": raw["lm_head"].astype(jnp.bfloat16),
        "layers": [],
    }
    for lp in raw["layers"]:
        wqkv = jnp.concatenate([lp["wq"] * scale, lp["wk"], lp["wv"]],
                               axis=1).astype(jnp.bfloat16)     # (D, 3D)
        out["layers"].append({
            "ln1": lp["ln1"],
            "ln2": lp["ln2"],
            "wqkv": wqkv,
            "wo": lp["wo"].astype(jnp.bfloat16),
            "w1": lp["w1"].astype(jnp.bfloat16),
            "w2": lp["w2"].astype(jnp.bfloat16),
        })
    return out


# ---------------------------------------------------------------------------
# Deterministic parameter init + demo
# ---------------------------------------------------------------------------
def init_params(key, vocab_size, context_length, d_model, num_layers, d_fnn):
    def nrm(k, shape, scale=0.02):
        return scale * jax.random.normal(k, shape, jnp.float32)

    keys = jax.random.split(key, 2 + num_layers + 1)
    params = {
        "token_emb": nrm(keys[0], (vocab_size, d_model)),
        "pos_emb": nrm(keys[1], (context_length, d_model)),
        "layers": [],
    }
    for i in range(num_layers):
        lk = jax.random.split(keys[2 + i], 6)
        params["layers"].append({
            "ln1": jnp.ones((1, d_model), jnp.float32),
            "ln2": jnp.ones((1, d_model), jnp.float32),
            # stored as (in, out): equivalent to PyTorch nn.Linear weight^T
            "wq": nrm(lk[0], (d_model, d_model)),
            "wk": nrm(lk[1], (d_model, d_model)),
            "wv": nrm(lk[2], (d_model, d_model)),
            "wo": nrm(lk[3], (d_model, d_model)),
            "w1": nrm(lk[4], (d_model, d_fnn)),
            "w2": nrm(lk[5], (d_fnn, d_model)),
        })
    params["ln_final"] = jnp.ones((1, d_model), jnp.float32)
    params["lm_head"] = nrm(keys[-1], (d_model, vocab_size))
    return params


if __name__ == "__main__":
    # Small but lane-dense config consistent with TransformerLM(__init__):
    # d_model / d_fnn / vocab are multiples of 128 so vregs / stores are
    # unmasked.  attn_pdrop = residual_pdrop = 0.0 -> dropout is identity.
    vocab_size = 256
    context_length = 16
    d_model = 128
    num_layers = 2
    d_fnn = 256
    num_heads = 4            # dk = 32
    B, T = 2, 16

    key = jax.random.PRNGKey(0)
    pkey, tkey = jax.random.split(key)
    raw_params = init_params(pkey, vocab_size, context_length, d_model,
                             num_layers, d_fnn)
    params = prepare_params(raw_params, num_heads)   # bf16 / fused, cast once
    tokens = jax.random.randint(tkey, (B, T), 0, vocab_size, dtype=jnp.int32)

    fwd = jax.jit(functools.partial(transformer_lm_forward,
                                    num_heads=num_heads))
    logits = fwd(tokens, params)
    jax.block_until_ready(logits)
    assert logits.shape == (B, T, vocab_size)
    assert bool(jnp.all(jnp.isfinite(logits)))
    print("KERNEL_OK")
</pallas_src>

<mosaic_0001>
module attributes {stable_mosaic.version = 11 : i64} {
  func.func @final_head_kernel(%arg0: i32, %arg1: i32, %arg2: memref<1x16x128xf32, #tpu.memory_space<vmem>>, %arg3: memref<1x128xf32, #tpu.memory_space<vmem>>, %arg4: memref<128x256xbf16, #tpu.memory_space<vmem>>, %arg5: memref<1x16x256xf32, #tpu.memory_space<vmem>>) attributes {dimension_semantics = [#tpu.dimension_semantics<parallel>, #tpu.dimension_semantics<parallel>], iteration_bounds = array<i64: 2, 1>, scalar_prefetch = 0 : i64, scratch_operands = 0 : i64, tpu.core_type = #tpu.core_type<tc>, window_params = [{transform_indices = @transform_0, window_bounds = array<i64: 1, 16, 128>}, {pipeline_mode = #tpu.pipeline_mode<synchronous>, transform_indices = @transform_1, window_bounds = array<i64: 1, 128>}, {transform_indices = @transform_2, window_bounds = array<i64: 128, 256>}, {transform_indices = @transform_3, window_bounds = array<i64: 1, 16, 256>}]} {
    %c0 = arith.constant 0 : index
    %c0_0 = arith.constant 0 : index
    %c0_1 = arith.constant 0 : index
    %0 = vector.load %arg2[%c0, %c0_0, %c0_1] : memref<1x16x128xf32, #tpu.memory_space<vmem>>, vector<1x16x128xf32>
    %1 = vector.shape_cast %0 : vector<1x16x128xf32> to vector<16x128xf32>
    %c0_2 = arith.constant 0 : index
    %c0_3 = arith.constant 0 : index
    %2 = vector.load %arg3[%c0_2, %c0_3] : memref<1x128xf32, #tpu.memory_space<vmem>>, vector<1x128xf32>
    %3 = vector.shape_cast %2 : vector<1x128xf32> to vector<128xf32>
    %4 = arith.mulf %1, %1 : vector<16x128xf32>
    %cst = arith.constant dense<0.000000e+00> : vector<16xf32>
    %5 = vector.multi_reduction <add>, %4, %cst [1] : vector<16x128xf32> to vector<16xf32>
    %6 = vector.shape_cast %5 : vector<16xf32> to vector<16x1xf32>
    %cst_4 = arith.constant 1.280000e+02 : f32
    %7 = vector.broadcast %cst_4 : f32 to vector<16x1xf32>
    %8 = arith.divf %6, %7 : vector<16x1xf32>
    %cst_5 = arith.constant 9.99999974E-6 : f32
    %9 = vector.broadcast %cst_5 : f32 to vector<16x1xf32>
    %10 = arith.addf %8, %9 : vector<16x1xf32>
    %11 = math.rsqrt %10 : vector<16x1xf32>
    %12 = vector.broadcast %11 : vector<16x1xf32> to vector<16x128xf32>
    %13 = arith.mulf %1, %12 : vector<16x128xf32>
    %14 = vector.shape_cast %3 : vector<128xf32> to vector<1x128xf32>
    %15 = vector.broadcast %14 : vector<1x128xf32> to vector<16x128xf32>
    %16 = arith.mulf %13, %15 : vector<16x128xf32>
    %17 = arith.truncf %16 : vector<16x128xf32> to vector<16x128xbf16>
    %c0_6 = arith.constant 0 : index
    %c0_7 = arith.constant 0 : index
    %18 = vector.load %arg4[%c0_6, %c0_7] : memref<128x256xbf16, #tpu.memory_space<vmem>>, vector<128x256xbf16>
    %cst_8 = arith.constant dense<0.000000e+00> : vector<16x256xf32>
    %19 = tpu.matmul %17, %18, %cst_8 {dimension_numbers = #tpu.dot_dimension_numbers<[1], [0], [0], [1], [0, 0, 1, 1], [], []>} : vector<16x128xbf16>, vector<128x256xbf16>, vector<16x256xf32> -> vector<16x256xf32>
    %c0_9 = arith.constant 0 : index
    %c0_10 = arith.constant 0 : index
    %c0_11 = arith.constant 0 : index
    %20 = vector.load %arg5[%c0_9, %c0_10, %c0_11] : memref<1x16x256xf32, #tpu.memory_space<vmem>>, vector<1x16x256xf32>
    %21 = vector.shape_cast %20 : vector<1x16x256xf32> to vector<16x256xf32>
    %22 = vector.shape_cast %19 : vector<16x256xf32> to vector<1x16x256xf32>
    tpu.vector_store %arg5[%c0_9, %c0_10, %c0_11], %22 {strides = array<i32>} : memref<1x16x256xf32, #tpu.memory_space<vmem>>, vector<1x16x256xf32>,
    return
  }
  func.func @transform_0(%arg0: i32, %arg1: i32) -> (i32, i32, i32) {
    %c0_i32 = arith.constant 0 : i32
    %c0_i32_0 = arith.constant 0 : i32
    %c0_i32_1 = arith.constant 0 : i32
    return %arg0, %c0_i32, %c0_i32_0 : i32, i32, i32
  }
  func.func @transform_1(%arg0: i32, %arg1: i32) -> (i32, i32) {
    %c0_i32 = arith.constant 0 : i32
    %c0_i32_0 = arith.constant 0 : i32
    %c0_i32_1 = arith.constant 0 : i32
    return %c0_i32, %c0_i32_0 : i32, i32
  }
  func.func @transform_2(%arg0: i32, %arg1: i32) -> (i32, i32) {
    %c0_i32 = arith.constant 0 : i32
    %c0_i32_0 = arith.constant 0 : i32
    return %c0_i32, %arg1 : i32, i32
  }
  func.func @transform_3(%arg0: i32, %arg1: i32) -> (i32, i32, i32) {
    %c0_i32 = arith.constant 0 : i32
    %c0_i32_0 = arith.constant 0 : i32
    return %arg0, %c0_i32, %arg1 : i32, i32, i32
  }
}

module attributes {stable_mosaic.version = 11 : i64} {
  func.func @transformer_block_kernel(%arg0: i32, %arg1: memref<1x16x128xf32, #tpu.memory_space<vmem>>, %arg2: memref<16x16xf32, #tpu.memory_space<vmem>>, %arg3: memref<1x128xf32, #tpu.memory_space<vmem>>, %arg4: memref<1x128xf32, #tpu.memory_space<vmem>>, %arg5: memref<128x384xbf16, #tpu.memory_space<vmem>>, %arg6: memref<128x128xbf16, #tpu.memory_space<vmem>>, %arg7: memref<128x256xbf16, #tpu.memory_space<vmem>>, %arg8: memref<256x128xbf16, #tpu.memory_space<vmem>>, %arg9: memref<1x16x128xf32, #tpu.memory_space<vmem>>) attributes {dimension_semantics = [#tpu.dimension_semantics<parallel>], iteration_bounds = array<i64: 2>, scalar_prefetch = 0 : i64, scratch_operands = 0 : i64, tpu.core_type = #tpu.core_type<tc>, window_params = [{transform_indices = @transform_0, window_bounds = array<i64: 1, 16, 128>}, {pipeline_mode = #tpu.pipeline_mode<synchronous>, transform_indices = @transform_1, window_bounds = array<i64: 16, 16>}, {pipeline_mode = #tpu.pipeline_mode<synchronous>, transform_indices = @transform_2, window_bounds = array<i64: 1, 128>}, {pipeline_mode = #tpu.pipeline_mode<synchronous>, transform_indices = @transform_3, window_bounds = array<i64: 1, 128>}, {pipeline_mode = #tpu.pipeline_mode<synchronous>, transform_indices = @transform_4, window_bounds = array<i64: 128, 384>}, {pipeline_mode = #tpu.pipeline_mode<synchronous>, transform_indices = @transform_5, window_bounds = array<i64: 128, 128>}, {pipeline_mode = #tpu.pipeline_mode<synchronous>, transform_indices = @transform_6, window_bounds = array<i64: 128, 256>}, {pipeline_mode = #tpu.pipeline_mode<synchronous>, transform_indices = @transform_7, window_bounds = array<i64: 256, 128>}, {transform_indices = @transform_8, window_bounds = array<i64: 1, 16, 128>}]} {
    %c0 = arith.constant 0 : index
    %c0_0 = arith.constant 0 : index
    %c0_1 = arith.constant 0 : index
    %0 = vector.load %arg1[%c0, %c0_0, %c0_1] : memref<1x16x128xf32, #tpu.memory_space<vmem>>, vector<1x16x128xf32>
    %1 = vector.shape_cast %0 : vector<1x16x128xf32> to vector<16x128xf32>
    %c0_2 = arith.constant 0 : index
    %c0_3 = arith.constant 0 : index
    %2 = vector.load %arg3[%c0_2, %c0_3] : memref<1x128xf32, #tpu.memory_space<vmem>>, vector<1x128xf32>
    %3 = vector.shape_cast %2 : vector<1x128xf32> to vector<128xf32>
    %4 = arith.mulf %1, %1 : vector<16x128xf32>
    %cst = arith.constant dense<0.000000e+00> : vector<16xf32>
    %5 = vector.multi_reduction <add>, %4, %cst [1] : vector<16x128xf32> to vector<16xf32>
    %6 = vector.shape_cast %5 : vector<16xf32> to vector<16x1xf32>
    %cst_4 = arith.constant 1.280000e+02 : f32
    %7 = vector.broadcast %cst_4 : f32 to vector<16x1xf32>
    %8 = arith.divf %6, %7 : vector<16x1xf32>
    %cst_5 = arith.constant 9.99999974E-6 : f32
    %9 = vector.broadcast %cst_5 : f32 to vector<16x1xf32>
    %10 = arith.addf %8, %9 : vector<16x1xf32>
    %11 = math.rsqrt %10 : vector<16x1xf32>
    %12 = vector.broadcast %11 : vector<16x1xf32> to vector<16x128xf32>
    %13 = arith.mulf %1, %12 : vector<16x128xf32>
    %14 = vector.shape_cast %3 : vector<128xf32> to vector<1x128xf32>
    %15 = vector.broadcast %14 : vector<1x128xf32> to vector<16x128xf32>
    %16 = arith.mulf %13, %15 : vector<16x128xf32>
    %17 = arith.truncf %16 : vector<16x128xf32> to vector<16x128xbf16>
    %c0_6 = arith.constant 0 : index
    %c0_7 = arith.constant 0 : index
    %18 = vector.load %arg5[%c0_6, %c0_7] : memref<128x384xbf16, #tpu.memory_space<vmem>>, vector<128x384xbf16>
    %cst_8 = arith.constant dense<0.000000e+00> : vector<16x384xf32>
    %19 = tpu.matmul %17, %18, %cst_8 {dimension_numbers = #tpu.dot_dimension_numbers<[1], [0], [0], [1], [0, 0, 1, 1], [], []>} : vector<16x128xbf16>, vector<128x384xbf16>, vector<16x384xf32> -> vector<16x384xf32>
    %20 = vector.extract_strided_slice %19 {offsets = [0, 0], sizes = [16, 128], strides = [1, 1]} : vector<16x384xf32> to vector<16x128xf32>
    %21 = vector.shape_cast %20 : vector<16x128xf32> to vector<16x4x32xf32>
    %22 = arith.truncf %21 : vector<16x4x32xf32> to vector<16x4x32xbf16>
    %23 = vector.extract_strided_slice %19 {offsets = [0, 128], sizes = [16, 128], strides = [1, 1]} : vector<16x384xf32> to vector<16x128xf32>
    %24 = vector.shape_cast %23 : vector<16x128xf32> to vector<16x4x32xf32>
    %25 = arith.truncf %24 : vector<16x4x32xf32> to vector<16x4x32xbf16>
    %26 = vector.extract_strided_slice %19 {offsets = [0, 256], sizes = [16, 128], strides = [1, 1]} : vector<16x384xf32> to vector<16x128xf32>
    %27 = vector.shape_cast %26 : vector<16x128xf32> to vector<16x4x32xf32>
    %28 = arith.truncf %27 : vector<16x4x32xf32> to vector<16x4x32xbf16>
    "tpu.trace_start"() <{level = 10 : i32, message = "qhd,khd->hqk"}> : () -> ()
    %cst_9 = arith.constant dense<0.000000e+00> : vector<4x16x16xf32>
    %29 = tpu.matmul %22, %25, %cst_9 {dimension_numbers = #tpu.dot_dimension_numbers<[2], [2], [0], [0], [0, 1, 0, 0, 1, 0], [1], [1]>} : vector<16x4x32xbf16>, vector<16x4x32xbf16>, vector<4x16x16xf32> -> vector<4x16x16xf32>
    "tpu.trace_stop"() : () -> ()
    %c0_10 = arith.constant 0 : index
    %c0_11 = arith.constant 0 : index
    %30 = vector.load %arg2[%c0_10, %c0_11] : memref<16x16xf32, #tpu.memory_space<vmem>>, vector<16x16xf32>
    %31 = vector.shape_cast %30 : vector<16x16xf32> to vector<1x16x16xf32>
    %32 = vector.broadcast %31 : vector<1x16x16xf32> to vector<4x16x16xf32>
    %33 = arith.addf %29, %32 : vector<4x16x16xf32>
    %cst_12 = arith.constant dense<0xFF800000> : vector<4x16xf32>
    %34 = vector.multi_reduction <maximumf>, %33, %cst_12 [2] : vector<4x16x16xf32> to vector<4x16xf32>
    %35 = vector.shape_cast %34 : vector<4x16xf32> to vector<4x16x1xf32>
    %36 = vector.broadcast %35 : vector<4x16x1xf32> to vector<4x16x16xf32>
    %37 = arith.subf %33, %36 : vector<4x16x16xf32>
    %38 = math.exp %37 : vector<4x16x16xf32>
    %cst_13 = arith.constant dense<0.000000e+00> : vector<4x16xf32>
    %39 = vector.multi_reduction <add>, %38, %cst_13 [2] : vector<4x16x16xf32> to vector<4x16xf32>
    %40 = vector.shape_cast %39 : vector<4x16xf32> to vector<4x16x1xf32>
    %41 = tpu.reciprocal %40 {approx = true} : vector<4x16x1xf32> -> vector<4x16x1xf32>
    %42 = vector.broadcast %41 : vector<4x16x1xf32> to vector<4x16x16xf32>
    %43 = arith.mulf %38, %42 : vector<4x16x16xf32>
    %44 = arith.truncf %43 : vector<4x16x16xf32> to vector<4x16x16xbf16>
    "tpu.trace_start"() <{level = 10 : i32, message = "hqk,khd->qhd"}> : () -> ()
    %cst_14 = arith.constant dense<0.000000e+00> : vector<4x32x16xf32>
    %45 = tpu.matmul %28, %44, %cst_14 {dimension_numbers = #tpu.dot_dimension_numbers<[0], [2], [2], [1], [0, 1, 0, 2, 1, 1], [1], [0]>} : vector<16x4x32xbf16>, vector<4x16x16xbf16>, vector<4x32x16xf32> -> vector<4x32x16xf32>
    %46 = tpu.transpose %45, [2, 0, 1] : vector<4x32x16xf32> -> vector<16x4x32xf32>
    "tpu.trace_stop"() : () -> ()
    %47 = vector.shape_cast %46 : vector<16x4x32xf32> to vector<16x128xf32>
    %48 = arith.truncf %47 : vector<16x128xf32> to vector<16x128xbf16>
    %c0_15 = arith.constant 0 : index
    %c0_16 = arith.constant 0 : index
    %49 = vector.load %arg6[%c0_15, %c0_16] : memref<128x128xbf16, #tpu.memory_space<vmem>>, vector<128x128xbf16>
    %cst_17 = arith.constant dense<0.000000e+00> : vector<16x128xf32>
    %50 = tpu.matmul %48, %49, %cst_17 {dimension_numbers = #tpu.dot_dimension_numbers<[1], [0], [0], [1], [0, 0, 1, 1], [], []>} : vector<16x128xbf16>, vector<128x128xbf16>, vector<16x128xf32> -> vector<16x128xf32>
    %51 = arith.addf %1, %50 : vector<16x128xf32>
    %c0_18 = arith.constant 0 : index
    %c0_19 = arith.constant 0 : index
    %52 = vector.load %arg4[%c0_18, %c0_19] : memref<1x128xf32, #tpu.memory_space<vmem>>, vector<1x128xf32>
    %53 = vector.shape_cast %52 : vector<1x128xf32> to vector<128xf32>
    %54 = arith.mulf %51, %51 : vector<16x128xf32>
    %cst_20 = arith.constant dense<0.000000e+00> : vector<16xf32>
    %55 = vector.multi_reduction <add>, %54, %cst_20 [1] : vector<16x128xf32> to vector<16xf32>
    %56 = vector.shape_cast %55 : vector<16xf32> to vector<16x1xf32>
    %cst_21 = arith.constant 1.280000e+02 : f32
    %57 = vector.broadcast %cst_21 : f32 to vector<16x1xf32>
    %58 = arith.divf %56, %57 : vector<16x1xf32>
    %cst_22 = arith.constant 9.99999974E-6 : f32
    %59 = vector.broadcast %cst_22 : f32 to vector<16x1xf32>
    %60 = arith.addf %58, %59 : vector<16x1xf32>
    %61 = math.rsqrt %60 : vector<16x1xf32>
    %62 = vector.broadcast %61 : vector<16x1xf32> to vector<16x128xf32>
    %63 = arith.mulf %51, %62 : vector<16x128xf32>
    %64 = vector.shape_cast %53 : vector<128xf32> to vector<1x128xf32>
    %65 = vector.broadcast %64 : vector<1x128xf32> to vector<16x128xf32>
    %66 = arith.mulf %63, %65 : vector<16x128xf32>
    %67 = arith.truncf %66 : vector<16x128xf32> to vector<16x128xbf16>
    %c0_23 = arith.constant 0 : index
    %c0_24 = arith.constant 0 : index
    %68 = vector.load %arg7[%c0_23, %c0_24] : memref<128x256xbf16, #tpu.memory_space<vmem>>, vector<128x256xbf16>
    %cst_25 = arith.constant dense<0.000000e+00> : vector<16x256xf32>
    %69 = tpu.matmul %67, %68, %cst_25 {dimension_numbers = #tpu.dot_dimension_numbers<[1], [0], [0], [1], [0, 0, 1, 1], [], []>} : vector<16x128xbf16>, vector<128x256xbf16>, vector<16x256xf32> -> vector<16x256xf32>
    %cst_26 = arith.constant 0.707106769 : f32
    %70 = vector.broadcast %cst_26 : f32 to vector<16x256xf32>
    %71 = arith.mulf %69, %70 : vector<16x256xf32>
    %72 = math.erf %71 : vector<16x256xf32>
    %cst_27 = arith.constant 1.000000e+00 : f32
    %73 = vector.broadcast %cst_27 : f32 to vector<16x256xf32>
    %74 = arith.addf %73, %72 : vector<16x256xf32>
    %75 = arith.mulf %69, %74 : vector<16x256xf32>
    %cst_28 = arith.constant 5.000000e-01 : f32
    %76 = vector.broadcast %cst_28 : f32 to vector<16x256xf32>
    %77 = arith.mulf %75, %76 : vector<16x256xf32>
    %78 = arith.truncf %77 : vector<16x256xf32> to vector<16x256xbf16>
    %c0_29 = arith.constant 0 : index
    %c0_30 = arith.constant 0 : index
    %79 = vector.load %arg8[%c0_29, %c0_30] : memref<256x128xbf16, #tpu.memory_space<vmem>>, vector<256x128xbf16>
    %cst_31 = arith.constant dense<0.000000e+00> : vector<16x128xf32>
    %80 = tpu.matmul %78, %79, %cst_31 {dimension_numbers = #tpu.dot_dimension_numbers<[1], [0], [0], [1], [0, 0, 1, 1], [], []>} : vector<16x256xbf16>, vector<256x128xbf16>, vector<16x128xf32> -> vector<16x128xf32>
    %81 = arith.addf %51, %80 : vector<16x128xf32>
    %c0_32 = arith.constant 0 : index
    %c0_33 = arith.constant 0 : index
    %c0_34 = arith.constant 0 : index
    %82 = vector.load %arg9[%c0_32, %c0_33, %c0_34] : memref<1x16x128xf32, #tpu.memory_space<vmem>>, vector<1x16x128xf32>
    %83 = vector.shape_cast %82 : vector<1x16x128xf32> to vector<16x128xf32>
    %84 = vector.shape_cast %81 : vector<16x128xf32> to vector<1x16x128xf32>
    tpu.vector_store %arg9[%c0_32, %c0_33, %c0_34], %84 {strides = array<i32>} : memref<1x16x128xf32, #tpu.memory_space<vmem>>, vector<1x16x128xf32>,
    return
  }
  func.func @transform_0(%arg0: i32) -> (i32, i32, i32) {
    %c0_i32 = arith.constant 0 : i32
    %c0_i32_0 = arith.constant 0 : i32
    %c0_i32_1 = arith.constant 0 : i32
    return %arg0, %c0_i32, %c0_i32_0 : i32, i32, i32
  }
  func.func @transform_1(%arg0: i32) -> (i32, i32) {
    %c0_i32 = arith.constant 0 : i32
    %c0_i32_0 = arith.constant 0 : i32
    %c0_i32_1 = arith.constant 0 : i32
    return %c0_i32, %c0_i32_0 : i32, i32
  }
  func.func @transform_2(%arg0: i32) -> (i32, i32) {
    %c0_i32 = arith.constant 0 : i32
    %c0_i32_0 = arith.constant 0 : i32
    %c0_i32_1 = arith.constant 0 : i32
    return %c0_i32, %c0_i32_0 : i32, i32
  }
  func.func @transform_3(%arg0: i32) -> (i32, i32) {
    %c0_i32 = arith.constant 0 : i32
    %c0_i32_0 = arith.constant 0 : i32
    %c0_i32_1 = arith.constant 0 : i32
    return %c0_i32, %c0_i32_0 : i32, i32
  }
  func.func @transform_4(%arg0: i32) -> (i32, i32) {
    %c0_i32 = arith.constant 0 : i32
    %c0_i32_0 = arith.constant 0 : i32
    %c0_i32_1 = arith.constant 0 : i32
    return %c0_i32, %c0_i32_0 : i32, i32
  }
  func.func @transform_5(%arg0: i32) -> (i32, i32) {
    %c0_i32 = arith.constant 0 : i32
    %c0_i32_0 = arith.constant 0 : i32
    %c0_i32_1 = arith.constant 0 : i32
    return %c0_i32, %c0_i32_0 : i32, i32
  }
  func.func @transform_6(%arg0: i32) -> (i32, i32) {
    %c0_i32 = arith.constant 0 : i32
    %c0_i32_0 = arith.constant 0 : i32
    %c0_i32_1 = arith.constant 0 : i32
    return %c0_i32, %c0_i32_0 : i32, i32
  }
  func.func @transform_7(%arg0: i32) -> (i32, i32) {
    %c0_i32 = arith.constant 0 : i32
    %c0_i32_0 = arith.constant 0 : i32
    %c0_i32_1 = arith.constant 0 : i32
    return %c0_i32, %c0_i32_0 : i32, i32
  }
  func.func @transform_8(%arg0: i32) -> (i32, i32, i32) {
    %c0_i32 = arith.constant 0 : i32
    %c0_i32_0 = arith.constant 0 : i32
    %c0_i32_1 = arith.constant 0 : i32
    return %arg0, %c0_i32, %c0_i32_0 : i32, i32, i32
  }
}

</mosaic_0001>

<llo_original>
// kernel: transformer_lm_forward.5
$region0: #{transformer_lm_forward.5}
  #allocation0 [shape = 'u32[]', space=smem, size = 0x4, offset = 0x4, fixed_abs, tag = 'smem constant byte address 0x4 - core index']
  #allocation1 [shape = 'u32[144,128]{1,0:T(1,128)}', space=vmem, size = 0x12000, scoped, tag = 'internal scratch']
  %s0 = inlined_call_operand.vmem [shape: f32[2,16,128], index: 0, kind: input, shape index: {}]
  %s1 = inlined_call_operand.vmem [shape: f32[1,128], index: 1, kind: input, shape index: {}]
  %s2 = inlined_call_operand.vmem [shape: bf16[128,256], index: 2, kind: input, shape index: {}]
  %s3 = inlined_call_operand.hbm [shape: f32[2,16,256], index: 3, kind: output, shape index: {}]
  %s4 = sld [smem:[#allocation0]]
  $region45: #{transformer_lm_forward.5} parent=0
    _
  %s6 = ssub.s32 1, %s4
  %s7 = scalar_select 0, %s6, %s4
  $region1: #{transformer_lm_forward.5} parent=0
    #allocation2 [shape = 'u8[32768]{0}', space=vmem, size = 0x8000, scoped, tag = 'output window, operand 0']
    #allocation3 [shape = 's32[2]{0}', space=sflag, size = 0x8, scoped, tag = 'scoped memory for transformer_lm_forward.5']
    %8 = vsyncpa [#allocation3], 0
    %s9 = scalar_lea.sflag [#allocation3], 1
    %10 = vsyncpa %s9, 0
    loop: start=0, step=1, limit=4
    $region2: #{transformer_lm_forward.5} parent=1 // loop_pre_header
      _
    $region3: #{transformer_lm_forward.5} parent=1 // loop_header
      %s12 = sphi 0, %s16
      %p13 = scmp.ge.s32.totalorder %s12, 4
      %s19 = sphi 0, %s31
      %s20 = sphi 0, %s27
      %s21 = sphi 0, %s19
      %s22 = sphi 0, %s20
      %s23 = sphi 0, %s21
      %s24 = sphi 0, %s22
      %s34 = sphi 0, %s36
      %s37 = sphi 0, %s34
      %s38 = sphi 0, %s37
      %s54 = sphi 0, %s38
      %s58 = sphi 0, %s58
      %s60 = sphi 0, %s58
      %s61 = sphi 0, %s60
      %s75 = sphi 0, %s61
      %s81 = sphi 0, %s83
      %s84 = sphi 0, %s81
      %s85 = sphi 0, %s84
      %s101 = sphi 0, %s85
      %s109 = sphi 0, %s111
      %s112 = sphi 0, %s109
      %s113 = sphi 0, %s112
      %s129 = sphi 0, %s113
    $region4: #{transformer_lm_forward.5} parent=1 // loop_header_branch
      %15 = sbr.rel (%p13) target = $region8
    $region5: #{transformer_lm_forward.5} parent=1 // loop_body
      %s17 = ssub.s32 %s12, 1
      %s18 = ssub.s32 %s12, 2
      %s25 = sadd.s32 1, %s20
      %p26 = scmp.ge.s32.totalorder %s25, 1
      %s27 = scalar_select %p26, 0, %s25
      %s28 = sadd.s32 1, %s19
      %s29 = scalar_select %p26, %s28, %s19
      %p30 = scmp.ge.s32.totalorder %s29, 2
      %s31 = scalar_select %p30, 0, %s29
      %s32 = ssub.s32 %s19, %s31
      %p33 = scmp.eq.s32.totalorder %s32, 0
      %s35 = sadd.s32 %s34, 1
      %s36 = scalar_select %p33, %s34, %s35
      %p39 = pneg %p33
      %p40 = scmp.eq.s32.totalorder %s12, 1
      %p41 = por %p39, %p40
      %p42 = scmp.ne.s32.totalorder %s34, %s37
      %p43 = scmp.eq.s32.totalorder %s12, 0
      %p44 = por %p42, %p43
      %p45 = scmp.ne.s32.totalorder %s34, %s37
      %p46 = scmp.eq.s32.totalorder %s17, 1
      %p47 = por %p45, %p46
      %p48 = scmp.ne.s32.totalorder %s37, %s38
      %p49 = scmp.eq.s32.totalorder %s17, 0
      %p50 = por %p48, %p49
      %p51 = scmp.ne.s32.totalorder %s37, %s38
      %p52 = scmp.eq.s32.totalorder %s18, 1
      %p53 = por %p51, %p52
      %p55 = scmp.ne.s32.totalorder %s38, %s54
      %p56 = scmp.eq.s32.totalorder %s18, 0
      %p57 = por %p55, %p56
      %s59 = sadd.s32 %s58, 1
      %p62 = scmp.eq.s32.totalorder %s12, 1
      %p63 = scmp.ne.s32.totalorder %s58, %s60
      %p64 = scmp.eq.s32.totalorder %s12, 0
      %p65 = por %p63, %p64
      %p66 = scmp.ne.s32.totalorder %s58, %s60
      %p67 = scmp.eq.s32.totalorder %s17, 1
      %p68 = por %p66, %p67
      %p69 = scmp.ne.s32.totalorder %s60, %s61
      %p70 = scmp.eq.s32.totalorder %s17, 0
      %p71 = por %p69, %p70
      %p72 = scmp.ne.s32.totalorder %s60, %s61
      %p73 = scmp.eq.s32.totalorder %s18, 1
      %p74 = por %p72, %p73
      %p76 = scmp.ne.s32.totalorder %s61, %s75
      %p77 = scmp.eq.s32.totalorder %s18, 0
      %p78 = por %p76, %p77
      %s79 = ssub.s32 %s20, %s27
      %p80 = scmp.eq.s32.totalorder %s79, 0
      %s82 = sadd.s32 %s81, 1
      %s83 = scalar_select %p80, %s81, %s82
      %p86 = pneg %p80
      %p87 = scmp.eq.s32.totalorder %s12, 1
      %p88 = por %p86, %p87
      %p89 = scmp.ne.s32.totalorder %s81, %s84
      %p90 = scmp.eq.s32.totalorder %s12, 0
      %p91 = por %p89, %p90
      %p92 = scmp.ne.s32.totalorder %s81, %s84
      %p93 = scmp.eq.s32.totalorder %s17, 1
      %p94 = por %p92, %p93
      %p95 = scmp.ne.s32.totalorder %s84, %s85
      %p96 = scmp.eq.s32.totalorder %s17, 0
      %p97 = por %p95, %p96
      %p98 = scmp.ne.s32.totalorder %s84, %s85
      %p99 = scmp.eq.s32.totalorder %s18, 1
      %p100 = por %p98, %p99
      %p102 = scmp.ne.s32.totalorder %s85, %s101
      %p103 = scmp.eq.s32.totalorder %s18, 0
      %p104 = por %p102, %p103
      %s105 = ssub.s32 %s19, %s31
      %s106 = ssub.s32 %s20, %s27
      %s107 = sor.u32 %s105, %s106
      %p108 = scmp.eq.s32.totalorder %s107, 0
      %s110 = sadd.s32 %s109, 1
      %s111 = scalar_select %p108, %s109, %s110
      %p114 = pneg %p108
      %p115 = scmp.eq.s32.totalorder %s12, 1
      %p116 = por %p114, %p115
      %p117 = scmp.ne.s32.totalorder %s109, %s112
      %p118 = scmp.eq.s32.totalorder %s12, 0
      %p119 = por %p117, %p118
      %p120 = scmp.ne.s32.totalorder %s109, %s112
      %p121 = scmp.eq.s32.totalorder %s17, 1
      %p122 = por %p120, %p121
      %p123 = scmp.ne.s32.totalorder %s112, %s113
      %p124 = scmp.eq.s32.totalorder %s17, 0
      %p125 = por %p123, %p124
      %p126 = scmp.ne.s32.totalorder %s112, %s113
      %p127 = scmp.eq.s32.totalorder %s18, 1
      %p128 = por %p126, %p127
      %p130 = scmp.ne.s32.totalorder %s113, %s129
      %p131 = scmp.eq.s32.totalorder %s18, 0
      %p132 = por %p130, %p131
      %p133 = scmp.le.s32.totalorder 1, %s12
      %p134 = scmp.lt.s32.totalorder %s12, 3
      %p135 = pnand %p133, %p134
      %p136 = pneg %p135
      // Predicated region
      $region9: #{transformer_lm_forward.5} parent=5 // pred_check
        _
      $region10: #{transformer_lm_forward.5} parent=5 // pred_check_branch
        %138 = sbr.rel (%p135) target = $region12
      $region11: #{transformer_lm_forward.5} parent=5 // pred_region
        %s139 = ssub.s32 %s12, 1
        // Predicated region
        $region13: #{transformer_lm_forward.5} parent=11 // pred_check
          %p140 = pneg %p71
        $region14: #{transformer_lm_forward.5} parent=11 // pred_check_branch
          %142 = sbr.rel (%p140) target = $region16
        $region15: #{transformer_lm_forward.5} parent=11 // pred_region
          _
        $region16: #{transformer_lm_forward.5} parent=11 // pred_fallthru
          _
        // Predicated region
        $region17: #{transformer_lm_forward.5} parent=11 // pred_check
          %p143 = pneg %p97
        $region18: #{transformer_lm_forward.5} parent=11 // pred_check_branch
          %145 = sbr.rel (%p143) target = $region20
        $region19: #{transformer_lm_forward.5} parent=11 // pred_region
          %s146 = smul.u32 2, %s22
          %p147 = scmp.lt.s32.totalorder %s146, 1
          %s148 = scalar_select %p147, %s146, 1
          %s149 = smul.addr %s148, 4
          %s150 = scalar_lea.vmem %s2, %s149
          %s151 = smul.u32 2, %s22
        $region20: #{transformer_lm_forward.5} parent=11 // pred_fallthru
          _
      $region12: #{transformer_lm_forward.5} parent=5 // pred_fallthru
        _
      %p152 = scmp.lt.s32.totalorder %s12, 2
      // Predicated region
      $region21: #{transformer_lm_forward.5} parent=5 // pred_check
        %p153 = pneg %p152
      $region22: #{transformer_lm_forward.5} parent=5 // pred_check_branch
        %155 = sbr.rel (%p153) target = $region24
      $region23: #{transformer_lm_forward.5} parent=5 // pred_region
        // Predicated region
        $region25: #{transformer_lm_forward.5} parent=23 // pred_check
          %p156 = pneg %p44
        $region26: #{transformer_lm_forward.5} parent=23 // pred_check_branch
          %158 = sbr.rel (%p156) target = $region28
        $region27: #{transformer_lm_forward.5} parent=23 // pred_region
          %p159 = scmp.lt.s32.totalorder %s19, 1
          %s160 = scalar_select %p159, %s19, 1
          %s161 = smul.addr %s160, 2
          %s162 = smul.addr %s161, 8
          %s163 = scalar_lea.vmem %s0, %s162
        $region28: #{transformer_lm_forward.5} parent=23 // pred_fallthru
          _
      $region24: #{transformer_lm_forward.5} parent=5 // pred_fallthru
        _
      %p164 = scmp.le.s32.totalorder 1, %s12
      %p165 = scmp.lt.s32.totalorder %s12, 3
      %p166 = pnand %p164, %p165
      %p167 = pneg %p166
      // Predicated region
      $region29: #{transformer_lm_forward.5} parent=5 // pred_check
        _
      $region30: #{transformer_lm_forward.5} parent=5 // pred_check_branch
        %169 = sbr.rel (%p166) target = $region32
      $region31: #{transformer_lm_forward.5} parent=5 // pred_region
        %s170 = ssub.s32 %s12, 1
        %p171 = scmp.lt.s32.totalorder %s21, 1
        %s172 = scalar_select %p171, %s21, 1
        %s173 = smul.addr %s172, 2
        %s174 = smul.addr %s173, 8
        %s175 = scalar_lea.vmem %s0, %s174
        %p176 = pneg %p50
        %p177 = pneg %p47
        %p178 = pneg %p71
        %p179 = pneg %p68
        %s180 = smul.u32 2, %s22
        %p181 = scmp.lt.s32.totalorder %s180, 1
        %s182 = scalar_select %p181, %s180, 1
        %s183 = smul.addr %s182, 4
        %s184 = scalar_lea.vmem %s2, %s183
        %p185 = pneg %p97
        %p186 = pneg %p94
        %p187 = pneg %p125
        %p188 = pneg %p122
        %s189 = sand.u32 %s112, 1
        %s190 = scalar_lea.sflag [#allocation3], %s189
        %s191 = sand.u32 %s112, 1
        %s192 = smul.addr %s191, 32
        %s193 = scalar_lea.vmem [#allocation2], %s192
        %p194 = scmp.lt.s32.totalorder %s21, 1
        %s195 = scalar_select %p194, %s21, 1
        %s196 = smul.addr %s195, 2
        %s197 = smul.addr %s196, 8
        %s198 = scalar_lea.vmem %s0, %s197
        %s199 = smul.u32 2, %s22
        %p200 = scmp.lt.s32.totalorder %s199, 1
        %s201 = scalar_select %p200, %s199, 1
        %s202 = smul.addr %s201, 4
        %s203 = scalar_lea.vmem %s2, %s202
        %s204 = smul.u32 2, %s22
        %s205 = smul.u32 2, %s22
        %v207 = vld [vmem:[%s198] sm:$0xff]
        %v208 = vld [vmem:[%s198 + $0x8] sm:$0xff]
        %v209 = vld [vmem:[%s1] sm:$0x1]
        %v210 = vmul.f32 %v207, %v207
        %v211 = vmul.f32 %v208, %v208
        %212 = vadd.xlane.f32.xlu0 %v210
        %v213 = vpop.xlane.xlu0 %212
        %214 = vadd.xlane.f32.xlu0 %v211
        %v215 = vpop.xlane.xlu0 %214
        %v216 = vrcp.pop 128.0
        %v217 = vmul.f32 %v213, %v216
        %v218 = vmul.f32 %v215, %v216
        %v219 = vadd.f32 %v217, 1e-05
        %v220 = vadd.f32 %v218, 1e-05
        %v221 = vrsqrt.pop %v219
        %v222 = vrsqrt.pop %v220
        %v223 = vmul.f32 %v207, %v221
        %v224 = vmul.f32 %v208, %v222
        %v226 = vlaneseq
        %v227 = vshrl.u32 %v226, 7
        %v228 = vsub.s32 0, %v227
        %v229 = vrot.slane %v209, %v228
        %v231 = vmul.f32 %v223, %v229
        %v232 = vmul.f32 %v224, %v229
        %v233 = vpack.c.bf16 %v232, %v231
        %v234 = vld [vmem:[%s203] sm:$0xff]
        %v235 = vld [vmem:[%s203 + $0x8] sm:$0xff]
        %v236 = vld [vmem:[%s203 + $0x10] sm:$0xff]
        %v237 = vld [vmem:[%s203 + $0x18] sm:$0xff]
        %v238 = vld [vmem:[%s203 + $0x20] sm:$0xff]
        %v239 = vld [vmem:[%s203 + $0x28] sm:$0xff]
        %v240 = vld [vmem:[%s203 + $0x30] sm:$0xff]
        %v241 = vld [vmem:[%s203 + $0x38] sm:$0xff]
        %v242 = vld [vmem:[%s203 + $0x40] sm:$0xff]
        %v243 = vld [vmem:[%s203 + $0x48] sm:$0xff]
        %v244 = vld [vmem:[%s203 + $0x50] sm:$0xff]
        %v245 = vld [vmem:[%s203 + $0x58] sm:$0xff]
        %v246 = vld [vmem:[%s203 + $0x60] sm:$0xff]
        %v247 = vld [vmem:[%s203 + $0x68] sm:$0xff]
        %v248 = vld [vmem:[%s203 + $0x70] sm:$0xff]
        %v249 = vld [vmem:[%s203 + $0x78] sm:$0xff]
        %v266 = vunpack.c.l.b16 %v234
        %v267 = vunpack.c.h.b16 %v234
        %v268 = vunpack.c.l.b16 %v235
        %v269 = vunpack.c.h.b16 %v235
        %v270 = vunpack.c.l.b16 %v236
        %v271 = vunpack.c.h.b16 %v236
        %v272 = vunpack.c.l.b16 %v237
        %v273 = vunpack.c.h.b16 %v237
        %v274 = vunpack.c.l.b16 %v238
        %v275 = vunpack.c.h.b16 %v238
        %v276 = vunpack.c.l.b16 %v239
        %v277 = vunpack.c.h.b16 %v239
        %v278 = vunpack.c.l.b16 %v240
        %v279 = vunpack.c.h.b16 %v240
        %v280 = vunpack.c.l.b16 %v241
        %v281 = vunpack.c.h.b16 %v241
        %v282 = vunpack.c.l.b16 %v242
        %v283 = vunpack.c.h.b16 %v242
        %v284 = vunpack.c.l.b16 %v243
        %v285 = vunpack.c.h.b16 %v243
        %v286 = vunpack.c.l.b16 %v244
        %v287 = vunpack.c.h.b16 %v244
        %v288 = vunpack.c.l.b16 %v245
        %v289 = vunpack.c.h.b16 %v245
        %v290 = vunpack.c.l.b16 %v246
        %v291 = vunpack.c.h.b16 %v246
        %v292 = vunpack.c.l.b16 %v247
        %v293 = vunpack.c.h.b16 %v247
        %v294 = vunpack.c.l.b16 %v248
        %v295 = vunpack.c.h.b16 %v248
        %v296 = vunpack.c.l.b16 %v249
        %v297 = vunpack.c.h.b16 %v249
        %v298 = vpack.c.b16 %v268, %v266
        %v299 = vpack.c.b16 %v269, %v267
        %v300 = vpack.c.b16 %v272, %v270
        %v301 = vpack.c.b16 %v273, %v271
        %v302 = vpack.c.b16 %v276, %v274
        %v303 = vpack.c.b16 %v277, %v275
        %v304 = vpack.c.b16 %v280, %v278
        %v305 = vpack.c.b16 %v281, %v279
        %v306 = vpack.c.b16 %v284, %v282
        %v307 = vpack.c.b16 %v285, %v283
        %v308 = vpack.c.b16 %v288, %v286
        %v309 = vpack.c.b16 %v289, %v287
        %v310 = vpack.c.b16 %v292, %v290
        %v311 = vpack.c.b16 %v293, %v291
        %v312 = vpack.c.b16 %v296, %v294
        %v313 = vpack.c.b16 %v297, %v295
        %330 = vmatprep.subr.bf16.mxu0 %v299
        %331 = vmatpush1.bf16.msra.mxu0 %v298
        %332 = vmatprep.subr.bf16.mxu0 %v301
        %333 = vmatpush1.bf16.msra.mxu0 %v300
        %334 = vmatprep.subr.bf16.mxu0 %v303
        %335 = vmatpush1.bf16.msra.mxu0 %v302
        %336 = vmatprep.subr.bf16.mxu0 %v305
        %337 = vmatpush1.bf16.msra.mxu0 %v304
        %338 = vmatprep.subr.bf16.mxu0 %v307
        %339 = vmatpush1.bf16.msra.mxu0 %v306
        %340 = vmatprep.subr.bf16.mxu0 %v309
        %341 = vmatpush1.bf16.msra.mxu0 %v308
        %342 = vmatprep.subr.bf16.mxu0 %v311
        %343 = vmatpush1.bf16.msra.mxu0 %v310
        %344 = vmatprep.subr.bf16.mxu0 %v313
        %345 = vmatpush1.bf16.msra.mxu0 %v312
        %346 = vmatprep.subr.bf16.mxu0 0
        %347 = vmatpush1.bf16.msra.mxu0 0
        %348 = vmatprep.subr.bf16.mxu0 0
        %349 = vmatpush1.bf16.msra.mxu0 0
        %350 = vmatprep.subr.bf16.mxu0 0
        %351 = vmatpush1.bf16.msra.mxu0 0
        %352 = vmatprep.subr.bf16.mxu0 0
        %353 = vmatpush1.bf16.msra.mxu0 0
        %354 = vmatprep.subr.bf16.mxu0 0
        %355 = vmatpush1.bf16.msra.mxu0 0
        %356 = vmatprep.subr.bf16.mxu0 0
        %357 = vmatpush1.bf16.msra.mxu0 0
        %358 = vmatprep.subr.bf16.mxu0 0
        %359 = vmatpush1.bf16.msra.mxu0 0
        %360 = vmatprep.subr.bf16.mxu0 0
        %361 = vmatpush1.bf16.msra.mxu0 0
        %362 = vmatprep.mubr.bf16.mxu0 0
        %363 = vmatmul.mubr.bf16.gmra.mrb[0].mxu0 %v233
        %v364 = vpop.f32.mrb[0].mxu0
        %v365 = vadd.f32 0.0, %v364
        %v366 = vpop.f32.mrb[0].mxu0
        %v367 = vadd.f32 0.0, %v366
        %v368 = vpop.f32.mrb[0].mxu0
        %v369 = vadd.f32 0.0, %v368
        %v370 = vpop.f32.mrb[0].mxu0
        %v371 = vadd.f32 0.0, %v370
        %372 = vdwg.mxu0
        %373 = vst [vmem:[%s193] sm:$0xff] %v365
        %374 = vst [vmem:[%s193 + $0x8] sm:$0xff] %v367
        %375 = vst [vmem:[%s193 + $0x10] sm:$0xff] %v369
        %376 = vst [vmem:[%s193 + $0x18] sm:$0xff] %v371
        %s377 = sand.u32 %s112, 1
        %s378 = scalar_lea.sflag [#allocation3], %s377
        %s379 = sand.u32 %s112, 1
        %s380 = smul.addr %s379, 32
        %s381 = scalar_lea.vmem [#allocation2], %s380
        // Predicated region
        $region33: #{transformer_lm_forward.5} parent=31 // pred_check
          %p382 = pneg %p122
        $region34: #{transformer_lm_forward.5} parent=31 // pred_check_branch
          %384 = sbr.rel (%p382) target = $region36
        $region35: #{transformer_lm_forward.5} parent=31 // pred_region
          %s385 = smul.u32 2, %s22
          %s387 = ssub.s32 512, 512
          %388 = vsyncadd %s378, %s387
          %s389 = smul.addr %s21, 4
          %s390 = sadd.s32 %s385, %s389
          %s391 = smul.addr %s390, 128
          %s392 = scalar_lea.hbm %s3, %s391
          %s393 = sshll.u32 %s381, 4
          %s394 = int_to_ptr.vmem [resolvable:$true] %s393
          %399 = dma.vmem_to_hbm [thread:$0]  %s394, 512, %s392, %s378, 256, 256, 16
        $region36: #{transformer_lm_forward.5} parent=31 // pred_fallthru
          _
      $region32: #{transformer_lm_forward.5} parent=5 // pred_fallthru
        _
      %p400 = scmp.le.s32.totalorder 2, %s12
      // Predicated region
      $region37: #{transformer_lm_forward.5} parent=5 // pred_check
        %p401 = pneg %p400
      $region38: #{transformer_lm_forward.5} parent=5 // pred_check_branch
        %403 = sbr.rel (%p401) target = $region40
      $region39: #{transformer_lm_forward.5} parent=5 // pred_region
        %s404 = ssub.s32 %s12, 2
        // Predicated region
        $region41: #{transformer_lm_forward.5} parent=39 // pred_check
          %p405 = pneg %p128
        $region42: #{transformer_lm_forward.5} parent=39 // pred_check_branch
          %407 = sbr.rel (%p405) target = $region44
        $region43: #{transformer_lm_forward.5} parent=39 // pred_region
          %s408 = sand.u32 %s113, 1
          %s409 = scalar_lea.sflag [#allocation3], %s408
          %s410 = sand.u32 %s113, 1
          %s411 = smul.addr %s410, 32
          %s412 = scalar_lea.vmem [#allocation2], %s411
          %413 = dma.done %s409, 512
        $region44: #{transformer_lm_forward.5} parent=39 // pred_fallthru
          _
      $region40: #{transformer_lm_forward.5} parent=5 // pred_fallthru
        _
    $region6: #{transformer_lm_forward.5} parent=1 // loop_footer
      %s16 = sadd.s32 1, %s12
    $region7: #{transformer_lm_forward.5} parent=1 // loop_footer_branch
      %11 = sbr.rel target = $region3
    $region8: #{transformer_lm_forward.5} parent=1 // loop_exit
      _
    %414 = vsyncpa [#allocation3], 1
    %s415 = scalar_lea.sflag [#allocation3], 1
    %416 = vsyncpa %s415, 1

// kernel: transformer_lm_forward.3
$region0: #{transformer_lm_forward.3}
  #allocation0 [shape = 'u32[]', space=smem, size = 0x4, offset = 0x4, fixed_abs, tag = 'smem constant byte address 0x4 - core index']
  #allocation1 [shape = 'u32[144,128]{1,0:T(1,128)}', space=vmem, size = 0x12000, scoped, tag = 'internal scratch']
  %s0 = inlined_call_operand.vmem [shape: f32[2,16,128], index: 0, kind: input, shape index: {}]
  %s1 = inlined_call_operand.vmem [shape: f32[16,16], index: 1, kind: input, shape index: {}]
  %s2 = inlined_call_operand.vmem [shape: f32[1,128], index: 2, kind: input, shape index: {}]
  %s3 = inlined_call_operand.vmem [shape: f32[1,128], index: 3, kind: input, shape index: {}]
  %s4 = inlined_call_operand.vmem [shape: bf16[128,384], index: 4, kind: input, shape index: {}]
  %s5 = inlined_call_operand.vmem [shape: bf16[128,128], index: 5, kind: input, shape index: {}]
  %s6 = inlined_call_operand.vmem [shape: bf16[128,256], index: 6, kind: input, shape index: {}]
  %s7 = inlined_call_operand.vmem [shape: bf16[256,128], index: 7, kind: input, shape index: {}]
  %s8 = inlined_call_operand.vmem [shape: f32[2,16,128], index: 8, kind: output, shape index: {}]
  %s9 = sld [smem:[#allocation0]]
  $region65: #{transformer_lm_forward.3} parent=0
    _
  %s11 = ssub.s32 1, %s9
  %s12 = scalar_select 0, %s11, %s9
  loop: start=0, step=1, limit=4
  $region2: #{transformer_lm_forward.3} parent=0 // loop_pre_header
    _
  $region3: #{transformer_lm_forward.3} parent=0 // loop_header
    %s14 = sphi 0, %s18
    %p15 = scmp.ge.s32.totalorder %s14, 4
    %s24 = sphi 0, %s26
    %s27 = sphi 0, %s24
    %s28 = sphi 0, %s27
    %s44 = sphi 0, %s28
    %s48 = sphi 0, %s48
    %s50 = sphi 0, %s48
    %s51 = sphi 0, %s50
    %s65 = sphi 0, %s51
    %s69 = sphi 0, %s69
    %s71 = sphi 0, %s69
    %s72 = sphi 0, %s71
    %s86 = sphi 0, %s72
    %s90 = sphi 0, %s90
    %s92 = sphi 0, %s90
    %s93 = sphi 0, %s92
    %s107 = sphi 0, %s93
    %s111 = sphi 0, %s111
    %s113 = sphi 0, %s111
    %s114 = sphi 0, %s113
    %s128 = sphi 0, %s114
    %s132 = sphi 0, %s132
    %s134 = sphi 0, %s132
    %s135 = sphi 0, %s134
    %s149 = sphi 0, %s135
    %s153 = sphi 0, %s153
    %s155 = sphi 0, %s153
    %s156 = sphi 0, %s155
    %s170 = sphi 0, %s156
    %s174 = sphi 0, %s174
    %s176 = sphi 0, %s174
    %s177 = sphi 0, %s176
    %s191 = sphi 0, %s177
    %s197 = sphi 0, %s199
    %s200 = sphi 0, %s197
    %s201 = sphi 0, %s200
    %s217 = sphi 0, %s201
  $region4: #{transformer_lm_forward.3} parent=0 // loop_header_branch
    %17 = sbr.rel (%p15) target = $region8
  $region5: #{transformer_lm_forward.3} parent=0 // loop_body
    %s19 = ssub.s32 %s14, 1
    %s20 = ssub.s32 %s14, 2
    %s21 = sadd.s32 %s14, 1
    %s22 = ssub.s32 %s14, %s21
    %p23 = scmp.eq.s32.totalorder %s22, 0
    %s25 = sadd.s32 %s24, 1
    %s26 = scalar_select %p23, %s24, %s25
    %p29 = pneg %p23
    %p30 = scmp.eq.s32.totalorder %s14, 1
    %p31 = por %p29, %p30
    %p32 = scmp.ne.s32.totalorder %s24, %s27
    %p33 = scmp.eq.s32.totalorder %s14, 0
    %p34 = por %p32, %p33
    %p35 = scmp.ne.s32.totalorder %s24, %s27
    %p36 = scmp.eq.s32.totalorder %s19, 1
    %p37 = por %p35, %p36
    %p38 = scmp.ne.s32.totalorder %s27, %s28
    %p39 = scmp.eq.s32.totalorder %s19, 0
    %p40 = por %p38, %p39
    %p41 = scmp.ne.s32.totalorder %s27, %s28
    %p42 = scmp.eq.s32.totalorder %s20, 1
    %p43 = por %p41, %p42
    %p45 = scmp.ne.s32.totalorder %s28, %s44
    %p46 = scmp.eq.s32.totalorder %s20, 0
    %p47 = por %p45, %p46
    %s49 = sadd.s32 %s48, 1
    %p52 = scmp.eq.s32.totalorder %s14, 1
    %p53 = scmp.ne.s32.totalorder %s48, %s50
    %p54 = scmp.eq.s32.totalorder %s14, 0
    %p55 = por %p53, %p54
    %p56 = scmp.ne.s32.totalorder %s48, %s50
    %p57 = scmp.eq.s32.totalorder %s19, 1
    %p58 = por %p56, %p57
    %p59 = scmp.ne.s32.totalorder %s50, %s51
    %p60 = scmp.eq.s32.totalorder %s19, 0
    %p61 = por %p59, %p60
    %p62 = scmp.ne.s32.totalorder %s50, %s51
    %p63 = scmp.eq.s32.totalorder %s20, 1
    %p64 = por %p62, %p63
    %p66 = scmp.ne.s32.totalorder %s51, %s65
    %p67 = scmp.eq.s32.totalorder %s20, 0
    %p68 = por %p66, %p67
    %s70 = sadd.s32 %s69, 1
    %p73 = scmp.eq.s32.totalorder %s14, 1
    %p74 = scmp.ne.s32.totalorder %s69, %s71
    %p75 = scmp.eq.s32.totalorder %s14, 0
    %p76 = por %p74, %p75
    %p77 = scmp.ne.s32.totalorder %s69, %s71
    %p78 = scmp.eq.s32.totalorder %s19, 1
    %p79 = por %p77, %p78
    %p80 = scmp.ne.s32.totalorder %s71, %s72
    %p81 = scmp.eq.s32.totalorder %s19, 0
    %p82 = por %p80, %p81
    %p83 = scmp.ne.s32.totalorder %s71, %s72
    %p84 = scmp.eq.s32.totalorder %s20, 1
    %p85 = por %p83, %p84
    %p87 = scmp.ne.s32.totalorder %s72, %s86
    %p88 = scmp.eq.s32.totalorder %s20, 0
    %p89 = por %p87, %p88
    %s91 = sadd.s32 %s90, 1
    %p94 = scmp.eq.s32.totalorder %s14, 1
    %p95 = scmp.ne.s32.totalorder %s90, %s92
    %p96 = scmp.eq.s32.totalorder %s14, 0
    %p97 = por %p95, %p96
    %p98 = scmp.ne.s32.totalorder %s90, %s92
    %p99 = scmp.eq.s32.totalorder %s19, 1
    %p100 = por %p98, %p99
    %p101 = scmp.ne.s32.totalorder %s92, %s93
    %p102 = scmp.eq.s32.totalorder %s19, 0
    %p103 = por %p101, %p102
    %p104 = scmp.ne.s32.totalorder %s92, %s93
    %p105 = scmp.eq.s32.totalorder %s20, 1
    %p106 = por %p104, %p105
    %p108 = scmp.ne.s32.totalorder %s93, %s107
    %p109 = scmp.eq.s32.totalorder %s20, 0
    %p110 = por %p108, %p109
    %s112 = sadd.s32 %s111, 1
    %p115 = scmp.eq.s32.totalorder %s14, 1
    %p116 = scmp.ne.s32.totalorder %s111, %s113
    %p117 = scmp.eq.s32.totalorder %s14, 0
    %p118 = por %p116, %p117
    %p119 = scmp.ne.s32.totalorder %s111, %s113
    %p120 = scmp.eq.s32.totalorder %s19, 1
    %p121 = por %p119, %p120
    %p122 = scmp.ne.s32.totalorder %s113, %s114
    %p123 = scmp.eq.s32.totalorder %s19, 0
    %p124 = por %p122, %p123
    %p125 = scmp.ne.s32.totalorder %s113, %s114
    %p126 = scmp.eq.s32.totalorder %s20, 1
    %p127 = por %p125, %p126
    %p129 = scmp.ne.s32.totalorder %s114, %s128
    %p130 = scmp.eq.s32.totalorder %s20, 0
    %p131 = por %p129, %p130
    %s133 = sadd.s32 %s132, 1
    %p136 = scmp.eq.s32.totalorder %s14, 1
    %p137 = scmp.ne.s32.totalorder %s132, %s134
    %p138 = scmp.eq.s32.totalorder %s14, 0
    %p139 = por %p137, %p138
    %p140 = scmp.ne.s32.totalorder %s132, %s134
    %p141 = scmp.eq.s32.totalorder %s19, 1
    %p142 = por %p140, %p141
    %p143 = scmp.ne.s32.totalorder %s134, %s135
    %p144 = scmp.eq.s32.totalorder %s19, 0
    %p145 = por %p143, %p144
    %p146 = scmp.ne.s32.totalorder %s134, %s135
    %p147 = scmp.eq.s32.totalorder %s20, 1
    %p148 = por %p146, %p147
    %p150 = scmp.ne.s32.totalorder %s135, %s149
    %p151 = scmp.eq.s32.totalorder %s20, 0
    %p152 = por %p150, %p151
    %s154 = sadd.s32 %s153, 1
    %p157 = scmp.eq.s32.totalorder %s14, 1
    %p158 = scmp.ne.s32.totalorder %s153, %s155
    %p159 = scmp.eq.s32.totalorder %s14, 0
    %p160 = por %p158, %p159
    %p161 = scmp.ne.s32.totalorder %s153, %s155
    %p162 = scmp.eq.s32.totalorder %s19, 1
    %p163 = por %p161, %p162
    %p164 = scmp.ne.s32.totalorder %s155, %s156
    %p165 = scmp.eq.s32.totalorder %s19, 0
    %p166 = por %p164, %p165
    %p167 = scmp.ne.s32.totalorder %s155, %s156
    %p168 = scmp.eq.s32.totalorder %s20, 1
    %p169 = por %p167, %p168
    %p171 = scmp.ne.s32.totalorder %s156, %s170
    %p172 = scmp.eq.s32.totalorder %s20, 0
    %p173 = por %p171, %p172
    %s175 = sadd.s32 %s174, 1
    %p178 = scmp.eq.s32.totalorder %s14, 1
    %p179 = scmp.ne.s32.totalorder %s174, %s176
    %p180 = scmp.eq.s32.totalorder %s14, 0
    %p181 = por %p179, %p180
    %p182 = scmp.ne.s32.totalorder %s174, %s176
    %p183 = scmp.eq.s32.totalorder %s19, 1
    %p184 = por %p182, %p183
    %p185 = scmp.ne.s32.totalorder %s176, %s177
    %p186 = scmp.eq.s32.totalorder %s19, 0
    %p187 = por %p185, %p186
    %p188 = scmp.ne.s32.totalorder %s176, %s177
    %p189 = scmp.eq.s32.totalorder %s20, 1
    %p190 = por %p188, %p189
    %p192 = scmp.ne.s32.totalorder %s177, %s191
    %p193 = scmp.eq.s32.totalorder %s20, 0
    %p194 = por %p192, %p193
    %s195 = ssub.s32 %s14, %s21
    %p196 = scmp.eq.s32.totalorder %s195, 0
    %s198 = sadd.s32 %s197, 1
    %s199 = scalar_select %p196, %s197, %s198
    %p202 = pneg %p196
    %p203 = scmp.eq.s32.totalorder %s14, 1
    %p204 = por %p202, %p203
    %p205 = scmp.ne.s32.totalorder %s197, %s200
    %p206 = scmp.eq.s32.totalorder %s14, 0
    %p207 = por %p205, %p206
    %p208 = scmp.ne.s32.totalorder %s197, %s200
    %p209 = scmp.eq.s32.totalorder %s19, 1
    %p210 = por %p208, %p209
    %p211 = scmp.ne.s32.totalorder %s200, %s201
    %p212 = scmp.eq.s32.totalorder %s19, 0
    %p213 = por %p211, %p212
    %p214 = scmp.ne.s32.totalorder %s200, %s201
    %p215 = scmp.eq.s32.totalorder %s20, 1
    %p216 = por %p214, %p215
    %p218 = scmp.ne.s32.totalorder %s201, %s217
    %p219 = scmp.eq.s32.totalorder %s20, 0
    %p220 = por %p218, %p219
    %p221 = scmp.le.s32.totalorder 1, %s14
    %p222 = scmp.lt.s32.totalorder %s14, 3
    %p223 = pnand %p221, %p222
    %p224 = pneg %p223
    // Predicated region
    $region9: #{transformer_lm_forward.3} parent=5 // pred_check
      _
    $region10: #{transformer_lm_forward.3} parent=5 // pred_check_branch
      %226 = sbr.rel (%p223) target = $region12
    $region11: #{transformer_lm_forward.3} parent=5 // pred_region
      %s227 = ssub.s32 %s14, 1
      // Predicated region
      $region13: #{transformer_lm_forward.3} parent=11 // pred_check
        %p228 = pneg %p61
      $region14: #{transformer_lm_forward.3} parent=11 // pred_check_branch
        %230 = sbr.rel (%p228) target = $region16
      $region15: #{transformer_lm_forward.3} parent=11 // pred_region
        _
      $region16: #{transformer_lm_forward.3} parent=11 // pred_fallthru
        _
      // Predicated region
      $region17: #{transformer_lm_forward.3} parent=11 // pred_check
        %p231 = pneg %p82
      $region18: #{transformer_lm_forward.3} parent=11 // pred_check_branch
        %233 = sbr.rel (%p231) target = $region20
      $region19: #{transformer_lm_forward.3} parent=11 // pred_region
        _
      $region20: #{transformer_lm_forward.3} parent=11 // pred_fallthru
        _
      // Predicated region
      $region21: #{transformer_lm_forward.3} parent=11 // pred_check
        %p234 = pneg %p103
      $region22: #{transformer_lm_forward.3} parent=11 // pred_check_branch
        %236 = sbr.rel (%p234) target = $region24
      $region23: #{transformer_lm_forward.3} parent=11 // pred_region
        _
      $region24: #{transformer_lm_forward.3} parent=11 // pred_fallthru
        _
      // Predicated region
      $region25: #{transformer_lm_forward.3} parent=11 // pred_check
        %p237 = pneg %p124
      $region26: #{transformer_lm_forward.3} parent=11 // pred_check_branch
        %239 = sbr.rel (%p237) target = $region28
      $region27: #{transformer_lm_forward.3} parent=11 // pred_region
        _
      $region28: #{transformer_lm_forward.3} parent=11 // pred_fallthru
        _
      // Predicated region
      $region29: #{transformer_lm_forward.3} parent=11 // pred_check
        %p240 = pneg %p145
      $region30: #{transformer_lm_forward.3} parent=11 // pred_check_branch
        %242 = sbr.rel (%p240) target = $region32
      $region31: #{transformer_lm_forward.3} parent=11 // pred_region
        _
      $region32: #{transformer_lm_forward.3} parent=11 // pred_fallthru
        _
      // Predicated region
      $region33: #{transformer_lm_forward.3} parent=11 // pred_check
        %p243 = pneg %p166
      $region34: #{transformer_lm_forward.3} parent=11 // pred_check_branch
        %245 = sbr.rel (%p243) target = $region36
      $region35: #{transformer_lm_forward.3} parent=11 // pred_region
        _
      $region36: #{transformer_lm_forward.3} parent=11 // pred_fallthru
        _
      // Predicated region
      $region37: #{transformer_lm_forward.3} parent=11 // pred_check
        %p246 = pneg %p187
      $region38: #{transformer_lm_forward.3} parent=11 // pred_check_branch
        %248 = sbr.rel (%p246) target = $region40
      $region39: #{transformer_lm_forward.3} parent=11 // pred_region
        _
      $region40: #{transformer_lm_forward.3} parent=11 // pred_fallthru
        _
    $region12: #{transformer_lm_forward.3} parent=5 // pred_fallthru
      _
    %p249 = scmp.lt.s32.totalorder %s14, 2
    // Predicated region
    $region41: #{transformer_lm_forward.3} parent=5 // pred_check
      %p250 = pneg %p249
    $region42: #{transformer_lm_forward.3} parent=5 // pred_check_branch
      %252 = sbr.rel (%p250) target = $region44
    $region43: #{transformer_lm_forward.3} parent=5 // pred_region
      // Predicated region
      $region45: #{transformer_lm_forward.3} parent=43 // pred_check
        %p253 = pneg %p34
      $region46: #{transformer_lm_forward.3} parent=43 // pred_check_branch
        %255 = sbr.rel (%p253) target = $region48
      $region47: #{transformer_lm_forward.3} parent=43 // pred_region
        %p256 = scmp.lt.s32.totalorder %s14, 1
        %s257 = scalar_select %p256, %s14, 1
        %s258 = smul.addr %s257, 2
        %s259 = smul.addr %s258, 8
        %s260 = scalar_lea.vmem %s0, %s259
      $region48: #{transformer_lm_forward.3} parent=43 // pred_fallthru
        _
    $region44: #{transformer_lm_forward.3} parent=5 // pred_fallthru
      _
    %p261 = scmp.le.s32.totalorder 1, %s14
    %p262 = scmp.lt.s32.totalorder %s14, 3
    %p263 = pnand %p261, %p262
    %p264 = pneg %p263
    // Predicated region
    $region49: #{transformer_lm_forward.3} parent=5 // pred_check
      _
    $region50: #{transformer_lm_forward.3} parent=5 // pred_check_branch
      %266 = sbr.rel (%p263) target = $region52
    $region51: #{transformer_lm_forward.3} parent=5 // pred_region
      %s267 = ssub.s32 %s14, 1
      %p268 = scmp.lt.s32.totalorder %s19, 1
      %s269 = scalar_select %p268, %s19, 1
      %s270 = smul.addr %s269, 2
      %s271 = smul.addr %s270, 8
      %s272 = scalar_lea.vmem %s0, %s271
      %p273 = pneg %p40
      %p274 = pneg %p37
      %p275 = pneg %p61
      %p276 = pneg %p58
      %p277 = pneg %p82
      %p278 = pneg %p79
      %p279 = pneg %p103
      %p280 = pneg %p100
      %p281 = pneg %p124
      %p282 = pneg %p121
      %p283 = pneg %p145
      %p284 = pneg %p142
      %p285 = pneg %p166
      %p286 = pneg %p163
      %p287 = pneg %p187
      %p288 = pneg %p184
      %p289 = pneg %p213
      %p290 = pneg %p210
      %p291 = scmp.lt.s32.totalorder %s19, 1
      %s292 = scalar_select %p291, %s19, 1
      %s293 = smul.addr %s292, 2
      %s294 = smul.addr %s293, 8
      %s295 = scalar_lea.vmem %s8, %s294
      %p296 = scmp.lt.s32.totalorder %s19, 1
      %s297 = scalar_select %p296, %s19, 1
      %s298 = smul.addr %s297, 2
      %s299 = smul.addr %s298, 8
      %s300 = scalar_lea.vmem %s0, %s299
      %p301 = scmp.lt.s32.totalorder %s19, 1
      %s302 = scalar_select %p301, %s19, 1
      %s303 = smul.addr %s302, 2
      %s304 = smul.addr %s303, 8
      %s305 = scalar_lea.vmem %s8, %s304
      %v307 = vld [vmem:[%s300] sm:$0xff]
      %v308 = vld [vmem:[%s300 + $0x8] sm:$0xff]
      %v309 = vld [vmem:[%s2] sm:$0x1]
      %v310 = vmul.f32 %v307, %v307
      %v311 = vmul.f32 %v308, %v308
      %312 = vadd.xlane.f32.xlu0 %v310
      %v313 = vpop.xlane.xlu0 %312
      %314 = vadd.xlane.f32.xlu0 %v311
      %v315 = vpop.xlane.xlu0 %314
      %v316 = vrcp.pop 128.0
      %v317 = vmul.f32 %v313, %v316
      %v318 = vmul.f32 %v315, %v316
      %v319 = vadd.f32 %v317, 1e-05
      %v320 = vadd.f32 %v318, 1e-05
      %v321 = vrsqrt.pop %v319
      %v322 = vrsqrt.pop %v320
      %v323 = vmul.f32 %v307, %v321
      %v324 = vmul.f32 %v308, %v322
      %v326 = vlaneseq
      %v327 = vshrl.u32 %v326, 7
      %v328 = vsub.s32 0, %v327
      %v329 = vrot.slane %v309, %v328
      %v331 = vmul.f32 %v323, %v329
      %v332 = vmul.f32 %v324, %v329
      %v333 = vpack.c.bf16 %v332, %v331
      %v334 = vld [vmem:[%s4] sm:$0xff]
      %v335 = vld [vmem:[%s4 + $0x8] sm:$0xf]
      %v336 = vld [vmem:[%s4 + $0xc] sm:$0xff]
      %v337 = vld [vmem:[%s4 + $0x14] sm:$0xf]
      %v338 = vld [vmem:[%s4 + $0x18] sm:$0xff]
      %v339 = vld [vmem:[%s4 + $0x20] sm:$0xf]
      %v340 = vld [vmem:[%s4 + $0x24] sm:$0xff]
      %v341 = vld [vmem:[%s4 + $0x2c] sm:$0xf]
      %v342 = vld [vmem:[%s4 + $0x30] sm:$0xff]
      %v343 = vld [vmem:[%s4 + $0x38] sm:$0xf]
      %v344 = vld [vmem:[%s4 + $0x3c] sm:$0xff]
      %v345 = vld [vmem:[%s4 + $0x44] sm:$0xf]
      %v346 = vld [vmem:[%s4 + $0x48] sm:$0xff]
      %v347 = vld [vmem:[%s4 + $0x50] sm:$0xf]
      %v348 = vld [vmem:[%s4 + $0x54] sm:$0xff]
      %v349 = vld [vmem:[%s4 + $0x5c] sm:$0xf]
      %v350 = vld [vmem:[%s4 + $0x60] sm:$0xff]
      %v351 = vld [vmem:[%s4 + $0x68] sm:$0xf]
      %v352 = vld [vmem:[%s4 + $0x6c] sm:$0xff]
      %v353 = vld [vmem:[%s4 + $0x74] sm:$0xf]
      %v354 = vld [vmem:[%s4 + $0x78] sm:$0xff]
      %v355 = vld [vmem:[%s4 + $0x80] sm:$0xf]
      %v356 = vld [vmem:[%s4 + $0x84] sm:$0xff]
      %v357 = vld [vmem:[%s4 + $0x8c] sm:$0xf]
      %v358 = vld [vmem:[%s4 + $0x90] sm:$0xff]
      %v359 = vld [vmem:[%s4 + $0x98] sm:$0xf]
      %v360 = vld [vmem:[%s4 + $0x9c] sm:$0xff]
      %v361 = vld [vmem:[%s4 + $0xa4] sm:$0xf]
      %v362 = vld [vmem:[%s4 + $0xa8] sm:$0xff]
      %v363 = vld [vmem:[%s4 + $0xb0] sm:$0xf]
      %v364 = vld [vmem:[%s4 + $0xb4] sm:$0xff]
      %v365 = vld [vmem:[%s4 + $0xbc] sm:$0xf]
      %v398 = vunpack.c.l.b16 %v334
      %v399 = vunpack.c.h.b16 %v334
      %v400 = vunpack.c.l.b16 %v335
      %v401 = vunpack.c.l.b16 %v336
      %v402 = vunpack.c.h.b16 %v336
      %v403 = vunpack.c.l.b16 %v337
      %v404 = vunpack.c.l.b16 %v338
      %v405 = vunpack.c.h.b16 %v338
      %v406 = vunpack.c.l.b16 %v339
      %v407 = vunpack.c.l.b16 %v340
      %v408 = vunpack.c.h.b16 %v340
      %v409 = vunpack.c.l.b16 %v341
      %v410 = vunpack.c.l.b16 %v342
      %v411 = vunpack.c.h.b16 %v342
      %v412 = vunpack.c.l.b16 %v343
      %v413 = vunpack.c.l.b16 %v344
      %v414 = vunpack.c.h.b16 %v344
      %v415 = vunpack.c.l.b16 %v345
      %v416 = vunpack.c.l.b16 %v346
      %v417 = vunpack.c.h.b16 %v346
      %v418 = vunpack.c.l.b16 %v347
      %v419 = vunpack.c.l.b16 %v348
      %v420 = vunpack.c.h.b16 %v348
      %v421 = vunpack.c.l.b16 %v349
      %v422 = vunpack.c.l.b16 %v350
      %v423 = vunpack.c.h.b16 %v350
      %v424 = vunpack.c.l.b16 %v351
      %v425 = vunpack.c.l.b16 %v352
      %v426 = vunpack.c.h.b16 %v352
      %v427 = vunpack.c.l.b16 %v353
      %v428 = vunpack.c.l.b16 %v354
      %v429 = vunpack.c.h.b16 %v354
      %v430 = vunpack.c.l.b16 %v355
      %v431 = vunpack.c.l.b16 %v356
      %v432 = vunpack.c.h.b16 %v356
      %v433 = vunpack.c.l.b16 %v357
      %v434 = vunpack.c.l.b16 %v358
      %v435 = vunpack.c.h.b16 %v358
      %v436 = vunpack.c.l.b16 %v359
      %v437 = vunpack.c.l.b16 %v360
      %v438 = vunpack.c.h.b16 %v360
      %v439 = vunpack.c.l.b16 %v361
      %v440 = vunpack.c.l.b16 %v362
      %v441 = vunpack.c.h.b16 %v362
      %v442 = vunpack.c.l.b16 %v363
      %v443 = vunpack.c.l.b16 %v364
      %v444 = vunpack.c.h.b16 %v364
      %v445 = vunpack.c.l.b16 %v365
      %v446 = vpack.c.b16 %v401, %v398
      %v447 = vpack.c.b16 %v402, %v399
      %v448 = vpack.c.b16 %v403, %v400
      %v449 = vpack.c.b16 %v407, %v404
      %v450 = vpack.c.b16 %v408, %v405
      %v451 = vpack.c.b16 %v409, %v406
      %v452 = vpack.c.b16 %v413, %v410
      %v453 = vpack.c.b16 %v414, %v411
      %v454 = vpack.c.b16 %v415, %v412
      %v455 = vpack.c.b16 %v419, %v416
      %v456 = vpack.c.b16 %v420, %v417
      %v457 = vpack.c.b16 %v421, %v418
      %v458 = vpack.c.b16 %v425, %v422
      %v459 = vpack.c.b16 %v426, %v423
      %v460 = vpack.c.b16 %v427, %v424
      %v461 = vpack.c.b16 %v431, %v428
      %v462 = vpack.c.b16 %v432, %v429
      %v463 = vpack.c.b16 %v433, %v430
      %v464 = vpack.c.b16 %v437, %v434
      %v465 = vpack.c.b16 %v438, %v435
      %v466 = vpack.c.b16 %v439, %v436
      %v467 = vpack.c.b16 %v443, %v440
      %v468 = vpack.c.b16 %v444, %v441
      %v469 = vpack.c.b16 %v445, %v442
      %494 = vmatprep.subr.bf16.mxu0 %v447
      %495 = vmatpush1.bf16.msra.mxu0 %v446
      %496 = vmatprep.subr.bf16.mxu0 %v450
      %497 = vmatpush1.bf16.msra.mxu0 %v449
      %498 = vmatprep.subr.bf16.mxu0 %v453
      %499 = vmatpush1.bf16.msra.mxu0 %v452
      %500 = vmatprep.subr.bf16.mxu0 %v456
      %501 = vmatpush1.bf16.msra.mxu0 %v455
      %502 = vmatprep.subr.bf16.mxu0 %v459
      %503 = vmatpush1.bf16.msra.mxu0 %v458
      %504 = vmatprep.subr.bf16.mxu0 %v462
      %505 = vmatpush1.bf16.msra.mxu0 %v461
      %506 = vmatprep.subr.bf16.mxu0 %v465
      %507 = vmatpush1.bf16.msra.mxu0 %v464
      %508 = vmatprep.subr.bf16.mxu0 %v468
      %509 = vmatpush1.bf16.msra.mxu0 %v467
      %510 = vmatprep.subr.bf16.mxu0 0
      %511 = vmatpush1.bf16.msra.mxu0 0
      %512 = vmatprep.subr.bf16.mxu0 0
      %513 = vmatpush1.bf16.msra.mxu0 0
      %514 = vmatprep.subr.bf16.mxu0 0
      %515 = vmatpush1.bf16.msra.mxu0 0
      %516 = vmatprep.subr.bf16.mxu0 0
      %517 = vmatpush1.bf16.msra.mxu0 0
      %518 = vmatprep.subr.bf16.mxu0 0
      %519 = vmatpush1.bf16.msra.mxu0 0
      %520 = vmatprep.subr.bf16.mxu0 0
      %521 = vmatpush1.bf16.msra.mxu0 0
      %522 = vmatprep.subr.bf16.mxu0 0
      %523 = vmatpush1.bf16.msra.mxu0 0
      %524 = vmatprep.subr.bf16.mxu0 0
      %525 = vmatpush1.bf16.msra.mxu0 0
      %526 = vmatprep.mubr.bf16.mxu0 0
      %527 = vmatmul.mubr.bf16.gmra.mrb[0].mxu0 %v333
      %v528 = vpop.f32.mrb[0].mxu0
      %v529 = vadd.f32 0.0, %v528
      %v530 = vpop.f32.mrb[0].mxu0
      %v531 = vadd.f32 0.0, %v530
      %v532 = vpop.f32.mrb[0].mxu0
      %v533 = vadd.f32 0.0, %v532
      %v534 = vpop.f32.mrb[0].mxu0
      %v535 = vadd.f32 0.0, %v534
      %536 = vdwg.mxu0
      %537 = vmatprep.subr.bf16.mxu0 0
      %538 = vmatpush1.bf16.msra.mxu0 %v448
      %539 = vmatprep.subr.bf16.mxu0 0
      %540 = vmatpush1.bf16.msra.mxu0 %v451
      %541 = vmatprep.subr.bf16.mxu0 0
      %542 = vmatpush1.bf16.msra.mxu0 %v454
      %543 = vmatprep.subr.bf16.mxu0 0
      %544 = vmatpush1.bf16.msra.mxu0 %v457
      %545 = vmatprep.subr.bf16.mxu0 0
      %546 = vmatpush1.bf16.msra.mxu0 %v460
      %547 = vmatprep.subr.bf16.mxu0 0
      %548 = vmatpush1.bf16.msra.mxu0 %v463
      %549 = vmatprep.subr.bf16.mxu0 0
      %550 = vmatpush1.bf16.msra.mxu0 %v466
      %551 = vmatprep.subr.bf16.mxu0 0
      %552 = vmatpush1.bf16.msra.mxu0 %v469
      %553 = vmatprep.subr.bf16.mxu0 0
      %554 = vmatpush1.bf16.msra.mxu0 0
      %555 = vmatprep.subr.bf16.mxu0 0
      %556 = vmatpush1.bf16.msra.mxu0 0
      %557 = vmatprep.subr.bf16.mxu0 0
      %558 = vmatpush1.bf16.msra.mxu0 0
      %559 = vmatprep.subr.bf16.mxu0 0
      %560 = vmatpush1.bf16.msra.mxu0 0
      %561 = vmatprep.subr.bf16.mxu0 0
      %562 = vmatpush1.bf16.msra.mxu0 0
      %563 = vmatprep.subr.bf16.mxu0 0
      %564 = vmatpush1.bf16.msra.mxu0 0
      %565 = vmatprep.subr.bf16.mxu0 0
      %566 = vmatpush1.bf16.msra.mxu0 0
      %567 = vmatprep.subr.bf16.mxu0 0
      %568 = vmatpush1.bf16.msra.mxu0 0
      %569 = vmatprep.mubr.bf16.mxu0 0
      %570 = vmatmul.mubr.bf16.gmra.mrb[0].mxu0 %v333
      %v571 = vpop.f32.mrb[0].mxu0
      %v572 = vadd.f32 0.0, %v571
      %v573 = vpop.f32.mrb[0].mxu0
      %v574 = vpop.f32.mrb[0].mxu0
      %v575 = vadd.f32 0.0, %v574
      %v576 = vpop.f32.mrb[0].mxu0
      %577 = vdwg.mxu0
      %580 = vrot.lane.b32.xlu0 %v529, 96
      %v581 = vpop.permute.xlu0 %580
      %582 = vrot.lane.b32.xlu0 %v533, 96
      %v583 = vpop.permute.xlu0 %582
      %586 = vrot.lane.b32.xlu0 %v529, 64
      %v587 = vpop.permute.xlu0 %586
      %588 = vrot.lane.b32.xlu0 %v533, 64
      %v589 = vpop.permute.xlu0 %588
      %592 = vrot.lane.b32.xlu0 %v529, 32
      %v593 = vpop.permute.xlu0 %592
      %594 = vrot.lane.b32.xlu0 %v533, 32
      %v595 = vpop.permute.xlu0 %594
      %v598 = vcombine.low %v529, %v587
      %v599 = vcombine.high %v529, %v587
      %v601 = vunpack.c.l.s4 1983009808
      %v602 = vunpack.c.0.s8 %v601
      %v603 = vlaneseq
      %v604 = vshrl.u32 %v603, 7
      %v605 = vsub.s32 %v602, %v604
      %v606 = vrot.slane %v598, %v605
      %v608 = vunpack.c.l.s4 1983009808
      %v609 = vunpack.c.0.s8 %v608
      %v610 = vlaneseq
      %v611 = vshrl.u32 %v610, 7
      %v612 = vsub.s32 %v609, %v611
      %v613 = vrot.slane %v599, %v612
      %v614 = vcombine.low %v581, %v593
      %v615 = vcombine.high %v581, %v593
      %v617 = vunpack.c.l.s4 1983009808
      %v618 = vunpack.c.0.s8 %v617
      %v619 = vlaneseq
      %v620 = vshrl.u32 %v619, 7
      %v621 = vsub.s32 %v618, %v620
      %v622 = vrot.slane %v614, %v621
      %v624 = vunpack.c.l.s4 1983009808
      %v625 = vunpack.c.0.s8 %v624
      %v626 = vlaneseq
      %v627 = vshrl.u32 %v626, 7
      %v628 = vsub.s32 %v625, %v627
      %v629 = vrot.slane %v615, %v628
      %v630 = vcombine.low %v606, %v622
      %v631 = vcombine.high %v606, %v622
      %v633 = vunpack.c.l.s4 1934713408
      %v634 = vunpack.c.0.s8 %v633
      %v635 = vlaneseq
      %v636 = vshrl.u32 %v635, 7
      %v637 = vsub.s32 %v634, %v636
      %v638 = vrot.slane %v630, %v637
      %v640 = vunpack.c.l.s4 1934713408
      %v641 = vunpack.c.0.s8 %v640
      %v642 = vlaneseq
      %v643 = vshrl.u32 %v642, 7
      %v644 = vsub.s32 %v641, %v643
      %v645 = vrot.slane %v631, %v644
      %v646 = vcombine.low %v613, %v629
      %v647 = vcombine.high %v613, %v629
      %v649 = vunpack.c.l.s4 1934713408
      %v650 = vunpack.c.0.s8 %v649
      %v651 = vlaneseq
      %v652 = vshrl.u32 %v651, 7
      %v653 = vsub.s32 %v650, %v652
      %v654 = vrot.slane %v646, %v653
      %v656 = vunpack.c.l.s4 1934713408
      %v657 = vunpack.c.0.s8 %v656
      %v658 = vlaneseq
      %v659 = vshrl.u32 %v658, 7
      %v660 = vsub.s32 %v657, %v659
      %v661 = vrot.slane %v647, %v660
      %v662 = vcombine.high %v638, 0.0
      %v663 = vcombine.high %v645, 0.0
      %v664 = vcombine.high %v654, 0.0
      %v665 = vcombine.high %v661, 0.0
      %v666 = vcombine.low %v533, %v589
      %v667 = vcombine.high %v533, %v589
      %v669 = vunpack.c.l.s4 1983009808
      %v670 = vunpack.c.0.s8 %v669
      %v671 = vlaneseq
      %v672 = vshrl.u32 %v671, 7
      %v673 = vsub.s32 %v670, %v672
      %v674 = vrot.slane %v666, %v673
      %v676 = vunpack.c.l.s4 1983009808
      %v677 = vunpack.c.0.s8 %v676
      %v678 = vlaneseq
      %v679 = vshrl.u32 %v678, 7
      %v680 = vsub.s32 %v677, %v679
      %v681 = vrot.slane %v667, %v680
      %v682 = vcombine.low %v583, %v595
      %v683 = vcombine.high %v583, %v595
      %v685 = vunpack.c.l.s4 1983009808
      %v686 = vunpack.c.0.s8 %v685
      %v687 = vlaneseq
      %v688 = vshrl.u32 %v687, 7
      %v689 = vsub.s32 %v686, %v688
      %v690 = vrot.slane %v682, %v689
      %v692 = vunpack.c.l.s4 1983009808
      %v693 = vunpack.c.0.s8 %v692
      %v694 = vlaneseq
      %v695 = vshrl.u32 %v694, 7
      %v696 = vsub.s32 %v693, %v695
      %v697 = vrot.slane %v683, %v696
      %v698 = vcombine.low %v674, %v690
      %v699 = vcombine.high %v674, %v690
      %v701 = vunpack.c.l.s4 1934713408
      %v702 = vunpack.c.0.s8 %v701
      %v703 = vlaneseq
      %v704 = vshrl.u32 %v703, 7
      %v705 = vsub.s32 %v702, %v704
      %v706 = vrot.slane %v698, %v705
      %v708 = vunpack.c.l.s4 1934713408
      %v709 = vunpack.c.0.s8 %v708
      %v710 = vlaneseq
      %v711 = vshrl.u32 %v710, 7
      %v712 = vsub.s32 %v709, %v711
      %v713 = vrot.slane %v699, %v712
      %v714 = vcombine.low %v681, %v697
      %v715 = vcombine.high %v681, %v697
      %v717 = vunpack.c.l.s4 1934713408
      %v718 = vunpack.c.0.s8 %v717
      %v719 = vlaneseq
      %v720 = vshrl.u32 %v719, 7
      %v721 = vsub.s32 %v718, %v720
      %v722 = vrot.slane %v714, %v721
      %v724 = vunpack.c.l.s4 1934713408
      %v725 = vunpack.c.0.s8 %v724
      %v726 = vlaneseq
      %v727 = vshrl.u32 %v726, 7
      %v728 = vsub.s32 %v725, %v727
      %v729 = vrot.slane %v715, %v728
      %v730 = vcombine.high %v706, 0.0
      %v731 = vcombine.high %v713, 0.0
      %v732 = vcombine.high %v722, 0.0
      %v733 = vcombine.high %v729, 0.0
      %v734 = vpack.c.bf16 %v638, %v638
      %v735 = vpack.c.bf16 %v662, %v662
      %v736 = vpack.c.bf16 %v645, %v645
      %v737 = vpack.c.bf16 %v663, %v663
      %v738 = vpack.c.bf16 %v654, %v654
      %v739 = vpack.c.bf16 %v664, %v664
      %v740 = vpack.c.bf16 %v661, %v661
      %v741 = vpack.c.bf16 %v665, %v665
      %v742 = vpack.c.bf16 %v706, %v706
      %v743 = vpack.c.bf16 %v730, %v730
      %v744 = vpack.c.bf16 %v713, %v713
      %v745 = vpack.c.bf16 %v731, %v731
      %v746 = vpack.c.bf16 %v722, %v722
      %v747 = vpack.c.bf16 %v732, %v732
      %v748 = vpack.c.bf16 %v729, %v729
      %v749 = vpack.c.bf16 %v733, %v733
      %752 = vrot.lane.b32.xlu0 %v531, 96
      %v753 = vpop.permute.xlu0 %752
      %754 = vrot.lane.b32.xlu0 %v535, 96
      %v755 = vpop.permute.xlu0 %754
      %758 = vrot.lane.b32.xlu0 %v531, 64
      %v759 = vpop.permute.xlu0 %758
      %760 = vrot.lane.b32.xlu0 %v535, 64
      %v761 = vpop.permute.xlu0 %760
      %764 = vrot.lane.b32.xlu0 %v531, 32
      %v765 = vpop.permute.xlu0 %764
      %766 = vrot.lane.b32.xlu0 %v535, 32
      %v767 = vpop.permute.xlu0 %766
      %v770 = vcombine.low %v531, %v759
      %v771 = vcombine.high %v531, %v759
      %v773 = vunpack.c.l.s4 1983009808
      %v774 = vunpack.c.0.s8 %v773
      %v775 = vlaneseq
      %v776 = vshrl.u32 %v775, 7
      %v777 = vsub.s32 %v774, %v776
      %v778 = vrot.slane %v770, %v777
      %v780 = vunpack.c.l.s4 1983009808
      %v781 = vunpack.c.0.s8 %v780
      %v782 = vlaneseq
      %v783 = vshrl.u32 %v782, 7
      %v784 = vsub.s32 %v781, %v783
      %v785 = vrot.slane %v771, %v784
      %v786 = vcombine.low %v753, %v765
      %v787 = vcombine.high %v753, %v765
      %v789 = vunpack.c.l.s4 1983009808
      %v790 = vunpack.c.0.s8 %v789
      %v791 = vlaneseq
      %v792 = vshrl.u32 %v791, 7
      %v793 = vsub.s32 %v790, %v792
      %v794 = vrot.slane %v786, %v793
      %v796 = vunpack.c.l.s4 1983009808
      %v797 = vunpack.c.0.s8 %v796
      %v798 = vlaneseq
      %v799 = vshrl.u32 %v798, 7
      %v800 = vsub.s32 %v797, %v799
      %v801 = vrot.slane %v787, %v800
      %v802 = vcombine.low %v778, %v794
      %v803 = vcombine.high %v778, %v794
      %v805 = vunpack.c.l.s4 1934713408
      %v806 = vunpack.c.0.s8 %v805
      %v807 = vlaneseq
      %v808 = vshrl.u32 %v807, 7
      %v809 = vsub.s32 %v806, %v808
      %v810 = vrot.slane %v802, %v809
      %v812 = vunpack.c.l.s4 1934713408
      %v813 = vunpack.c.0.s8 %v812
      %v814 = vlaneseq
      %v815 = vshrl.u32 %v814, 7
      %v816 = vsub.s32 %v813, %v815
      %v817 = vrot.slane %v803, %v816
      %v818 = vcombine.low %v785, %v801
      %v819 = vcombine.high %v785, %v801
      %v821 = vunpack.c.l.s4 1934713408
      %v822 = vunpack.c.0.s8 %v821
      %v823 = vlaneseq
      %v824 = vshrl.u32 %v823, 7
      %v825 = vsub.s32 %v822, %v824
      %v826 = vrot.slane %v818, %v825
      %v828 = vunpack.c.l.s4 1934713408
      %v829 = vunpack.c.0.s8 %v828
      %v830 = vlaneseq
      %v831 = vshrl.u32 %v830, 7
      %v832 = vsub.s32 %v829, %v831
      %v833 = vrot.slane %v819, %v832
      %v834 = vcombine.high %v810, 0.0
      %v835 = vcombine.high %v817, 0.0
      %v836 = vcombine.high %v826, 0.0
      %v837 = vcombine.high %v833, 0.0
      %v838 = vcombine.low %v535, %v761
      %v839 = vcombine.high %v535, %v761
      %v841 = vunpack.c.l.s4 1983009808
      %v842 = vunpack.c.0.s8 %v841
      %v843 = vlaneseq
      %v844 = vshrl.u32 %v843, 7
      %v845 = vsub.s32 %v842, %v844
      %v846 = vrot.slane %v838, %v845
      %v848 = vunpack.c.l.s4 1983009808
      %v849 = vunpack.c.0.s8 %v848
      %v850 = vlaneseq
      %v851 = vshrl.u32 %v850, 7
      %v852 = vsub.s32 %v849, %v851
      %v853 = vrot.slane %v839, %v852
      %v854 = vcombine.low %v755, %v767
      %v855 = vcombine.high %v755, %v767
      %v857 = vunpack.c.l.s4 1983009808
      %v858 = vunpack.c.0.s8 %v857
      %v859 = vlaneseq
      %v860 = vshrl.u32 %v859, 7
      %v861 = vsub.s32 %v858, %v860
      %v862 = vrot.slane %v854, %v861
      %v864 = vunpack.c.l.s4 1983009808
      %v865 = vunpack.c.0.s8 %v864
      %v866 = vlaneseq
      %v867 = vshrl.u32 %v866, 7
      %v868 = vsub.s32 %v865, %v867
      %v869 = vrot.slane %v855, %v868
      %v870 = vcombine.low %v846, %v862
      %v871 = vcombine.high %v846, %v862
      %v873 = vunpack.c.l.s4 1934713408
      %v874 = vunpack.c.0.s8 %v873
      %v875 = vlaneseq
      %v876 = vshrl.u32 %v875, 7
      %v877 = vsub.s32 %v874, %v876
      %v878 = vrot.slane %v870, %v877
      %v880 = vunpack.c.l.s4 1934713408
      %v881 = vunpack.c.0.s8 %v880
      %v882 = vlaneseq
      %v883 = vshrl.u32 %v882, 7
      %v884 = vsub.s32 %v881, %v883
      %v885 = vrot.slane %v871, %v884
      %v886 = vcombine.low %v853, %v869
      %v887 = vcombine.high %v853, %v869
      %v889 = vunpack.c.l.s4 1934713408
      %v890 = vunpack.c.0.s8 %v889
      %v891 = vlaneseq
      %v892 = vshrl.u32 %v891, 7
      %v893 = vsub.s32 %v890, %v892
      %v894 = vrot.slane %v886, %v893
      %v896 = vunpack.c.l.s4 1934713408
      %v897 = vunpack.c.0.s8 %v896
      %v898 = vlaneseq
      %v899 = vshrl.u32 %v898, 7
      %v900 = vsub.s32 %v897, %v899
      %v901 = vrot.slane %v887, %v900
      %v902 = vcombine.high %v878, 0.0
      %v903 = vcombine.high %v885, 0.0
      %v904 = vcombine.high %v894, 0.0
      %v905 = vcombine.high %v901, 0.0
      %v906 = vpack.c.bf16 %v810, %v810
      %v907 = vpack.c.bf16 %v834, %v834
      %v908 = vpack.c.bf16 %v817, %v817
      %v909 = vpack.c.bf16 %v835, %v835
      %v910 = vpack.c.bf16 %v826, %v826
      %v911 = vpack.c.bf16 %v836, %v836
      %v912 = vpack.c.bf16 %v833, %v833
      %v913 = vpack.c.bf16 %v837, %v837
      %v914 = vpack.c.bf16 %v878, %v878
      %v915 = vpack.c.bf16 %v902, %v902
      %v916 = vpack.c.bf16 %v885, %v885
      %v917 = vpack.c.bf16 %v903, %v903
      %v918 = vpack.c.bf16 %v894, %v894
      %v919 = vpack.c.bf16 %v904, %v904
      %v920 = vpack.c.bf16 %v901, %v901
      %v921 = vpack.c.bf16 %v905, %v905
      %924 = vrot.lane.b32.xlu0 %v572, 96
      %v925 = vpop.permute.xlu0 %924
      %926 = vrot.lane.b32.xlu0 %v575, 96
      %v927 = vpop.permute.xlu0 %926
      %930 = vrot.lane.b32.xlu0 %v572, 64
      %v931 = vpop.permute.xlu0 %930
      %932 = vrot.lane.b32.xlu0 %v575, 64
      %v933 = vpop.permute.xlu0 %932
      %936 = vrot.lane.b32.xlu0 %v572, 32
      %v937 = vpop.permute.xlu0 %936
      %938 = vrot.lane.b32.xlu0 %v575, 32
      %v939 = vpop.permute.xlu0 %938
      %v942 = vcombine.low %v572, %v931
      %v943 = vcombine.high %v572, %v931
      %v945 = vunpack.c.l.s4 1983009808
      %v946 = vunpack.c.0.s8 %v945
      %v947 = vlaneseq
      %v948 = vshrl.u32 %v947, 7
      %v949 = vsub.s32 %v946, %v948
      %v950 = vrot.slane %v942, %v949
      %v952 = vunpack.c.l.s4 1983009808
      %v953 = vunpack.c.0.s8 %v952
      %v954 = vlaneseq
      %v955 = vshrl.u32 %v954, 7
      %v956 = vsub.s32 %v953, %v955
      %v957 = vrot.slane %v943, %v956
      %v958 = vcombine.low %v925, %v937
      %v959 = vcombine.high %v925, %v937
      %v961 = vunpack.c.l.s4 1983009808
      %v962 = vunpack.c.0.s8 %v961
      %v963 = vlaneseq
      %v964 = vshrl.u32 %v963, 7
      %v965 = vsub.s32 %v962, %v964
      %v966 = vrot.slane %v958, %v965
      %v968 = vunpack.c.l.s4 1983009808
      %v969 = vunpack.c.0.s8 %v968
      %v970 = vlaneseq
      %v971 = vshrl.u32 %v970, 7
      %v972 = vsub.s32 %v969, %v971
      %v973 = vrot.slane %v959, %v972
      %v974 = vcombine.low %v950, %v966
      %v975 = vcombine.high %v950, %v966
      %v977 = vunpack.c.l.s4 1934713408
      %v978 = vunpack.c.0.s8 %v977
      %v979 = vlaneseq
      %v980 = vshrl.u32 %v979, 7
      %v981 = vsub.s32 %v978, %v980
      %v982 = vrot.slane %v974, %v981
      %v984 = vunpack.c.l.s4 1934713408
      %v985 = vunpack.c.0.s8 %v984
      %v986 = vlaneseq
      %v987 = vshrl.u32 %v986, 7
      %v988 = vsub.s32 %v985, %v987
      %v989 = vrot.slane %v975, %v988
      %v990 = vcombine.low %v957, %v973
      %v991 = vcombine.high %v957, %v973
      %v993 = vunpack.c.l.s4 1934713408
      %v994 = vunpack.c.0.s8 %v993
      %v995 = vlaneseq
      %v996 = vshrl.u32 %v995, 7
      %v997 = vsub.s32 %v994, %v996
      %v998 = vrot.slane %v990, %v997
      %v1000 = vunpack.c.l.s4 1934713408
      %v1001 = vunpack.c.0.s8 %v1000
      %v1002 = vlaneseq
      %v1003 = vshrl.u32 %v1002, 7
      %v1004 = vsub.s32 %v1001, %v1003
      %v1005 = vrot.slane %v991, %v1004
      %v1006 = vcombine.high %v982, 0.0
      %v1007 = vcombine.high %v989, 0.0
      %v1008 = vcombine.high %v998, 0.0
      %v1009 = vcombine.high %v1005, 0.0
      %v1010 = vcombine.low %v575, %v933
      %v1011 = vcombine.high %v575, %v933
      %v1013 = vunpack.c.l.s4 1983009808
      %v1014 = vunpack.c.0.s8 %v1013
      %v1015 = vlaneseq
      %v1016 = vshrl.u32 %v1015, 7
      %v1017 = vsub.s32 %v1014, %v1016
      %v1018 = vrot.slane %v1010, %v1017
      %v1020 = vunpack.c.l.s4 1983009808
      %v1021 = vunpack.c.0.s8 %v1020
      %v1022 = vlaneseq
      %v1023 = vshrl.u32 %v1022, 7
      %v1024 = vsub.s32 %v1021, %v1023
      %v1025 = vrot.slane %v1011, %v1024
      %v1026 = vcombine.low %v927, %v939
      %v1027 = vcombine.high %v927, %v939
      %v1029 = vunpack.c.l.s4 1983009808
      %v1030 = vunpack.c.0.s8 %v1029
      %v1031 = vlaneseq
      %v1032 = vshrl.u32 %v1031, 7
      %v1033 = vsub.s32 %v1030, %v1032
      %v1034 = vrot.slane %v1026, %v1033
      %v1036 = vunpack.c.l.s4 1983009808
      %v1037 = vunpack.c.0.s8 %v1036
      %v1038 = vlaneseq
      %v1039 = vshrl.u32 %v1038, 7
      %v1040 = vsub.s32 %v1037, %v1039
      %v1041 = vrot.slane %v1027, %v1040
      %v1042 = vcombine.low %v1018, %v1034
      %v1043 = vcombine.high %v1018, %v1034
      %v1045 = vunpack.c.l.s4 1934713408
      %v1046 = vunpack.c.0.s8 %v1045
      %v1047 = vlaneseq
      %v1048 = vshrl.u32 %v1047, 7
      %v1049 = vsub.s32 %v1046, %v1048
      %v1050 = vrot.slane %v1042, %v1049
      %v1052 = vunpack.c.l.s4 1934713408
      %v1053 = vunpack.c.0.s8 %v1052
      %v1054 = vlaneseq
      %v1055 = vshrl.u32 %v1054, 7
      %v1056 = vsub.s32 %v1053, %v1055
      %v1057 = vrot.slane %v1043, %v1056
      %v1058 = vcombine.low %v1025, %v1041
      %v1059 = vcombine.high %v1025, %v1041
      %v1061 = vunpack.c.l.s4 1934713408
      %v1062 = vunpack.c.0.s8 %v1061
      %v1063 = vlaneseq
      %v1064 = vshrl.u32 %v1063, 7
      %v1065 = vsub.s32 %v1062, %v1064
      %v1066 = vrot.slane %v1058, %v1065
      %v1068 = vunpack.c.l.s4 1934713408
      %v1069 = vunpack.c.0.s8 %v1068
      %v1070 = vlaneseq
      %v1071 = vshrl.u32 %v1070, 7
      %v1072 = vsub.s32 %v1069, %v1071
      %v1073 = vrot.slane %v1059, %v1072
      %v1074 = vcombine.high %v1050, 0.0
      %v1075 = vcombine.high %v1057, 0.0
      %v1076 = vcombine.high %v1066, 0.0
      %v1077 = vcombine.high %v1073, 0.0
      %v1078 = vpack.c.bf16 %v982, %v982
      %v1079 = vpack.c.bf16 %v1006, %v1006
      %v1080 = vpack.c.bf16 %v989, %v989
      %v1081 = vpack.c.bf16 %v1007, %v1007
      %v1082 = vpack.c.bf16 %v998, %v998
      %v1083 = vpack.c.bf16 %v1008, %v1008
      %v1084 = vpack.c.bf16 %v1005, %v1005
      %v1085 = vpack.c.bf16 %v1009, %v1009
      %v1086 = vpack.c.bf16 %v1050, %v1050
      %v1087 = vpack.c.bf16 %v1074, %v1074
      %v1088 = vpack.c.bf16 %v1057, %v1057
      %v1089 = vpack.c.bf16 %v1075, %v1075
      %v1090 = vpack.c.bf16 %v1066, %v1066
      %v1091 = vpack.c.bf16 %v1076, %v1076
      %v1092 = vpack.c.bf16 %v1073, %v1073
      %v1093 = vpack.c.bf16 %v1077, %v1077
      %v1094 = vld [vmem:[%s1] sm:$0xff]
      %v1095 = vld [vmem:[%s1 + $0x8] sm:$0xff]
      %v1096 = vcombine.low %v734, %v738
      %v1098 = vunpack.c.l.s4 1983009808
      %v1099 = vunpack.c.0.s8 %v1098
      %v1100 = vlaneseq
      %v1101 = vshrl.u32 %v1100, 7
      %v1102 = vsub.s32 %v1099, %v1101
      %v1103 = vrot.slane %v1096, %v1102
      %v1104 = vcombine.low %v736, %v740
      %v1106 = vunpack.c.l.s4 1983009808
      %v1107 = vunpack.c.0.s8 %v1106
      %v1108 = vlaneseq
      %v1109 = vshrl.u32 %v1108, 7
      %v1110 = vsub.s32 %v1107, %v1109
      %v1111 = vrot.slane %v1104, %v1110
      %v1112 = vcombine.low %v742, %v746
      %v1114 = vunpack.c.l.s4 1983009808
      %v1115 = vunpack.c.0.s8 %v1114
      %v1116 = vlaneseq
      %v1117 = vshrl.u32 %v1116, 7
      %v1118 = vsub.s32 %v1115, %v1117
      %v1119 = vrot.slane %v1112, %v1118
      %v1120 = vcombine.low %v744, %v748
      %v1122 = vunpack.c.l.s4 1983009808
      %v1123 = vunpack.c.0.s8 %v1122
      %v1124 = vlaneseq
      %v1125 = vshrl.u32 %v1124, 7
      %v1126 = vsub.s32 %v1123, %v1125
      %v1127 = vrot.slane %v1120, %v1126
      %v1128 = vcombine.low %v1103, %v1111
      %v1130 = vunpack.c.l.s4 1934713408
      %v1131 = vunpack.c.0.s8 %v1130
      %v1132 = vlaneseq
      %v1133 = vshrl.u32 %v1132, 7
      %v1134 = vsub.s32 %v1131, %v1133
      %v1135 = vrot.slane %v1128, %v1134
      %v1136 = vcombine.low %v1119, %v1127
      %v1138 = vunpack.c.l.s4 1934713408
      %v1139 = vunpack.c.0.s8 %v1138
      %v1140 = vlaneseq
      %v1141 = vshrl.u32 %v1140, 7
      %v1142 = vsub.s32 %v1139, %v1141
      %v1143 = vrot.slane %v1136, %v1142
      %v1144 = vcombine.low %v1135, %v1143
      %v1145 = vcombine.high %v1135, %v1143
      %v1146 = vcombine.low %v735, %v739
      %v1148 = vunpack.c.l.s4 1983009808
      %v1149 = vunpack.c.0.s8 %v1148
      %v1150 = vlaneseq
      %v1151 = vshrl.u32 %v1150, 7
      %v1152 = vsub.s32 %v1149, %v1151
      %v1153 = vrot.slane %v1146, %v1152
      %v1154 = vcombine.low %v737, %v741
      %v1156 = vunpack.c.l.s4 1983009808
      %v1157 = vunpack.c.0.s8 %v1156
      %v1158 = vlaneseq
      %v1159 = vshrl.u32 %v1158, 7
      %v1160 = vsub.s32 %v1157, %v1159
      %v1161 = vrot.slane %v1154, %v1160
      %v1162 = vcombine.low %v743, %v747
      %v1164 = vunpack.c.l.s4 1983009808
      %v1165 = vunpack.c.0.s8 %v1164
      %v1166 = vlaneseq
      %v1167 = vshrl.u32 %v1166, 7
      %v1168 = vsub.s32 %v1165, %v1167
      %v1169 = vrot.slane %v1162, %v1168
      %v1170 = vcombine.low %v745, %v749
      %v1172 = vunpack.c.l.s4 1983009808
      %v1173 = vunpack.c.0.s8 %v1172
      %v1174 = vlaneseq
      %v1175 = vshrl.u32 %v1174, 7
      %v1176 = vsub.s32 %v1173, %v1175
      %v1177 = vrot.slane %v1170, %v1176
      %v1178 = vcombine.low %v1153, %v1161
      %v1180 = vunpack.c.l.s4 1934713408
      %v1181 = vunpack.c.0.s8 %v1180
      %v1182 = vlaneseq
      %v1183 = vshrl.u32 %v1182, 7
      %v1184 = vsub.s32 %v1181, %v1183
      %v1185 = vrot.slane %v1178, %v1184
      %v1186 = vcombine.low %v1169, %v1177
      %v1188 = vunpack.c.l.s4 1934713408
      %v1189 = vunpack.c.0.s8 %v1188
      %v1190 = vlaneseq
      %v1191 = vshrl.u32 %v1190, 7
      %v1192 = vsub.s32 %v1189, %v1191
      %v1193 = vrot.slane %v1186, %v1192
      %v1194 = vcombine.low %v1185, %v1193
      %v1195 = vcombine.high %v1185, %v1193
      %v1198 = vpack.i.b16 %v1194, %v1144
      %v1199 = vshrl.u32 %v1144, 16
      %v1200 = vshrl.u32 %v1194, 16
      %v1201 = vpack.i.b16 %v1200, %v1199
      %v1204 = vpack.i.b16 %v1195, %v1145
      %v1205 = vshrl.u32 %v1145, 16
      %v1206 = vshrl.u32 %v1195, 16
      %v1207 = vpack.i.b16 %v1206, %v1205
      %1208 = vxpose.xlu0.c.b16.start [1/8] %v906, 128
      %1209 = vxpose.xlu0.c.b16.cont [2/8] 0, 128
      %1210 = vxpose.xlu0.c.b16.cont [3/8] 0, 128
      %1211 = vxpose.xlu0.c.b16.cont [4/8] 0, 128
      %1212 = vxpose.xlu0.c.b16.cont [5/8] 0, 128
      %1213 = vxpose.xlu0.c.b16.cont [6/8] 0, 128
      %1214 = vxpose.xlu0.c.b16.cont [7/8] 0, 128
      %1215 = vxpose.xlu0.c.b16.end [8/8] 0, 128
      %v1216 = vpop.trf.xlu0
      %v1217 = vpop.trf.xlu0
      %v1218 = vpop.trf.xlu0
      %v1219 = vpop.trf.xlu0
      %v1220 = vpop.trf.xlu0
      %v1221 = vpop.trf.xlu0
      %v1222 = vpop.trf.xlu0
      %v1223 = vpop.trf.xlu0
      %1224 = vxpose.xlu0.c.b16.start [1/8] %v907, 128
      %1225 = vxpose.xlu0.c.b16.cont [2/8] 0, 128
      %1226 = vxpose.xlu0.c.b16.cont [3/8] 0, 128
      %1227 = vxpose.xlu0.c.b16.cont [4/8] 0, 128
      %1228 = vxpose.xlu0.c.b16.cont [5/8] 0, 128
      %1229 = vxpose.xlu0.c.b16.cont [6/8] 0, 128
      %1230 = vxpose.xlu0.c.b16.cont [7/8] 0, 128
      %1231 = vxpose.xlu0.c.b16.end [8/8] 0, 128
      %v1232 = vpop.trf.xlu0
      %v1233 = vpop.trf.xlu0
      %v1234 = vpop.trf.xlu0
      %v1235 = vpop.trf.xlu0
      %v1236 = vpop.trf.xlu0
      %v1237 = vpop.trf.xlu0
      %v1238 = vpop.trf.xlu0
      %v1239 = vpop.trf.xlu0
      %1240 = vxpose.xlu0.c.b16.start [1/8] %v908, 128
      %1241 = vxpose.xlu0.c.b16.cont [2/8] 0, 128
      %1242 = vxpose.xlu0.c.b16.cont [3/8] 0, 128
      %1243 = vxpose.xlu0.c.b16.cont [4/8] 0, 128
      %1244 = vxpose.xlu0.c.b16.cont [5/8] 0, 128
      %1245 = vxpose.xlu0.c.b16.cont [6/8] 0, 128
      %1246 = vxpose.xlu0.c.b16.cont [7/8] 0, 128
      %1247 = vxpose.xlu0.c.b16.end [8/8] 0, 128
      %v1248 = vpop.trf.xlu0
      %v1249 = vpop.trf.xlu0
      %v1250 = vpop.trf.xlu0
      %v1251 = vpop.trf.xlu0
      %v1252 = vpop.trf.xlu0
      %v1253 = vpop.trf.xlu0
      %v1254 = vpop.trf.xlu0
      %v1255 = vpop.trf.xlu0
      %1256 = vxpose.xlu0.c.b16.start [1/8] %v909, 128
      %1257 = vxpose.xlu0.c.b16.cont [2/8] 0, 128
      %1258 = vxpose.xlu0.c.b16.cont [3/8] 0, 128
      %1259 = vxpose.xlu0.c.b16.cont [4/8] 0, 128
      %1260 = vxpose.xlu0.c.b16.cont [5/8] 0, 128
      %1261 = vxpose.xlu0.c.b16.cont [6/8] 0, 128
      %1262 = vxpose.xlu0.c.b16.cont [7/8] 0, 128
      %1263 = vxpose.xlu0.c.b16.end [8/8] 0, 128
      %v1264 = vpop.trf.xlu0
      %v1265 = vpop.trf.xlu0
      %v1266 = vpop.trf.xlu0
      %v1267 = vpop.trf.xlu0
      %v1268 = vpop.trf.xlu0
      %v1269 = vpop.trf.xlu0
      %v1270 = vpop.trf.xlu0
      %v1271 = vpop.trf.xlu0
      %1272 = vxpose.xlu0.c.b16.start [1/8] %v910, 128
      %1273 = vxpose.xlu0.c.b16.cont [2/8] 0, 128
      %1274 = vxpose.xlu0.c.b16.cont [3/8] 0, 128
      %1275 = vxpose.xlu0.c.b16.cont [4/8] 0, 128
      %1276 = vxpose.xlu0.c.b16.cont [5/8] 0, 128
      %1277 = vxpose.xlu0.c.b16.cont [6/8] 0, 128
      %1278 = vxpose.xlu0.c.b16.cont [7/8] 0, 128
      %1279 = vxpose.xlu0.c.b16.end [8/8] 0, 128
      %v1280 = vpop.trf.xlu0
      %v1281 = vpop.trf.xlu0
      %v1282 = vpop.trf.xlu0
      %v1283 = vpop.trf.xlu0
      %v1284 = vpop.trf.xlu0
      %v1285 = vpop.trf.xlu0
      %v1286 = vpop.trf.xlu0
      %v1287 = vpop.trf.xlu0
      %1288 = vxpose.xlu0.c.b16.start [1/8] %v911, 128
      %1289 = vxpose.xlu0.c.b16.cont [2/8] 0, 128
      %1290 = vxpose.xlu0.c.b16.cont [3/8] 0, 128
      %1291 = vxpose.xlu0.c.b16.cont [4/8] 0, 128
      %1292 = vxpose.xlu0.c.b16.cont [5/8] 0, 128
      %1293 = vxpose.xlu0.c.b16.cont [6/8] 0, 128
      %1294 = vxpose.xlu0.c.b16.cont [7/8] 0, 128
      %1295 = vxpose.xlu0.c.b16.end [8/8] 0, 128
      %v1296 = vpop.trf.xlu0
      %v1297 = vpop.trf.xlu0
      %v1298 = vpop.trf.xlu0
      %v1299 = vpop.trf.xlu0
      %v1300 = vpop.trf.xlu0
      %v1301 = vpop.trf.xlu0
      %v1302 = vpop.trf.xlu0
      %v1303 = vpop.trf.xlu0
      %1304 = vxpose.xlu0.c.b16.start [1/8] %v912, 128
      %1305 = vxpose.xlu0.c.b16.cont [2/8] 0, 128
      %1306 = vxpose.xlu0.c.b16.cont [3/8] 0, 128
      %1307 = vxpose.xlu0.c.b16.cont [4/8] 0, 128
      %1308 = vxpose.xlu0.c.b16.cont [5/8] 0, 128
      %1309 = vxpose.xlu0.c.b16.cont [6/8] 0, 128
      %1310 = vxpose.xlu0.c.b16.cont [7/8] 0, 128
      %1311 = vxpose.xlu0.c.b16.end [8/8] 0, 128
      %v1312 = vpop.trf.xlu0
      %v1313 = vpop.trf.xlu0
      %v1314 = vpop.trf.xlu0
      %v1315 = vpop.trf.xlu0
      %v1316 = vpop.trf.xlu0
      %v1317 = vpop.trf.xlu0
      %v1318 = vpop.trf.xlu0
      %v1319 = vpop.trf.xlu0
      %1320 = vxpose.xlu0.c.b16.start [1/8] %v913, 128
      %1321 = vxpose.xlu0.c.b16.cont [2/8] 0, 128
      %1322 = vxpose.xlu0.c.b16.cont [3/8] 0, 128
      %1323 = vxpose.xlu0.c.b16.cont [4/8] 0, 128
      %1324 = vxpose.xlu0.c.b16.cont [5/8] 0, 128
      %1325 = vxpose.xlu0.c.b16.cont [6/8] 0, 128
      %1326 = vxpose.xlu0.c.b16.cont [7/8] 0, 128
      %1327 = vxpose.xlu0.c.b16.end [8/8] 0, 128
      %v1328 = vpop.trf.xlu0
      %v1329 = vpop.trf.xlu0
      %v1330 = vpop.trf.xlu0
      %v1331 = vpop.trf.xlu0
      %v1332 = vpop.trf.xlu0
      %v1333 = vpop.trf.xlu0
      %v1334 = vpop.trf.xlu0
      %v1335 = vpop.trf.xlu0
      %1336 = vxpose.xlu0.c.b16.start [1/8] %v914, 128
      %1337 = vxpose.xlu0.c.b16.cont [2/8] 0, 128
      %1338 = vxpose.xlu0.c.b16.cont [3/8] 0, 128
      %1339 = vxpose.xlu0.c.b16.cont [4/8] 0, 128
      %1340 = vxpose.xlu0.c.b16.cont [5/8] 0, 128
      %1341 = vxpose.xlu0.c.b16.cont [6/8] 0, 128
      %1342 = vxpose.xlu0.c.b16.cont [7/8] 0, 128
      %1343 = vxpose.xlu0.c.b16.end [8/8] 0, 128
      %v1344 = vpop.trf.xlu0
      %v1345 = vpop.trf.xlu0
      %v1346 = vpop.trf.xlu0
      %v1347 = vpop.trf.xlu0
      %v1348 = vpop.trf.xlu0
      %v1349 = vpop.trf.xlu0
      %v1350 = vpop.trf.xlu0
      %v1351 = vpop.trf.xlu0
      %1352 = vxpose.xlu0.c.b16.start [1/8] %v915, 128
      %1353 = vxpose.xlu0.c.b16.cont [2/8] 0, 128
      %1354 = vxpose.xlu0.c.b16.cont [3/8] 0, 128
      %1355 = vxpose.xlu0.c.b16.cont [4/8] 0, 128
      %1356 = vxpose.xlu0.c.b16.cont [5/8] 0, 128
      %1357 = vxpose.xlu0.c.b16.cont [6/8] 0, 128
      %1358 = vxpose.xlu0.c.b16.cont [7/8] 0, 128
      %1359 = vxpose.xlu0.c.b16.end [8/8] 0, 128
      %v1360 = vpop.trf.xlu0
      %v1361 = vpop.trf.xlu0
      %v1362 = vpop.trf.xlu0
      %v1363 = vpop.trf.xlu0
      %v1364 = vpop.trf.xlu0
      %v1365 = vpop.trf.xlu0
      %v1366 = vpop.trf.xlu0
      %v1367 = vpop.trf.xlu0
      %1368 = vxpose.xlu0.c.b16.start [1/8] %v916, 128
      %1369 = vxpose.xlu0.c.b16.cont [2/8] 0, 128
      %1370 = vxpose.xlu0.c.b16.cont [3/8] 0, 128
      %1371 = vxpose.xlu0.c.b16.cont [4/8] 0, 128
      %1372 = vxpose.xlu0.c.b16.cont [5/8] 0, 128
      %1373 = vxpose.xlu0.c.b16.cont [6/8] 0, 128
      %1374 = vxpose.xlu0.c.b16.cont [7/8] 0, 128
      %1375 = vxpose.xlu0.c.b16.end [8/8] 0, 128
      %v1376 = vpop.trf.xlu0
      %v1377 = vpop.trf.xlu0
      %v1378 = vpop.trf.xlu0
      %v1379 = vpop.trf.xlu0
      %v1380 = vpop.trf.xlu0
      %v1381 = vpop.trf.xlu0
      %v1382 = vpop.trf.xlu0
      %v1383 = vpop.trf.xlu0
      %1384 = vxpose.xlu0.c.b16.start [1/8] %v917, 128
      %1385 = vxpose.xlu0.c.b16.cont [2/8] 0, 128
      %1386 = vxpose.xlu0.c.b16.cont [3/8] 0, 128
      %1387 = vxpose.xlu0.c.b16.cont [4/8] 0, 128
      %1388 = vxpose.xlu0.c.b16.cont [5/8] 0, 128
      %1389 = vxpose.xlu0.c.b16.cont [6/8] 0, 128
      %1390 = vxpose.xlu0.c.b16.cont [7/8] 0, 128
      %1391 = vxpose.xlu0.c.b16.end [8/8] 0, 128
      %v1392 = vpop.trf.xlu0
      %v1393 = vpop.trf.xlu0
      %v1394 = vpop.trf.xlu0
      %v1395 = vpop.trf.xlu0
      %v1396 = vpop.trf.xlu0
      %v1397 = vpop.trf.xlu0
      %v1398 = vpop.trf.xlu0
      %v1399 = vpop.trf.xlu0
      %1400 = vxpose.xlu0.c.b16.start [1/8] %v918, 128
      %1401 = vxpose.xlu0.c.b16.cont [2/8] 0, 128
      %1402 = vxpose.xlu0.c.b16.cont [3/8] 0, 128
      %1403 = vxpose.xlu0.c.b16.cont [4/8] 0, 128
      %1404 = vxpose.xlu0.c.b16.cont [5/8] 0, 128
      %1405 = vxpose.xlu0.c.b16.cont [6/8] 0, 128
      %1406 = vxpose.xlu0.c.b16.cont [7/8] 0, 128
      %1407 = vxpose.xlu0.c.b16.end [8/8] 0, 128
      %v1408 = vpop.trf.xlu0
      %v1409 = vpop.trf.xlu0
      %v1410 = vpop.trf.xlu0
      %v1411 = vpop.trf.xlu0
      %v1412 = vpop.trf.xlu0
      %v1413 = vpop.trf.xlu0
      %v1414 = vpop.trf.xlu0
      %v1415 = vpop.trf.xlu0
      %1416 = vxpose.xlu0.c.b16.start [1/8] %v919, 128
      %1417 = vxpose.xlu0.c.b16.cont [2/8] 0, 128
      %1418 = vxpose.xlu0.c.b16.cont [3/8] 0, 128
      %1419 = vxpose.xlu0.c.b16.cont [4/8] 0, 128
      %1420 = vxpose.xlu0.c.b16.cont [5/8] 0, 128
      %1421 = vxpose.xlu0.c.b16.cont [6/8] 0, 128
      %1422 = vxpose.xlu0.c.b16.cont [7/8] 0, 128
      %1423 = vxpose.xlu0.c.b16.end [8/8] 0, 128
      %v1424 = vpop.trf.xlu0
      %v1425 = vpop.trf.xlu0
      %v1426 = vpop.trf.xlu0
      %v1427 = vpop.trf.xlu0
      %v1428 = vpop.trf.xlu0
      %v1429 = vpop.trf.xlu0
      %v1430 = vpop.trf.xlu0
      %v1431 = vpop.trf.xlu0
      %1432 = vxpose.xlu0.c.b16.start [1/8] %v920, 128
      %1433 = vxpose.xlu0.c.b16.cont [2/8] 0, 128
      %1434 = vxpose.xlu0.c.b16.cont [3/8] 0, 128
      %1435 = vxpose.xlu0.c.b16.cont [4/8] 0, 128
      %1436 = vxpose.xlu0.c.b16.cont [5/8] 0, 128
      %1437 = vxpose.xlu0.c.b16.cont [6/8] 0, 128
      %1438 = vxpose.xlu0.c.b16.cont [7/8] 0, 128
      %1439 = vxpose.xlu0.c.b16.end [8/8] 0, 128
      %v1440 = vpop.trf.xlu0
      %v1441 = vpop.trf.xlu0
      %v1442 = vpop.trf.xlu0
      %v1443 = vpop.trf.xlu0
      %v1444 = vpop.trf.xlu0
      %v1445 = vpop.trf.xlu0
      %v1446 = vpop.trf.xlu0
      %v1447 = vpop.trf.xlu0
      %1448 = vxpose.xlu0.c.b16.start [1/8] %v921, 128
      %1449 = vxpose.xlu0.c.b16.cont [2/8] 0, 128
      %1450 = vxpose.xlu0.c.b16.cont [3/8] 0, 128
      %1451 = vxpose.xlu0.c.b16.cont [4/8] 0, 128
      %1452 = vxpose.xlu0.c.b16.cont [5/8] 0, 128
      %1453 = vxpose.xlu0.c.b16.cont [6/8] 0, 128
      %1454 = vxpose.xlu0.c.b16.cont [7/8] 0, 128
      %1455 = vxpose.xlu0.c.b16.end [8/8] 0, 128
      %v1456 = vpop.trf.xlu0
      %v1457 = vpop.trf.xlu0
      %v1458 = vpop.trf.xlu0
      %v1459 = vpop.trf.xlu0
      %v1460 = vpop.trf.xlu0
      %v1461 = vpop.trf.xlu0
      %v1462 = vpop.trf.xlu0
      %v1463 = vpop.trf.xlu0
      %v1464 = vcombine.low %v1216, %v1280
      %v1465 = vcombine.high %v1216, %v1280
      %v1467 = vunpack.c.l.s4 1983009808
      %v1468 = vunpack.c.0.s8 %v1467
      %v1469 = vlaneseq
      %v1470 = vshrl.u32 %v1469, 7
      %v1471 = vsub.s32 %v1468, %v1470
      %v1472 = vrot.slane %v1464, %v1471
      %v1474 = vunpack.c.l.s4 1983009808
      %v1475 = vunpack.c.0.s8 %v1474
      %v1476 = vlaneseq
      %v1477 = vshrl.u32 %v1476, 7
      %v1478 = vsub.s32 %v1475, %v1477
      %v1479 = vrot.slane %v1465, %v1478
      %v1480 = vcombine.low %v1248, %v1312
      %v1481 = vcombine.high %v1248, %v1312
      %v1483 = vunpack.c.l.s4 1983009808
      %v1484 = vunpack.c.0.s8 %v1483
      %v1485 = vlaneseq
      %v1486 = vshrl.u32 %v1485, 7
      %v1487 = vsub.s32 %v1484, %v1486
      %v1488 = vrot.slane %v1480, %v1487
      %v1490 = vunpack.c.l.s4 1983009808
      %v1491 = vunpack.c.0.s8 %v1490
      %v1492 = vlaneseq
      %v1493 = vshrl.u32 %v1492, 7
      %v1494 = vsub.s32 %v1491, %v1493
      %v1495 = vrot.slane %v1481, %v1494
      %v1496 = vcombine.low %v1344, %v1408
      %v1497 = vcombine.high %v1344, %v1408
      %v1499 = vunpack.c.l.s4 1983009808
      %v1500 = vunpack.c.0.s8 %v1499
      %v1501 = vlaneseq
      %v1502 = vshrl.u32 %v1501, 7
      %v1503 = vsub.s32 %v1500, %v1502
      %v1504 = vrot.slane %v1496, %v1503
      %v1506 = vunpack.c.l.s4 1983009808
      %v1507 = vunpack.c.0.s8 %v1506
      %v1508 = vlaneseq
      %v1509 = vshrl.u32 %v1508, 7
      %v1510 = vsub.s32 %v1507, %v1509
      %v1511 = vrot.slane %v1497, %v1510
      %v1512 = vcombine.low %v1376, %v1440
      %v1513 = vcombine.high %v1376, %v1440
      %v1515 = vunpack.c.l.s4 1983009808
      %v1516 = vunpack.c.0.s8 %v1515
      %v1517 = vlaneseq
      %v1518 = vshrl.u32 %v1517, 7
      %v1519 = vsub.s32 %v1516, %v1518
      %v1520 = vrot.slane %v1512, %v1519
      %v1522 = vunpack.c.l.s4 1983009808
      %v1523 = vunpack.c.0.s8 %v1522
      %v1524 = vlaneseq
      %v1525 = vshrl.u32 %v1524, 7
      %v1526 = vsub.s32 %v1523, %v1525
      %v1527 = vrot.slane %v1513, %v1526
      %v1528 = vcombine.low %v1472, %v1488
      %v1529 = vcombine.high %v1472, %v1488
      %v1531 = vunpack.c.l.s4 1934713408
      %v1532 = vunpack.c.0.s8 %v1531
      %v1533 = vlaneseq
      %v1534 = vshrl.u32 %v1533, 7
      %v1535 = vsub.s32 %v1532, %v1534
      %v1536 = vrot.slane %v1528, %v1535
      %v1538 = vunpack.c.l.s4 1934713408
      %v1539 = vunpack.c.0.s8 %v1538
      %v1540 = vlaneseq
      %v1541 = vshrl.u32 %v1540, 7
      %v1542 = vsub.s32 %v1539, %v1541
      %v1543 = vrot.slane %v1529, %v1542
      %v1544 = vcombine.low %v1479, %v1495
      %v1545 = vcombine.high %v1479, %v1495
      %v1547 = vunpack.c.l.s4 1934713408
      %v1548 = vunpack.c.0.s8 %v1547
      %v1549 = vlaneseq
      %v1550 = vshrl.u32 %v1549, 7
      %v1551 = vsub.s32 %v1548, %v1550
      %v1552 = vrot.slane %v1544, %v1551
      %v1554 = vunpack.c.l.s4 1934713408
      %v1555 = vunpack.c.0.s8 %v1554
      %v1556 = vlaneseq
      %v1557 = vshrl.u32 %v1556, 7
      %v1558 = vsub.s32 %v1555, %v1557
      %v1559 = vrot.slane %v1545, %v1558
      %v1560 = vcombine.low %v1504, %v1520
      %v1561 = vcombine.high %v1504, %v1520
      %v1563 = vunpack.c.l.s4 1934713408
      %v1564 = vunpack.c.0.s8 %v1563
      %v1565 = vlaneseq
      %v1566 = vshrl.u32 %v1565, 7
      %v1567 = vsub.s32 %v1564, %v1566
      %v1568 = vrot.slane %v1560, %v1567
      %v1570 = vunpack.c.l.s4 1934713408
      %v1571 = vunpack.c.0.s8 %v1570
      %v1572 = vlaneseq
      %v1573 = vshrl.u32 %v1572, 7
      %v1574 = vsub.s32 %v1571, %v1573
      %v1575 = vrot.slane %v1561, %v1574
      %v1576 = vcombine.low %v1511, %v1527
      %v1577 = vcombine.high %v1511, %v1527
      %v1579 = vunpack.c.l.s4 1934713408
      %v1580 = vunpack.c.0.s8 %v1579
      %v1581 = vlaneseq
      %v1582 = vshrl.u32 %v1581, 7
      %v1583 = vsub.s32 %v1580, %v1582
      %v1584 = vrot.slane %v1576, %v1583
      %v1586 = vunpack.c.l.s4 1934713408
      %v1587 = vunpack.c.0.s8 %v1586
      %v1588 = vlaneseq
      %v1589 = vshrl.u32 %v1588, 7
      %v1590 = vsub.s32 %v1587, %v1589
      %v1591 = vrot.slane %v1577, %v1590
      %v1592 = vcombine.low %v1536, %v1568
      %v1593 = vcombine.high %v1536, %v1568
      %v1594 = vcombine.low %v1543, %v1575
      %v1595 = vcombine.high %v1543, %v1575
      %v1596 = vcombine.low %v1552, %v1584
      %v1597 = vcombine.high %v1552, %v1584
      %v1598 = vcombine.low %v1559, %v1591
      %v1599 = vcombine.high %v1559, %v1591
      %v1600 = vcombine.low %v1232, %v1296
      %v1601 = vcombine.high %v1232, %v1296
      %v1603 = vunpack.c.l.s4 1983009808
      %v1604 = vunpack.c.0.s8 %v1603
      %v1605 = vlaneseq
      %v1606 = vshrl.u32 %v1605, 7
      %v1607 = vsub.s32 %v1604, %v1606
      %v1608 = vrot.slane %v1600, %v1607
      %v1610 = vunpack.c.l.s4 1983009808
      %v1611 = vunpack.c.0.s8 %v1610
      %v1612 = vlaneseq
      %v1613 = vshrl.u32 %v1612, 7
      %v1614 = vsub.s32 %v1611, %v1613
      %v1615 = vrot.slane %v1601, %v1614
      %v1616 = vcombine.low %v1264, %v1328
      %v1617 = vcombine.high %v1264, %v1328
      %v1619 = vunpack.c.l.s4 1983009808
      %v1620 = vunpack.c.0.s8 %v1619
      %v1621 = vlaneseq
      %v1622 = vshrl.u32 %v1621, 7
      %v1623 = vsub.s32 %v1620, %v1622
      %v1624 = vrot.slane %v1616, %v1623
      %v1626 = vunpack.c.l.s4 1983009808
      %v1627 = vunpack.c.0.s8 %v1626
      %v1628 = vlaneseq
      %v1629 = vshrl.u32 %v1628, 7
      %v1630 = vsub.s32 %v1627, %v1629
      %v1631 = vrot.slane %v1617, %v1630
      %v1632 = vcombine.low %v1360, %v1424
      %v1633 = vcombine.high %v1360, %v1424
      %v1635 = vunpack.c.l.s4 1983009808
      %v1636 = vunpack.c.0.s8 %v1635
      %v1637 = vlaneseq
      %v1638 = vshrl.u32 %v1637, 7
      %v1639 = vsub.s32 %v1636, %v1638
      %v1640 = vrot.slane %v1632, %v1639
      %v1642 = vunpack.c.l.s4 1983009808
      %v1643 = vunpack.c.0.s8 %v1642
      %v1644 = vlaneseq
      %v1645 = vshrl.u32 %v1644, 7
      %v1646 = vsub.s32 %v1643, %v1645
      %v1647 = vrot.slane %v1633, %v1646
      %v1648 = vcombine.low %v1392, %v1456
      %v1649 = vcombine.high %v1392, %v1456
      %v1651 = vunpack.c.l.s4 1983009808
      %v1652 = vunpack.c.0.s8 %v1651
      %v1653 = vlaneseq
      %v1654 = vshrl.u32 %v1653, 7
      %v1655 = vsub.s32 %v1652, %v1654
      %v1656 = vrot.slane %v1648, %v1655
      %v1658 = vunpack.c.l.s4 1983009808
      %v1659 = vunpack.c.0.s8 %v1658
      %v1660 = vlaneseq
      %v1661 = vshrl.u32 %v1660, 7
      %v1662 = vsub.s32 %v1659, %v1661
      %v1663 = vrot.slane %v1649, %v1662
      %v1664 = vcombine.low %v1608, %v1624
      %v1665 = vcombine.high %v1608, %v1624
      %v1667 = vunpack.c.l.s4 1934713408
      %v1668 = vunpack.c.0.s8 %v1667
      %v1669 = vlaneseq
      %v1670 = vshrl.u32 %v1669, 7
      %v1671 = vsub.s32 %v1668, %v1670
      %v1672 = vrot.slane %v1664, %v1671
      %v1674 = vunpack.c.l.s4 1934713408
      %v1675 = vunpack.c.0.s8 %v1674
      %v1676 = vlaneseq
      %v1677 = vshrl.u32 %v1676, 7
      %v1678 = vsub.s32 %v1675, %v1677
      %v1679 = vrot.slane %v1665, %v1678
      %v1680 = vcombine.low %v1615, %v1631
      %v1681 = vcombine.high %v1615, %v1631
      %v1683 = vunpack.c.l.s4 1934713408
      %v1684 = vunpack.c.0.s8 %v1683
      %v1685 = vlaneseq
      %v1686 = vshrl.u32 %v1685, 7
      %v1687 = vsub.s32 %v1684, %v1686
      %v1688 = vrot.slane %v1680, %v1687
      %v1690 = vunpack.c.l.s4 1934713408
      %v1691 = vunpack.c.0.s8 %v1690
      %v1692 = vlaneseq
      %v1693 = vshrl.u32 %v1692, 7
      %v1694 = vsub.s32 %v1691, %v1693
      %v1695 = vrot.slane %v1681, %v1694
      %v1696 = vcombine.low %v1640, %v1656
      %v1697 = vcombine.high %v1640, %v1656
      %v1699 = vunpack.c.l.s4 1934713408
      %v1700 = vunpack.c.0.s8 %v1699
      %v1701 = vlaneseq
      %v1702 = vshrl.u32 %v1701, 7
      %v1703 = vsub.s32 %v1700, %v1702
      %v1704 = vrot.slane %v1696, %v1703
      %v1706 = vunpack.c.l.s4 1934713408
      %v1707 = vunpack.c.0.s8 %v1706
      %v1708 = vlaneseq
      %v1709 = vshrl.u32 %v1708, 7
      %v1710 = vsub.s32 %v1707, %v1709
      %v1711 = vrot.slane %v1697, %v1710
      %v1712 = vcombine.low %v1647, %v1663
      %v1713 = vcombine.high %v1647, %v1663
      %v1715 = vunpack.c.l.s4 1934713408
      %v1716 = vunpack.c.0.s8 %v1715
      %v1717 = vlaneseq
      %v1718 = vshrl.u32 %v1717, 7
      %v1719 = vsub.s32 %v1716, %v1718
      %v1720 = vrot.slane %v1712, %v1719
      %v1722 = vunpack.c.l.s4 1934713408
      %v1723 = vunpack.c.0.s8 %v1722
      %v1724 = vlaneseq
      %v1725 = vshrl.u32 %v1724, 7
      %v1726 = vsub.s32 %v1723, %v1725
      %v1727 = vrot.slane %v1713, %v1726
      %v1728 = vcombine.low %v1672, %v1704
      %v1729 = vcombine.high %v1672, %v1704
      %v1730 = vcombine.low %v1679, %v1711
      %v1731 = vcombine.high %v1679, %v1711
      %v1732 = vcombine.low %v1688, %v1720
      %v1733 = vcombine.high %v1688, %v1720
      %v1734 = vcombine.low %v1695, %v1727
      %v1735 = vcombine.high %v1695, %v1727
      %v1736 = vcombine.low %v1217, %v1281
      %v1737 = vcombine.high %v1217, %v1281
      %v1739 = vunpack.c.l.s4 1983009808
      %v1740 = vunpack.c.0.s8 %v1739
      %v1741 = vlaneseq
      %v1742 = vshrl.u32 %v1741, 7
      %v1743 = vsub.s32 %v1740, %v1742
      %v1744 = vrot.slane %v1736, %v1743
      %v1746 = vunpack.c.l.s4 1983009808
      %v1747 = vunpack.c.0.s8 %v1746
      %v1748 = vlaneseq
      %v1749 = vshrl.u32 %v1748, 7
      %v1750 = vsub.s32 %v1747, %v1749
      %v1751 = vrot.slane %v1737, %v1750
      %v1752 = vcombine.low %v1249, %v1313
      %v1753 = vcombine.high %v1249, %v1313
      %v1755 = vunpack.c.l.s4 1983009808
      %v1756 = vunpack.c.0.s8 %v1755
      %v1757 = vlaneseq
      %v1758 = vshrl.u32 %v1757, 7
      %v1759 = vsub.s32 %v1756, %v1758
      %v1760 = vrot.slane %v1752, %v1759
      %v1762 = vunpack.c.l.s4 1983009808
      %v1763 = vunpack.c.0.s8 %v1762
      %v1764 = vlaneseq
      %v1765 = vshrl.u32 %v1764, 7
      %v1766 = vsub.s32 %v1763, %v1765
      %v1767 = vrot.slane %v1753, %v1766
      %v1768 = vcombine.low %v1345, %v1409
      %v1769 = vcombine.high %v1345, %v1409
      %v1771 = vunpack.c.l.s4 1983009808
      %v1772 = vunpack.c.0.s8 %v1771
      %v1773 = vlaneseq
      %v1774 = vshrl.u32 %v1773, 7
      %v1775 = vsub.s32 %v1772, %v1774
      %v1776 = vrot.slane %v1768, %v1775
      %v1778 = vunpack.c.l.s4 1983009808
      %v1779 = vunpack.c.0.s8 %v1778
      %v1780 = vlaneseq
      %v1781 = vshrl.u32 %v1780, 7
      %v1782 = vsub.s32 %v1779, %v1781
      %v1783 = vrot.slane %v1769, %v1782
      %v1784 = vcombine.low %v1377, %v1441
      %v1785 = vcombine.high %v1377, %v1441
      %v1787 = vunpack.c.l.s4 1983009808
      %v1788 = vunpack.c.0.s8 %v1787
      %v1789 = vlaneseq
      %v1790 = vshrl.u32 %v1789, 7
      %v1791 = vsub.s32 %v1788, %v1790
      %v1792 = vrot.slane %v1784, %v1791
      %v1794 = vunpack.c.l.s4 1983009808
      %v1795 = vunpack.c.0.s8 %v1794
      %v1796 = vlaneseq
      %v1797 = vshrl.u32 %v1796, 7
      %v1798 = vsub.s32 %v1795, %v1797
      %v1799 = vrot.slane %v1785, %v1798
      %v1800 = vcombine.low %v1744, %v1760
      %v1801 = vcombine.high %v1744, %v1760
      %v1803 = vunpack.c.l.s4 1934713408
      %v1804 = vunpack.c.0.s8 %v1803
      %v1805 = vlaneseq
      %v1806 = vshrl.u32 %v1805, 7
      %v1807 = vsub.s32 %v1804, %v1806
      %v1808 = vrot.slane %v1800, %v1807
      %v1810 = vunpack.c.l.s4 1934713408
      %v1811 = vunpack.c.0.s8 %v1810
      %v1812 = vlaneseq
      %v1813 = vshrl.u32 %v1812, 7
      %v1814 = vsub.s32 %v1811, %v1813
      %v1815 = vrot.slane %v1801, %v1814
      %v1816 = vcombine.low %v1751, %v1767
      %v1817 = vcombine.high %v1751, %v1767
      %v1819 = vunpack.c.l.s4 1934713408
      %v1820 = vunpack.c.0.s8 %v1819
      %v1821 = vlaneseq
      %v1822 = vshrl.u32 %v1821, 7
      %v1823 = vsub.s32 %v1820, %v1822
      %v1824 = vrot.slane %v1816, %v1823
      %v1826 = vunpack.c.l.s4 1934713408
      %v1827 = vunpack.c.0.s8 %v1826
      %v1828 = vlaneseq
      %v1829 = vshrl.u32 %v1828, 7
      %v1830 = vsub.s32 %v1827, %v1829
      %v1831 = vrot.slane %v1817, %v1830
      %v1832 = vcombine.low %v1776, %v1792
      %v1833 = vcombine.high %v1776, %v1792
      %v1835 = vunpack.c.l.s4 1934713408
      %v1836 = vunpack.c.0.s8 %v1835
      %v1837 = vlaneseq
      %v1838 = vshrl.u32 %v1837, 7
      %v1839 = vsub.s32 %v1836, %v1838
      %v1840 = vrot.slane %v1832, %v1839
      %v1842 = vunpack.c.l.s4 1934713408
      %v1843 = vunpack.c.0.s8 %v1842
      %v1844 = vlaneseq
      %v1845 = vshrl.u32 %v1844, 7
      %v1846 = vsub.s32 %v1843, %v1845
      %v1847 = vrot.slane %v1833, %v1846
      %v1848 = vcombine.low %v1783, %v1799
      %v1849 = vcombine.high %v1783, %v1799
      %v1851 = vunpack.c.l.s4 1934713408
      %v1852 = vunpack.c.0.s8 %v1851
      %v1853 = vlaneseq
      %v1854 = vshrl.u32 %v1853, 7
      %v1855 = vsub.s32 %v1852, %v1854
      %v1856 = vrot.slane %v1848, %v1855
      %v1858 = vunpack.c.l.s4 1934713408
      %v1859 = vunpack.c.0.s8 %v1858
      %v1860 = vlaneseq
      %v1861 = vshrl.u32 %v1860, 7
      %v1862 = vsub.s32 %v1859, %v1861
      %v1863 = vrot.slane %v1849, %v1862
      %v1864 = vcombine.low %v1808, %v1840
      %v1865 = vcombine.high %v1808, %v1840
      %v1866 = vcombine.low %v1815, %v1847
      %v1867 = vcombine.high %v1815, %v1847
      %v1868 = vcombine.low %v1824, %v1856
      %v1869 = vcombine.high %v1824, %v1856
      %v1870 = vcombine.low %v1831, %v1863
      %v1871 = vcombine.high %v1831, %v1863
      %v1872 = vcombine.low %v1233, %v1297
      %v1873 = vcombine.high %v1233, %v1297
      %v1875 = vunpack.c.l.s4 1983009808
      %v1876 = vunpack.c.0.s8 %v1875
      %v1877 = vlaneseq
      %v1878 = vshrl.u32 %v1877, 7
      %v1879 = vsub.s32 %v1876, %v1878
      %v1880 = vrot.slane %v1872, %v1879
      %v1882 = vunpack.c.l.s4 1983009808
      %v1883 = vunpack.c.0.s8 %v1882
      %v1884 = vlaneseq
      %v1885 = vshrl.u32 %v1884, 7
      %v1886 = vsub.s32 %v1883, %v1885
      %v1887 = vrot.slane %v1873, %v1886
      %v1888 = vcombine.low %v1265, %v1329
      %v1889 = vcombine.high %v1265, %v1329
      %v1891 = vunpack.c.l.s4 1983009808
      %v1892 = vunpack.c.0.s8 %v1891
      %v1893 = vlaneseq
      %v1894 = vshrl.u32 %v1893, 7
      %v1895 = vsub.s32 %v1892, %v1894
      %v1896 = vrot.slane %v1888, %v1895
      %v1898 = vunpack.c.l.s4 1983009808
      %v1899 = vunpack.c.0.s8 %v1898
      %v1900 = vlaneseq
      %v1901 = vshrl.u32 %v1900, 7
      %v1902 = vsub.s32 %v1899, %v1901
      %v1903 = vrot.slane %v1889, %v1902
      %v1904 = vcombine.low %v1361, %v1425
      %v1905 = vcombine.high %v1361, %v1425
      %v1907 = vunpack.c.l.s4 1983009808
      %v1908 = vunpack.c.0.s8 %v1907
      %v1909 = vlaneseq
      %v1910 = vshrl.u32 %v1909, 7
      %v1911 = vsub.s32 %v1908, %v1910
      %v1912 = vrot.slane %v1904, %v1911
      %v1914 = vunpack.c.l.s4 1983009808
      %v1915 = vunpack.c.0.s8 %v1914
      %v1916 = vlaneseq
      %v1917 = vshrl.u32 %v1916, 7
      %v1918 = vsub.s32 %v1915, %v1917
      %v1919 = vrot.slane %v1905, %v1918
      %v1920 = vcombine.low %v1393, %v1457
      %v1921 = vcombine.high %v1393, %v1457
      %v1923 = vunpack.c.l.s4 1983009808
      %v1924 = vunpack.c.0.s8 %v1923
      %v1925 = vlaneseq
      %v1926 = vshrl.u32 %v1925, 7
      %v1927 = vsub.s32 %v1924, %v1926
      %v1928 = vrot.slane %v1920, %v1927
      %v1930 = vunpack.c.l.s4 1983009808
      %v1931 = vunpack.c.0.s8 %v1930
      %v1932 = vlaneseq
      %v1933 = vshrl.u32 %v1932, 7
      %v1934 = vsub.s32 %v1931, %v1933
      %v1935 = vrot.slane %v1921, %v1934
      %v1936 = vcombine.low %v1880, %v1896
      %v1937 = vcombine.high %v1880, %v1896
      %v1939 = vunpack.c.l.s4 1934713408
      %v1940 = vunpack.c.0.s8 %v1939
      %v1941 = vlaneseq
      %v1942 = vshrl.u32 %v1941, 7
      %v1943 = vsub.s32 %v1940, %v1942
      %v1944 = vrot.slane %v1936, %v1943
      %v1946 = vunpack.c.l.s4 1934713408
      %v1947 = vunpack.c.0.s8 %v1946
      %v1948 = vlaneseq
      %v1949 = vshrl.u32 %v1948, 7
      %v1950 = vsub.s32 %v1947, %v1949
      %v1951 = vrot.slane %v1937, %v1950
      %v1952 = vcombine.low %v1887, %v1903
      %v1953 = vcombine.high %v1887, %v1903
      %v1955 = vunpack.c.l.s4 1934713408
      %v1956 = vunpack.c.0.s8 %v1955
      %v1957 = vlaneseq
      %v1958 = vshrl.u32 %v1957, 7
      %v1959 = vsub.s32 %v1956, %v1958
      %v1960 = vrot.slane %v1952, %v1959
      %v1962 = vunpack.c.l.s4 1934713408
      %v1963 = vunpack.c.0.s8 %v1962
      %v1964 = vlaneseq
      %v1965 = vshrl.u32 %v1964, 7
      %v1966 = vsub.s32 %v1963, %v1965
      %v1967 = vrot.slane %v1953, %v1966
      %v1968 = vcombine.low %v1912, %v1928
      %v1969 = vcombine.high %v1912, %v1928
      %v1971 = vunpack.c.l.s4 1934713408
      %v1972 = vunpack.c.0.s8 %v1971
      %v1973 = vlaneseq
      %v1974 = vshrl.u32 %v1973, 7
      %v1975 = vsub.s32 %v1972, %v1974
      %v1976 = vrot.slane %v1968, %v1975
      %v1978 = vunpack.c.l.s4 1934713408
      %v1979 = vunpack.c.0.s8 %v1978
      %v1980 = vlaneseq
      %v1981 = vshrl.u32 %v1980, 7
      %v1982 = vsub.s32 %v1979, %v1981
      %v1983 = vrot.slane %v1969, %v1982
      %v1984 = vcombine.low %v1919, %v1935
      %v1985 = vcombine.high %v1919, %v1935
      %v1987 = vunpack.c.l.s4 1934713408
      %v1988 = vunpack.c.0.s8 %v1987
      %v1989 = vlaneseq
      %v1990 = vshrl.u32 %v1989, 7
      %v1991 = vsub.s32 %v1988, %v1990
      %v1992 = vrot.slane %v1984, %v1991
      %v1994 = vunpack.c.l.s4 1934713408
      %v1995 = vunpack.c.0.s8 %v1994
      %v1996 = vlaneseq
      %v1997 = vshrl.u32 %v1996, 7
      %v1998 = vsub.s32 %v1995, %v1997
      %v1999 = vrot.slane %v1985, %v1998
      %v2000 = vcombine.low %v1944, %v1976
      %v2001 = vcombine.high %v1944, %v1976
      %v2002 = vcombine.low %v1951, %v1983
      %v2003 = vcombine.high %v1951, %v1983
      %v2004 = vcombine.low %v1960, %v1992
      %v2005 = vcombine.high %v1960, %v1992
      %v2006 = vcombine.low %v1967, %v1999
      %v2007 = vcombine.high %v1967, %v1999
      %v2010 = vpack.i.b16 %v1728, %v1592
      %v2012 = vshrl.u32 %v1592, 16
      %v2013 = vshrl.u32 %v1728, 16
      %v2014 = vpack.i.b16 %v2013, %v2012
      %v2018 = vpack.i.b16 %v1729, %v1593
      %v2020 = vshrl.u32 %v1593, 16
      %v2021 = vshrl.u32 %v1729, 16
      %v2022 = vpack.i.b16 %v2021, %v2020
      %v2026 = vpack.i.b16 %v1730, %v1594
      %v2028 = vshrl.u32 %v1594, 16
      %v2029 = vshrl.u32 %v1730, 16
      %v2030 = vpack.i.b16 %v2029, %v2028
      %v2034 = vpack.i.b16 %v1731, %v1595
      %v2036 = vshrl.u32 %v1595, 16
      %v2037 = vshrl.u32 %v1731, 16
      %v2038 = vpack.i.b16 %v2037, %v2036
      %v2042 = vpack.i.b16 %v1732, %v1596
      %v2044 = vshrl.u32 %v1596, 16
      %v2045 = vshrl.u32 %v1732, 16
      %v2046 = vpack.i.b16 %v2045, %v2044
      %v2050 = vpack.i.b16 %v1733, %v1597
      %v2052 = vshrl.u32 %v1597, 16
      %v2053 = vshrl.u32 %v1733, 16
      %v2054 = vpack.i.b16 %v2053, %v2052
      %v2058 = vpack.i.b16 %v1734, %v1598
      %v2060 = vshrl.u32 %v1598, 16
      %v2061 = vshrl.u32 %v1734, 16
      %v2062 = vpack.i.b16 %v2061, %v2060
      %v2066 = vpack.i.b16 %v1735, %v1599
      %v2068 = vshrl.u32 %v1599, 16
      %v2069 = vshrl.u32 %v1735, 16
      %v2070 = vpack.i.b16 %v2069, %v2068
      %v2074 = vpack.i.b16 %v2000, %v1864
      %v2076 = vshrl.u32 %v1864, 16
      %v2077 = vshrl.u32 %v2000, 16
      %v2078 = vpack.i.b16 %v2077, %v2076
      %v2082 = vpack.i.b16 %v2001, %v1865
      %v2084 = vshrl.u32 %v1865, 16
      %v2085 = vshrl.u32 %v2001, 16
      %v2086 = vpack.i.b16 %v2085, %v2084
      %v2090 = vpack.i.b16 %v2002, %v1866
      %v2092 = vshrl.u32 %v1866, 16
      %v2093 = vshrl.u32 %v2002, 16
      %v2094 = vpack.i.b16 %v2093, %v2092
      %v2098 = vpack.i.b16 %v2003, %v1867
      %v2100 = vshrl.u32 %v1867, 16
      %v2101 = vshrl.u32 %v2003, 16
      %v2102 = vpack.i.b16 %v2101, %v2100
      %v2106 = vpack.i.b16 %v2004, %v1868
      %v2108 = vshrl.u32 %v1868, 16
      %v2109 = vshrl.u32 %v2004, 16
      %v2110 = vpack.i.b16 %v2109, %v2108
      %v2114 = vpack.i.b16 %v2005, %v1869
      %v2116 = vshrl.u32 %v1869, 16
      %v2117 = vshrl.u32 %v2005, 16
      %v2118 = vpack.i.b16 %v2117, %v2116
      %v2122 = vpack.i.b16 %v2006, %v1870
      %v2124 = vshrl.u32 %v1870, 16
      %v2125 = vshrl.u32 %v2006, 16
      %v2126 = vpack.i.b16 %v2125, %v2124
      %v2130 = vpack.i.b16 %v2007, %v1871
      %v2132 = vshrl.u32 %v1871, 16
      %v2133 = vshrl.u32 %v2007, 16
      %v2134 = vpack.i.b16 %v2133, %v2132
      %2136 = vxpose.xlu0.c.b16.start [1/8] %v2010, 128
      %2137 = vxpose.xlu0.c.b16.cont [2/8] 0, 128
      %2138 = vxpose.xlu0.c.b16.cont [3/8] 0, 128
      %2139 = vxpose.xlu0.c.b16.cont [4/8] 0, 128
      %2140 = vxpose.xlu0.c.b16.cont [5/8] 0, 128
      %2141 = vxpose.xlu0.c.b16.cont [6/8] 0, 128
      %2142 = vxpose.xlu0.c.b16.cont [7/8] 0, 128
      %2143 = vxpose.xlu0.c.b16.end [8/8] 0, 128
      %v2144 = vpop.trf.xlu0
      %v2145 = vpop.trf.xlu0
      %v2146 = vpop.trf.xlu0
      %v2147 = vpop.trf.xlu0
      %v2148 = vpop.trf.xlu0
      %v2149 = vpop.trf.xlu0
      %v2150 = vpop.trf.xlu0
      %v2151 = vpop.trf.xlu0
      %2152 = vxpose.xlu0.c.b16.start [1/8] %v2014, 128
      %2153 = vxpose.xlu0.c.b16.cont [2/8] 0, 128
      %2154 = vxpose.xlu0.c.b16.cont [3/8] 0, 128
      %2155 = vxpose.xlu0.c.b16.cont [4/8] 0, 128
      %2156 = vxpose.xlu0.c.b16.cont [5/8] 0, 128
      %2157 = vxpose.xlu0.c.b16.cont [6/8] 0, 128
      %2158 = vxpose.xlu0.c.b16.cont [7/8] 0, 128
      %2159 = vxpose.xlu0.c.b16.end [8/8] 0, 128
      %v2160 = vpop.trf.xlu0
      %v2161 = vpop.trf.xlu0
      %v2162 = vpop.trf.xlu0
      %v2163 = vpop.trf.xlu0
      %v2164 = vpop.trf.xlu0
      %v2165 = vpop.trf.xlu0
      %v2166 = vpop.trf.xlu0
      %v2167 = vpop.trf.xlu0
      %2168 = vxpose.xlu0.c.b16.start [1/8] %v2018, 128
      %2169 = vxpose.xlu0.c.b16.cont [2/8] 0, 128
      %2170 = vxpose.xlu0.c.b16.cont [3/8] 0, 128
      %2171 = vxpose.xlu0.c.b16.cont [4/8] 0, 128
      %2172 = vxpose.xlu0.c.b16.cont [5/8] 0, 128
      %2173 = vxpose.xlu0.c.b16.cont [6/8] 0, 128
      %2174 = vxpose.xlu0.c.b16.cont [7/8] 0, 128
      %2175 = vxpose.xlu0.c.b16.end [8/8] 0, 128
      %v2176 = vpop.trf.xlu0
      %v2177 = vpop.trf.xlu0
      %v2178 = vpop.trf.xlu0
      %v2179 = vpop.trf.xlu0
      %v2180 = vpop.trf.xlu0
      %v2181 = vpop.trf.xlu0
      %v2182 = vpop.trf.xlu0
      %v2183 = vpop.trf.xlu0
      %2184 = vxpose.xlu0.c.b16.start [1/8] %v2022, 128
      %2185 = vxpose.xlu0.c.b16.cont [2/8] 0, 128
      %2186 = vxpose.xlu0.c.b16.cont [3/8] 0, 128
      %2187 = vxpose.xlu0.c.b16.cont [4/8] 0, 128
      %2188 = vxpose.xlu0.c.b16.cont [5/8] 0, 128
      %2189 = vxpose.xlu0.c.b16.cont [6/8] 0, 128
      %2190 = vxpose.xlu0.c.b16.cont [7/8] 0, 128
      %2191 = vxpose.xlu0.c.b16.end [8/8] 0, 128
      %v2192 = vpop.trf.xlu0
      %v2193 = vpop.trf.xlu0
      %v2194 = vpop.trf.xlu0
      %v2195 = vpop.trf.xlu0
      %v2196 = vpop.trf.xlu0
      %v2197 = vpop.trf.xlu0
      %v2198 = vpop.trf.xlu0
      %v2199 = vpop.trf.xlu0
      %2200 = vxpose.xlu0.c.b16.start [1/8] %v2026, 128
      %2201 = vxpose.xlu0.c.b16.cont [2/8] 0, 128
      %2202 = vxpose.xlu0.c.b16.cont [3/8] 0, 128
      %2203 = vxpose.xlu0.c.b16.cont [4/8] 0, 128
      %2204 = vxpose.xlu0.c.b16.cont [5/8] 0, 128
      %2205 = vxpose.xlu0.c.b16.cont [6/8] 0, 128
      %2206 = vxpose.xlu0.c.b16.cont [7/8] 0, 128
      %2207 = vxpose.xlu0.c.b16.end [8/8] 0, 128
      %v2208 = vpop.trf.xlu0
      %v2209 = vpop.trf.xlu0
      %v2210 = vpop.trf.xlu0
      %v2211 = vpop.trf.xlu0
      %v2212 = vpop.trf.xlu0
      %v2213 = vpop.trf.xlu0
      %v2214 = vpop.trf.xlu0
      %v2215 = vpop.trf.xlu0
      %2216 = vxpose.xlu0.c.b16.start [1/8] %v2030, 128
      %2217 = vxpose.xlu0.c.b16.cont [2/8] 0, 128
      %2218 = vxpose.xlu0.c.b16.cont [3/8] 0, 128
      %2219 = vxpose.xlu0.c.b16.cont [4/8] 0, 128
      %2220 = vxpose.xlu0.c.b16.cont [5/8] 0, 128
      %2221 = vxpose.xlu0.c.b16.cont [6/8] 0, 128
      %2222 = vxpose.xlu0.c.b16.cont [7/8] 0, 128
      %2223 = vxpose.xlu0.c.b16.end [8/8] 0, 128
      %v2224 = vpop.trf.xlu0
      %v2225 = vpop.trf.xlu0
      %v2226 = vpop.trf.xlu0
      %v2227 = vpop.trf.xlu0
      %v2228 = vpop.trf.xlu0
      %v2229 = vpop.trf.xlu0
      %v2230 = vpop.trf.xlu0
      %v2231 = vpop.trf.xlu0
      %2232 = vxpose.xlu0.c.b16.start [1/8] %v2034, 128
      %2233 = vxpose.xlu0.c.b16.cont [2/8] 0, 128
      %2234 = vxpose.xlu0.c.b16.cont [3/8] 0, 128
      %2235 = vxpose.xlu0.c.b16.cont [4/8] 0, 128
      %2236 = vxpose.xlu0.c.b16.cont [5/8] 0, 128
      %2237 = vxpose.xlu0.c.b16.cont [6/8] 0, 128
      %2238 = vxpose.xlu0.c.b16.cont [7/8] 0, 128
      %2239 = vxpose.xlu0.c.b16.end [8/8] 0, 128
      %v2240 = vpop.trf.xlu0
      %v2241 = vpop.trf.xlu0
      %v2242 = vpop.trf.xlu0
      %v2243 = vpop.trf.xlu0
      %v2244 = vpop.trf.xlu0
      %v2245 = vpop.trf.xlu0
      %v2246 = vpop.trf.xlu0
      %v2247 = vpop.trf.xlu0
      %2248 = vxpose.xlu0.c.b16.start [1/8] %v2038, 128
      %2249 = vxpose.xlu0.c.b16.cont [2/8] 0, 128
      %2250 = vxpose.xlu0.c.b16.cont [3/8] 0, 128
      %2251 = vxpose.xlu0.c.b16.cont [4/8] 0, 128
      %2252 = vxpose.xlu0.c.b16.cont [5/8] 0, 128
      %2253 = vxpose.xlu0.c.b16.cont [6/8] 0, 128
      %2254 = vxpose.xlu0.c.b16.cont [7/8] 0, 128
      %2255 = vxpose.xlu0.c.b16.end [8/8] 0, 128
      %v2256 = vpop.trf.xlu0
      %v2257 = vpop.trf.xlu0
      %v2258 = vpop.trf.xlu0
      %v2259 = vpop.trf.xlu0
      %v2260 = vpop.trf.xlu0
      %v2261 = vpop.trf.xlu0
      %v2262 = vpop.trf.xlu0
      %v2263 = vpop.trf.xlu0
      %2264 = vxpose.xlu0.c.b16.start [1/8] %v2042, 128
      %2265 = vxpose.xlu0.c.b16.cont [2/8] 0, 128
      %2266 = vxpose.xlu0.c.b16.cont [3/8] 0, 128
      %2267 = vxpose.xlu0.c.b16.cont [4/8] 0, 128
      %2268 = vxpose.xlu0.c.b16.cont [5/8] 0, 128
      %2269 = vxpose.xlu0.c.b16.cont [6/8] 0, 128
      %2270 = vxpose.xlu0.c.b16.cont [7/8] 0, 128
      %2271 = vxpose.xlu0.c.b16.end [8/8] 0, 128
      %v2272 = vpop.trf.xlu0
      %v2273 = vpop.trf.xlu0
      %v2274 = vpop.trf.xlu0
      %v2275 = vpop.trf.xlu0
      %v2276 = vpop.trf.xlu0
      %v2277 = vpop.trf.xlu0
      %v2278 = vpop.trf.xlu0
      %v2279 = vpop.trf.xlu0
      %2280 = vxpose.xlu0.c.b16.start [1/8] %v2046, 128
      %2281 = vxpose.xlu0.c.b16.cont [2/8] 0, 128
      %2282 = vxpose.xlu0.c.b16.cont [3/8] 0, 128
      %2283 = vxpose.xlu0.c.b16.cont [4/8] 0, 128
      %2284 = vxpose.xlu0.c.b16.cont [5/8] 0, 128
      %2285 = vxpose.xlu0.c.b16.cont [6/8] 0, 128
      %2286 = vxpose.xlu0.c.b16.cont [7/8] 0, 128
      %2287 = vxpose.xlu0.c.b16.end [8/8] 0, 128
      %v2288 = vpop.trf.xlu0
      %v2289 = vpop.trf.xlu0
      %v2290 = vpop.trf.xlu0
      %v2291 = vpop.trf.xlu0
      %v2292 = vpop.trf.xlu0
      %v2293 = vpop.trf.xlu0
      %v2294 = vpop.trf.xlu0
      %v2295 = vpop.trf.xlu0
      %2296 = vxpose.xlu0.c.b16.start [1/8] %v2050, 128
      %2297 = vxpose.xlu0.c.b16.cont [2/8] 0, 128
      %2298 = vxpose.xlu0.c.b16.cont [3/8] 0, 128
      %2299 = vxpose.xlu0.c.b16.cont [4/8] 0, 128
      %2300 = vxpose.xlu0.c.b16.cont [5/8] 0, 128
      %2301 = vxpose.xlu0.c.b16.cont [6/8] 0, 128
      %2302 = vxpose.xlu0.c.b16.cont [7/8] 0, 128
      %2303 = vxpose.xlu0.c.b16.end [8/8] 0, 128
      %v2304 = vpop.trf.xlu0
      %v2305 = vpop.trf.xlu0
      %v2306 = vpop.trf.xlu0
      %v2307 = vpop.trf.xlu0
      %v2308 = vpop.trf.xlu0
      %v2309 = vpop.trf.xlu0
      %v2310 = vpop.trf.xlu0
      %v2311 = vpop.trf.xlu0
      %2312 = vxpose.xlu0.c.b16.start [1/8] %v2054, 128
      %2313 = vxpose.xlu0.c.b16.cont [2/8] 0, 128
      %2314 = vxpose.xlu0.c.b16.cont [3/8] 0, 128
      %2315 = vxpose.xlu0.c.b16.cont [4/8] 0, 128
      %2316 = vxpose.xlu0.c.b16.cont [5/8] 0, 128
      %2317 = vxpose.xlu0.c.b16.cont [6/8] 0, 128
      %2318 = vxpose.xlu0.c.b16.cont [7/8] 0, 128
      %2319 = vxpose.xlu0.c.b16.end [8/8] 0, 128
      %v2320 = vpop.trf.xlu0
      %v2321 = vpop.trf.xlu0
      %v2322 = vpop.trf.xlu0
      %v2323 = vpop.trf.xlu0
      %v2324 = vpop.trf.xlu0
      %v2325 = vpop.trf.xlu0
      %v2326 = vpop.trf.xlu0
      %v2327 = vpop.trf.xlu0
      %2328 = vxpose.xlu0.c.b16.start [1/8] %v2058, 128
      %2329 = vxpose.xlu0.c.b16.cont [2/8] 0, 128
      %2330 = vxpose.xlu0.c.b16.cont [3/8] 0, 128
      %2331 = vxpose.xlu0.c.b16.cont [4/8] 0, 128
      %2332 = vxpose.xlu0.c.b16.cont [5/8] 0, 128
      %2333 = vxpose.xlu0.c.b16.cont [6/8] 0, 128
      %2334 = vxpose.xlu0.c.b16.cont [7/8] 0, 128
      %2335 = vxpose.xlu0.c.b16.end [8/8] 0, 128
      %v2336 = vpop.trf.xlu0
      %v2337 = vpop.trf.xlu0
      %v2338 = vpop.trf.xlu0
      %v2339 = vpop.trf.xlu0
      %v2340 = vpop.trf.xlu0
      %v2341 = vpop.trf.xlu0
      %v2342 = vpop.trf.xlu0
      %v2343 = vpop.trf.xlu0
      %2344 = vxpose.xlu0.c.b16.start [1/8] %v2062, 128
      %2345 = vxpose.xlu0.c.b16.cont [2/8] 0, 128
      %2346 = vxpose.xlu0.c.b16.cont [3/8] 0, 128
      %2347 = vxpose.xlu0.c.b16.cont [4/8] 0, 128
      %2348 = vxpose.xlu0.c.b16.cont [5/8] 0, 128
      %2349 = vxpose.xlu0.c.b16.cont [6/8] 0, 128
      %2350 = vxpose.xlu0.c.b16.cont [7/8] 0, 128
      %2351 = vxpose.xlu0.c.b16.end [8/8] 0, 128
      %v2352 = vpop.trf.xlu0
      %v2353 = vpop.trf.xlu0
      %v2354 = vpop.trf.xlu0
      %v2355 = vpop.trf.xlu0
      %v2356 = vpop.trf.xlu0
      %v2357 = vpop.trf.xlu0
      %v2358 = vpop.trf.xlu0
      %v2359 = vpop.trf.xlu0
      %2360 = vxpose.xlu0.c.b16.start [1/8] %v2066, 128
      %2361 = vxpose.xlu0.c.b16.cont [2/8] 0, 128
      %2362 = vxpose.xlu0.c.b16.cont [3/8] 0, 128
      %2363 = vxpose.xlu0.c.b16.cont [4/8] 0, 128
      %2364 = vxpose.xlu0.c.b16.cont [5/8] 0, 128
      %2365 = vxpose.xlu0.c.b16.cont [6/8] 0, 128
      %2366 = vxpose.xlu0.c.b16.cont [7/8] 0, 128
      %2367 = vxpose.xlu0.c.b16.end [8/8] 0, 128
      %v2368 = vpop.trf.xlu0
      %v2369 = vpop.trf.xlu0
      %v2370 = vpop.trf.xlu0
      %v2371 = vpop.trf.xlu0
      %v2372 = vpop.trf.xlu0
      %v2373 = vpop.trf.xlu0
      %v2374 = vpop.trf.xlu0
      %v2375 = vpop.trf.xlu0
      %2376 = vxpose.xlu0.c.b16.start [1/8] %v2070, 128
      %2377 = vxpose.xlu0.c.b16.cont [2/8] 0, 128
      %2378 = vxpose.xlu0.c.b16.cont [3/8] 0, 128
      %2379 = vxpose.xlu0.c.b16.cont [4/8] 0, 128
      %2380 = vxpose.xlu0.c.b16.cont [5/8] 0, 128
      %2381 = vxpose.xlu0.c.b16.cont [6/8] 0, 128
      %2382 = vxpose.xlu0.c.b16.cont [7/8] 0, 128
      %2383 = vxpose.xlu0.c.b16.end [8/8] 0, 128
      %v2384 = vpop.trf.xlu0
      %v2385 = vpop.trf.xlu0
      %v2386 = vpop.trf.xlu0
      %v2387 = vpop.trf.xlu0
      %v2388 = vpop.trf.xlu0
      %v2389 = vpop.trf.xlu0
      %v2390 = vpop.trf.xlu0
      %v2391 = vpop.trf.xlu0
      %2392 = vxpose.xlu0.c.b16.start [1/8] %v2074, 128
      %2393 = vxpose.xlu0.c.b16.cont [2/8] 0, 128
      %2394 = vxpose.xlu0.c.b16.cont [3/8] 0, 128
      %2395 = vxpose.xlu0.c.b16.cont [4/8] 0, 128
      %2396 = vxpose.xlu0.c.b16.cont [5/8] 0, 128
      %2397 = vxpose.xlu0.c.b16.cont [6/8] 0, 128
      %2398 = vxpose.xlu0.c.b16.cont [7/8] 0, 128
      %2399 = vxpose.xlu0.c.b16.end [8/8] 0, 128
      %v2400 = vpop.trf.xlu0
      %v2401 = vpop.trf.xlu0
      %v2402 = vpop.trf.xlu0
      %v2403 = vpop.trf.xlu0
      %v2404 = vpop.trf.xlu0
      %v2405 = vpop.trf.xlu0
      %v2406 = vpop.trf.xlu0
      %v2407 = vpop.trf.xlu0
      %2408 = vxpose.xlu0.c.b16.start [1/8] %v2078, 128
      %2409 = vxpose.xlu0.c.b16.cont [2/8] 0, 128
      %2410 = vxpose.xlu0.c.b16.cont [3/8] 0, 128
      %2411 = vxpose.xlu0.c.b16.cont [4/8] 0, 128
      %2412 = vxpose.xlu0.c.b16.cont [5/8] 0, 128
      %2413 = vxpose.xlu0.c.b16.cont [6/8] 0, 128
      %2414 = vxpose.xlu0.c.b16.cont [7/8] 0, 128
      %2415 = vxpose.xlu0.c.b16.end [8/8] 0, 128
      %v2416 = vpop.trf.xlu0
      %v2417 = vpop.trf.xlu0
      %v2418 = vpop.trf.xlu0
      %v2419 = vpop.trf.xlu0
      %v2420 = vpop.trf.xlu0
      %v2421 = vpop.trf.xlu0
      %v2422 = vpop.trf.xlu0
      %v2423 = vpop.trf.xlu0
      %2424 = vxpose.xlu0.c.b16.start [1/8] %v2082, 128
      %2425 = vxpose.xlu0.c.b16.cont [2/8] 0, 128
      %2426 = vxpose.xlu0.c.b16.cont [3/8] 0, 128
      %2427 = vxpose.xlu0.c.b16.cont [4/8] 0, 128
      %2428 = vxpose.xlu0.c.b16.cont [5/8] 0, 128
      %2429 = vxpose.xlu0.c.b16.cont [6/8] 0, 128
      %2430 = vxpose.xlu0.c.b16.cont [7/8] 0, 128
      %2431 = vxpose.xlu0.c.b16.end [8/8] 0, 128
      %v2432 = vpop.trf.xlu0
      %v2433 = vpop.trf.xlu0
      %v2434 = vpop.trf.xlu0
      %v2435 = vpop.trf.xlu0
      %v2436 = vpop.trf.xlu0
      %v2437 = vpop.trf.xlu0
      %v2438 = vpop.trf.xlu0
      %v2439 = vpop.trf.xlu0
      %2440 = vxpose.xlu0.c.b16.start [1/8] %v2086, 128
      %2441 = vxpose.xlu0.c.b16.cont [2/8] 0, 128
      %2442 = vxpose.xlu0.c.b16.cont [3/8] 0, 128
      %2443 = vxpose.xlu0.c.b16.cont [4/8] 0, 128
      %2444 = vxpose.xlu0.c.b16.cont [5/8] 0, 128
      %2445 = vxpose.xlu0.c.b16.cont [6/8] 0, 128
      %2446 = vxpose.xlu0.c.b16.cont [7/8] 0, 128
      %2447 = vxpose.xlu0.c.b16.end [8/8] 0, 128
      %v2448 = vpop.trf.xlu0
      %v2449 = vpop.trf.xlu0
      %v2450 = vpop.trf.xlu0
      %v2451 = vpop.trf.xlu0
      %v2452 = vpop.trf.xlu0
      %v2453 = vpop.trf.xlu0
      %v2454 = vpop.trf.xlu0
      %v2455 = vpop.trf.xlu0
      %2456 = vxpose.xlu0.c.b16.start [1/8] %v2090, 128
      %2457 = vxpose.xlu0.c.b16.cont [2/8] 0, 128
      %2458 = vxpose.xlu0.c.b16.cont [3/8] 0, 128
      %2459 = vxpose.xlu0.c.b16.cont [4/8] 0, 128
      %2460 = vxpose.xlu0.c.b16.cont [5/8] 0, 128
      %2461 = vxpose.xlu0.c.b16.cont [6/8] 0, 128
      %2462 = vxpose.xlu0.c.b16.cont [7/8] 0, 128
      %2463 = vxpose.xlu0.c.b16.end [8/8] 0, 128
      %v2464 = vpop.trf.xlu0
      %v2465 = vpop.trf.xlu0
      %v2466 = vpop.trf.xlu0
      %v2467 = vpop.trf.xlu0
      %v2468 = vpop.trf.xlu0
      %v2469 = vpop.trf.xlu0
      %v2470 = vpop.trf.xlu0
      %v2471 = vpop.trf.xlu0
      %2472 = vxpose.xlu0.c.b16.start [1/8] %v2094, 128
      %2473 = vxpose.xlu0.c.b16.cont [2/8] 0, 128
      %2474 = vxpose.xlu0.c.b16.cont [3/8] 0, 128
      %2475 = vxpose.xlu0.c.b16.cont [4/8] 0, 128
      %2476 = vxpose.xlu0.c.b16.cont [5/8] 0, 128
      %2477 = vxpose.xlu0.c.b16.cont [6/8] 0, 128
      %2478 = vxpose.xlu0.c.b16.cont [7/8] 0, 128
      %2479 = vxpose.xlu0.c.b16.end [8/8] 0, 128
      %v2480 = vpop.trf.xlu0
      %v2481 = vpop.trf.xlu0
      %v2482 = vpop.trf.xlu0
      %v2483 = vpop.trf.xlu0
      %v2484 = vpop.trf.xlu0
      %v2485 = vpop.trf.xlu0
      %v2486 = vpop.trf.xlu0
      %v2487 = vpop.trf.xlu0
      %2488 = vxpose.xlu0.c.b16.start [1/8] %v2098, 128
      %2489 = vxpose.xlu0.c.b16.cont [2/8] 0, 128
      %2490 = vxpose.xlu0.c.b16.cont [3/8] 0, 128
      %2491 = vxpose.xlu0.c.b16.cont [4/8] 0, 128
      %2492 = vxpose.xlu0.c.b16.cont [5/8] 0, 128
      %2493 = vxpose.xlu0.c.b16.cont [6/8] 0, 128
      %2494 = vxpose.xlu0.c.b16.cont [7/8] 0, 128
      %2495 = vxpose.xlu0.c.b16.end [8/8] 0, 128
      %v2496 = vpop.trf.xlu0
      %v2497 = vpop.trf.xlu0
      %v2498 = vpop.trf.xlu0
      %v2499 = vpop.trf.xlu0
      %v2500 = vpop.trf.xlu0
      %v2501 = vpop.trf.xlu0
      %v2502 = vpop.trf.xlu0
      %v2503 = vpop.trf.xlu0
      %2504 = vxpose.xlu0.c.b16.start [1/8] %v2102, 128
      %2505 = vxpose.xlu0.c.b16.cont [2/8] 0, 128
      %2506 = vxpose.xlu0.c.b16.cont [3/8] 0, 128
      %2507 = vxpose.xlu0.c.b16.cont [4/8] 0, 128
      %2508 = vxpose.xlu0.c.b16.cont [5/8] 0, 128
      %2509 = vxpose.xlu0.c.b16.cont [6/8] 0, 128
      %2510 = vxpose.xlu0.c.b16.cont [7/8] 0, 128
      %2511 = vxpose.xlu0.c.b16.end [8/8] 0, 128
      %v2512 = vpop.trf.xlu0
      %v2513 = vpop.trf.xlu0
      %v2514 = vpop.trf.xlu0
      %v2515 = vpop.trf.xlu0
      %v2516 = vpop.trf.xlu0
      %v2517 = vpop.trf.xlu0
      %v2518 = vpop.trf.xlu0
      %v2519 = vpop.trf.xlu0
      %2520 = vxpose.xlu0.c.b16.start [1/8] %v2106, 128
      %2521 = vxpose.xlu0.c.b16.cont [2/8] 0, 128
      %2522 = vxpose.xlu0.c.b16.cont [3/8] 0, 128
      %2523 = vxpose.xlu0.c.b16.cont [4/8] 0, 128
      %2524 = vxpose.xlu0.c.b16.cont [5/8] 0, 128
      %2525 = vxpose.xlu0.c.b16.cont [6/8] 0, 128
      %2526 = vxpose.xlu0.c.b16.cont [7/8] 0, 128
      %2527 = vxpose.xlu0.c.b16.end [8/8] 0, 128
      %v2528 = vpop.trf.xlu0
      %v2529 = vpop.trf.xlu0
      %v2530 = vpop.trf.xlu0
      %v2531 = vpop.trf.xlu0
      %v2532 = vpop.trf.xlu0
      %v2533 = vpop.trf.xlu0
      %v2534 = vpop.trf.xlu0
      %v2535 = vpop.trf.xlu0
      %2536 = vxpose.xlu0.c.b16.start [1/8] %v2110, 128
      %2537 = vxpose.xlu0.c.b16.cont [2/8] 0, 128
      %2538 = vxpose.xlu0.c.b16.cont [3/8] 0, 128
      %2539 = vxpose.xlu0.c.b16.cont [4/8] 0, 128
      %2540 = vxpose.xlu0.c.b16.cont [5/8] 0, 128
      %2541 = vxpose.xlu0.c.b16.cont [6/8] 0, 128
      %2542 = vxpose.xlu0.c.b16.cont [7/8] 0, 128
      %2543 = vxpose.xlu0.c.b16.end [8/8] 0, 128
      %v2544 = vpop.trf.xlu0
      %v2545 = vpop.trf.xlu0
      %v2546 = vpop.trf.xlu0
      %v2547 = vpop.trf.xlu0
      %v2548 = vpop.trf.xlu0
      %v2549 = vpop.trf.xlu0
      %v2550 = vpop.trf.xlu0
      %v2551 = vpop.trf.xlu0
      %2552 = vxpose.xlu0.c.b16.start [1/8] %v2114, 128
      %2553 = vxpose.xlu0.c.b16.cont [2/8] 0, 128
      %2554 = vxpose.xlu0.c.b16.cont [3/8] 0, 128
      %2555 = vxpose.xlu0.c.b16.cont [4/8] 0, 128
      %2556 = vxpose.xlu0.c.b16.cont [5/8] 0, 128
      %2557 = vxpose.xlu0.c.b16.cont [6/8] 0, 128
      %2558 = vxpose.xlu0.c.b16.cont [7/8] 0, 128
      %2559 = vxpose.xlu0.c.b16.end [8/8] 0, 128
      %v2560 = vpop.trf.xlu0
      %v2561 = vpop.trf.xlu0
      %v2562 = vpop.trf.xlu0
      %v2563 = vpop.trf.xlu0
      %v2564 = vpop.trf.xlu0
      %v2565 = vpop.trf.xlu0
      %v2566 = vpop.trf.xlu0
      %v2567 = vpop.trf.xlu0
      %2568 = vxpose.xlu0.c.b16.start [1/8] %v2118, 128
      %2569 = vxpose.xlu0.c.b16.cont [2/8] 0, 128
      %2570 = vxpose.xlu0.c.b16.cont [3/8] 0, 128
      %2571 = vxpose.xlu0.c.b16.cont [4/8] 0, 128
      %2572 = vxpose.xlu0.c.b16.cont [5/8] 0, 128
      %2573 = vxpose.xlu0.c.b16.cont [6/8] 0, 128
      %2574 = vxpose.xlu0.c.b16.cont [7/8] 0, 128
      %2575 = vxpose.xlu0.c.b16.end [8/8] 0, 128
      %v2576 = vpop.trf.xlu0
      %v2577 = vpop.trf.xlu0
      %v2578 = vpop.trf.xlu0
      %v2579 = vpop.trf.xlu0
      %v2580 = vpop.trf.xlu0
      %v2581 = vpop.trf.xlu0
      %v2582 = vpop.trf.xlu0
      %v2583 = vpop.trf.xlu0
      %2584 = vxpose.xlu0.c.b16.start [1/8] %v2122, 128
      %2585 = vxpose.xlu0.c.b16.cont [2/8] 0, 128
      %2586 = vxpose.xlu0.c.b16.cont [3/8] 0, 128
      %2587 = vxpose.xlu0.c.b16.cont [4/8] 0, 128
      %2588 = vxpose.xlu0.c.b16.cont [5/8] 0, 128
      %2589 = vxpose.xlu0.c.b16.cont [6/8] 0, 128
      %2590 = vxpose.xlu0.c.b16.cont [7/8] 0, 128
      %2591 = vxpose.xlu0.c.b16.end [8/8] 0, 128
      %v2592 = vpop.trf.xlu0
      %v2593 = vpop.trf.xlu0
      %v2594 = vpop.trf.xlu0
      %v2595 = vpop.trf.xlu0
      %v2596 = vpop.trf.xlu0
      %v2597 = vpop.trf.xlu0
      %v2598 = vpop.trf.xlu0
      %v2599 = vpop.trf.xlu0
      %2600 = vxpose.xlu0.c.b16.start [1/8] %v2126, 128
      %2601 = vxpose.xlu0.c.b16.cont [2/8] 0, 128
      %2602 = vxpose.xlu0.c.b16.cont [3/8] 0, 128
      %2603 = vxpose.xlu0.c.b16.cont [4/8] 0, 128
      %2604 = vxpose.xlu0.c.b16.cont [5/8] 0, 128
      %2605 = vxpose.xlu0.c.b16.cont [6/8] 0, 128
      %2606 = vxpose.xlu0.c.b16.cont [7/8] 0, 128
      %2607 = vxpose.xlu0.c.b16.end [8/8] 0, 128
      %v2608 = vpop.trf.xlu0
      %v2609 = vpop.trf.xlu0
      %v2610 = vpop.trf.xlu0
      %v2611 = vpop.trf.xlu0
      %v2612 = vpop.trf.xlu0
      %v2613 = vpop.trf.xlu0
      %v2614 = vpop.trf.xlu0
      %v2615 = vpop.trf.xlu0
      %2616 = vxpose.xlu0.c.b16.start [1/8] %v2130, 128
      %2617 = vxpose.xlu0.c.b16.cont [2/8] 0, 128
      %2618 = vxpose.xlu0.c.b16.cont [3/8] 0, 128
      %2619 = vxpose.xlu0.c.b16.cont [4/8] 0, 128
      %2620 = vxpose.xlu0.c.b16.cont [5/8] 0, 128
      %2621 = vxpose.xlu0.c.b16.cont [6/8] 0, 128
      %2622 = vxpose.xlu0.c.b16.cont [7/8] 0, 128
      %2623 = vxpose.xlu0.c.b16.end [8/8] 0, 128
      %v2624 = vpop.trf.xlu0
      %v2625 = vpop.trf.xlu0
      %v2626 = vpop.trf.xlu0
      %v2627 = vpop.trf.xlu0
      %v2628 = vpop.trf.xlu0
      %v2629 = vpop.trf.xlu0
      %v2630 = vpop.trf.xlu0
      %v2631 = vpop.trf.xlu0
      %2632 = vxpose.xlu0.c.b16.start [1/8] %v2134, 128
      %2633 = vxpose.xlu0.c.b16.cont [2/8] 0, 128
      %2634 = vxpose.xlu0.c.b16.cont [3/8] 0, 128
      %2635 = vxpose.xlu0.c.b16.cont [4/8] 0, 128
      %2636 = vxpose.xlu0.c.b16.cont [5/8] 0, 128
      %2637 = vxpose.xlu0.c.b16.cont [6/8] 0, 128
      %2638 = vxpose.xlu0.c.b16.cont [7/8] 0, 128
      %2639 = vxpose.xlu0.c.b16.end [8/8] 0, 128
      %v2640 = vpop.trf.xlu0
      %v2641 = vpop.trf.xlu0
      %v2642 = vpop.trf.xlu0
      %v2643 = vpop.trf.xlu0
      %v2644 = vpop.trf.xlu0
      %v2645 = vpop.trf.xlu0
      %v2646 = vpop.trf.xlu0
      %v2647 = vpop.trf.xlu0
      %v2648 = vcombine.low %v2144, %v2208
      %v2650 = vunpack.c.l.s4 1983009808
      %v2651 = vunpack.c.0.s8 %v2650
      %v2652 = vlaneseq
      %v2653 = vshrl.u32 %v2652, 7
      %v2654 = vsub.s32 %v2651, %v2653
      %v2655 = vrot.slane %v2648, %v2654
      %v2656 = vcombine.low %v2176, %v2240
      %v2658 = vunpack.c.l.s4 1983009808
      %v2659 = vunpack.c.0.s8 %v2658
      %v2660 = vlaneseq
      %v2661 = vshrl.u32 %v2660, 7
      %v2662 = vsub.s32 %v2659, %v2661
      %v2663 = vrot.slane %v2656, %v2662
      %v2664 = vcombine.low %v2272, %v2336
      %v2666 = vunpack.c.l.s4 1983009808
      %v2667 = vunpack.c.0.s8 %v2666
      %v2668 = vlaneseq
      %v2669 = vshrl.u32 %v2668, 7
      %v2670 = vsub.s32 %v2667, %v2669
      %v2671 = vrot.slane %v2664, %v2670
      %v2672 = vcombine.low %v2304, %v2368
      %v2674 = vunpack.c.l.s4 1983009808
      %v2675 = vunpack.c.0.s8 %v2674
      %v2676 = vlaneseq
      %v2677 = vshrl.u32 %v2676, 7
      %v2678 = vsub.s32 %v2675, %v2677
      %v2679 = vrot.slane %v2672, %v2678
      %v2680 = vcombine.low %v2655, %v2663
      %v2682 = vunpack.c.l.s4 1934713408
      %v2683 = vunpack.c.0.s8 %v2682
      %v2684 = vlaneseq
      %v2685 = vshrl.u32 %v2684, 7
      %v2686 = vsub.s32 %v2683, %v2685
      %v2687 = vrot.slane %v2680, %v2686
      %v2688 = vcombine.low %v2671, %v2679
      %v2690 = vunpack.c.l.s4 1934713408
      %v2691 = vunpack.c.0.s8 %v2690
      %v2692 = vlaneseq
      %v2693 = vshrl.u32 %v2692, 7
      %v2694 = vsub.s32 %v2691, %v2693
      %v2695 = vrot.slane %v2688, %v2694
      %v2696 = vcombine.low %v2687, %v2695
      %v2697 = vcombine.high %v2687, %v2695
      %v2698 = vcombine.low %v2160, %v2224
      %v2700 = vunpack.c.l.s4 1983009808
      %v2701 = vunpack.c.0.s8 %v2700
      %v2702 = vlaneseq
      %v2703 = vshrl.u32 %v2702, 7
      %v2704 = vsub.s32 %v2701, %v2703
      %v2705 = vrot.slane %v2698, %v2704
      %v2706 = vcombine.low %v2192, %v2256
      %v2708 = vunpack.c.l.s4 1983009808
      %v2709 = vunpack.c.0.s8 %v2708
      %v2710 = vlaneseq
      %v2711 = vshrl.u32 %v2710, 7
      %v2712 = vsub.s32 %v2709, %v2711
      %v2713 = vrot.slane %v2706, %v2712
      %v2714 = vcombine.low %v2288, %v2352
      %v2716 = vunpack.c.l.s4 1983009808
      %v2717 = vunpack.c.0.s8 %v2716
      %v2718 = vlaneseq
      %v2719 = vshrl.u32 %v2718, 7
      %v2720 = vsub.s32 %v2717, %v2719
      %v2721 = vrot.slane %v2714, %v2720
      %v2722 = vcombine.low %v2320, %v2384
      %v2724 = vunpack.c.l.s4 1983009808
      %v2725 = vunpack.c.0.s8 %v2724
      %v2726 = vlaneseq
      %v2727 = vshrl.u32 %v2726, 7
      %v2728 = vsub.s32 %v2725, %v2727
      %v2729 = vrot.slane %v2722, %v2728
      %v2730 = vcombine.low %v2705, %v2713
      %v2732 = vunpack.c.l.s4 1934713408
      %v2733 = vunpack.c.0.s8 %v2732
      %v2734 = vlaneseq
      %v2735 = vshrl.u32 %v2734, 7
      %v2736 = vsub.s32 %v2733, %v2735
      %v2737 = vrot.slane %v2730, %v2736
      %v2738 = vcombine.low %v2721, %v2729
      %v2740 = vunpack.c.l.s4 1934713408
      %v2741 = vunpack.c.0.s8 %v2740
      %v2742 = vlaneseq
      %v2743 = vshrl.u32 %v2742, 7
      %v2744 = vsub.s32 %v2741, %v2743
      %v2745 = vrot.slane %v2738, %v2744
      %v2746 = vcombine.low %v2737, %v2745
      %v2747 = vcombine.high %v2737, %v2745
      %v2748 = vcombine.low %v2400, %v2464
      %v2750 = vunpack.c.l.s4 1983009808
      %v2751 = vunpack.c.0.s8 %v2750
      %v2752 = vlaneseq
      %v2753 = vshrl.u32 %v2752, 7
      %v2754 = vsub.s32 %v2751, %v2753
      %v2755 = vrot.slane %v2748, %v2754
      %v2756 = vcombine.low %v2432, %v2496
      %v2758 = vunpack.c.l.s4 1983009808
      %v2759 = vunpack.c.0.s8 %v2758
      %v2760 = vlaneseq
      %v2761 = vshrl.u32 %v2760, 7
      %v2762 = vsub.s32 %v2759, %v2761
      %v2763 = vrot.slane %v2756, %v2762
      %v2764 = vcombine.low %v2528, %v2592
      %v2766 = vunpack.c.l.s4 1983009808
      %v2767 = vunpack.c.0.s8 %v2766
      %v2768 = vlaneseq
      %v2769 = vshrl.u32 %v2768, 7
      %v2770 = vsub.s32 %v2767, %v2769
      %v2771 = vrot.slane %v2764, %v2770
      %v2772 = vcombine.low %v2560, %v2624
      %v2774 = vunpack.c.l.s4 1983009808
      %v2775 = vunpack.c.0.s8 %v2774
      %v2776 = vlaneseq
      %v2777 = vshrl.u32 %v2776, 7
      %v2778 = vsub.s32 %v2775, %v2777
      %v2779 = vrot.slane %v2772, %v2778
      %v2780 = vcombine.low %v2755, %v2763
      %v2782 = vunpack.c.l.s4 1934713408
      %v2783 = vunpack.c.0.s8 %v2782
      %v2784 = vlaneseq
      %v2785 = vshrl.u32 %v2784, 7
      %v2786 = vsub.s32 %v2783, %v2785
      %v2787 = vrot.slane %v2780, %v2786
      %v2788 = vcombine.low %v2771, %v2779
      %v2790 = vunpack.c.l.s4 1934713408
      %v2791 = vunpack.c.0.s8 %v2790
      %v2792 = vlaneseq
      %v2793 = vshrl.u32 %v2792, 7
      %v2794 = vsub.s32 %v2791, %v2793
      %v2795 = vrot.slane %v2788, %v2794
      %v2796 = vcombine.low %v2787, %v2795
      %v2797 = vcombine.high %v2787, %v2795
      %v2798 = vcombine.low %v2416, %v2480
      %v2800 = vunpack.c.l.s4 1983009808
      %v2801 = vunpack.c.0.s8 %v2800
      %v2802 = vlaneseq
      %v2803 = vshrl.u32 %v2802, 7
      %v2804 = vsub.s32 %v2801, %v2803
      %v2805 = vrot.slane %v2798, %v2804
      %v2806 = vcombine.low %v2448, %v2512
      %v2808 = vunpack.c.l.s4 1983009808
      %v2809 = vunpack.c.0.s8 %v2808
      %v2810 = vlaneseq
      %v2811 = vshrl.u32 %v2810, 7
      %v2812 = vsub.s32 %v2809, %v2811
      %v2813 = vrot.slane %v2806, %v2812
      %v2814 = vcombine.low %v2544, %v2608
      %v2816 = vunpack.c.l.s4 1983009808
      %v2817 = vunpack.c.0.s8 %v2816
      %v2818 = vlaneseq
      %v2819 = vshrl.u32 %v2818, 7
      %v2820 = vsub.s32 %v2817, %v2819
      %v2821 = vrot.slane %v2814, %v2820
      %v2822 = vcombine.low %v2576, %v2640
      %v2824 = vunpack.c.l.s4 1983009808
      %v2825 = vunpack.c.0.s8 %v2824
      %v2826 = vlaneseq
      %v2827 = vshrl.u32 %v2826, 7
      %v2828 = vsub.s32 %v2825, %v2827
      %v2829 = vrot.slane %v2822, %v2828
      %v2830 = vcombine.low %v2805, %v2813
      %v2832 = vunpack.c.l.s4 1934713408
      %v2833 = vunpack.c.0.s8 %v2832
      %v2834 = vlaneseq
      %v2835 = vshrl.u32 %v2834, 7
      %v2836 = vsub.s32 %v2833, %v2835
      %v2837 = vrot.slane %v2830, %v2836
      %v2838 = vcombine.low %v2821, %v2829
      %v2840 = vunpack.c.l.s4 1934713408
      %v2841 = vunpack.c.0.s8 %v2840
      %v2842 = vlaneseq
      %v2843 = vshrl.u32 %v2842, 7
      %v2844 = vsub.s32 %v2841, %v2843
      %v2845 = vrot.slane %v2838, %v2844
      %v2846 = vcombine.low %v2837, %v2845
      %v2847 = vcombine.high %v2837, %v2845
      %v2850 = vpack.i.b16 %v2746, %v2696
      %v2852 = vshrl.u32 %v2696, 16
      %v2853 = vshrl.u32 %v2746, 16
      %v2854 = vpack.i.b16 %v2853, %v2852
      %v2858 = vpack.i.b16 %v2747, %v2697
      %v2860 = vshrl.u32 %v2697, 16
      %v2861 = vshrl.u32 %v2747, 16
      %v2862 = vpack.i.b16 %v2861, %v2860
      %v2866 = vpack.i.b16 %v2846, %v2796
      %v2868 = vshrl.u32 %v2796, 16
      %v2869 = vshrl.u32 %v2846, 16
      %v2870 = vpack.i.b16 %v2869, %v2868
      %v2874 = vpack.i.b16 %v2847, %v2797
      %v2876 = vshrl.u32 %v2797, 16
      %v2877 = vshrl.u32 %v2847, 16
      %v2878 = vpack.i.b16 %v2877, %v2876
      %vm2880 = vcmask 261120
      %v2882 = vsel %vm2880, %v1198, 0
      %2884 = vmatprep.subr.bf16.mxu0 0
      %2885 = vmatpush1.bf16.msra.mxu0 %v2850
      %2886 = vmatprep.subr.bf16.mxu0 0
      %2887 = vmatpush1.bf16.msra.mxu0 %v2866
      %2888 = vmatprep.subr.bf16.mxu0 0
      %2889 = vmatpush1.bf16.msra.mxu0 0
      %2890 = vmatprep.subr.bf16.mxu0 0
      %2891 = vmatpush1.bf16.msra.mxu0 0
      %2892 = vmatprep.subr.bf16.mxu0 0
      %2893 = vmatpush1.bf16.msra.mxu0 0
      %2894 = vmatprep.subr.bf16.mxu0 0
      %2895 = vmatpush1.bf16.msra.mxu0 0
      %2896 = vmatprep.subr.bf16.mxu0 0
      %2897 = vmatpush1.bf16.msra.mxu0 0
      %2898 = vmatprep.subr.bf16.mxu0 0
      %2899 = vmatpush1.bf16.msra.mxu0 0
      %2900 = vmatprep.subr.bf16.mxu0 0
      %2901 = vmatpush1.bf16.msra.mxu0 0
      %2902 = vmatprep.subr.bf16.mxu0 0
      %2903 = vmatpush1.bf16.msra.mxu0 0
      %2904 = vmatprep.subr.bf16.mxu0 0
      %2905 = vmatpush1.bf16.msra.mxu0 0
      %2906 = vmatprep.subr.bf16.mxu0 0
      %2907 = vmatpush1.bf16.msra.mxu0 0
      %2908 = vmatprep.subr.bf16.mxu0 0
      %2909 = vmatpush1.bf16.msra.mxu0 0
      %2910 = vmatprep.subr.bf16.mxu0 0
      %2911 = vmatpush1.bf16.msra.mxu0 0
      %2912 = vmatprep.subr.bf16.mxu0 0
      %2913 = vmatpush1.bf16.msra.mxu0 0
      %2914 = vmatprep.subr.bf16.mxu0 0
      %2915 = vmatpush1.bf16.msra.mxu0 0
      %2916 = vmatprep.mubr.bf16.mxu0 0
      %2917 = vmatmul.mubr.bf16.gmra.mrb[0].mxu0 %v2882
      %v2918 = vpop.f32.mrb[0].mxu0
      %v2919 = vadd.f32 %v1094, %v2918
      %v2920 = vpop.f32.mrb[0].mxu0
      %v2921 = vpop.f32.mrb[0].mxu0
      %v2922 = vadd.f32 %v1095, %v2921
      %v2923 = vpop.f32.mrb[0].mxu0
      %2924 = vdwg.mxu0
      %v2926 = vsel %vm2880, %v1201, 0
      %2928 = vmatprep.subr.bf16.mxu0 0
      %2929 = vmatpush1.bf16.msra.mxu0 %v2854
      %2930 = vmatprep.subr.bf16.mxu0 0
      %2931 = vmatpush1.bf16.msra.mxu0 %v2870
      %2932 = vmatprep.subr.bf16.mxu0 0
      %2933 = vmatpush1.bf16.msra.mxu0 0
      %2934 = vmatprep.subr.bf16.mxu0 0
      %2935 = vmatpush1.bf16.msra.mxu0 0
      %2936 = vmatprep.subr.bf16.mxu0 0
      %2937 = vmatpush1.bf16.msra.mxu0 0
      %2938 = vmatprep.subr.bf16.mxu0 0
      %2939 = vmatpush1.bf16.msra.mxu0 0
      %2940 = vmatprep.subr.bf16.mxu0 0
      %2941 = vmatpush1.bf16.msra.mxu0 0
      %2942 = vmatprep.subr.bf16.mxu0 0
      %2943 = vmatpush1.bf16.msra.mxu0 0
      %2944 = vmatprep.subr.bf16.mxu0 0
      %2945 = vmatpush1.bf16.msra.mxu0 0
      %2946 = vmatprep.subr.bf16.mxu0 0
      %2947 = vmatpush1.bf16.msra.mxu0 0
      %2948 = vmatprep.subr.bf16.mxu0 0
      %2949 = vmatpush1.bf16.msra.mxu0 0
      %2950 = vmatprep.subr.bf16.mxu0 0
      %2951 = vmatpush1.bf16.msra.mxu0 0
      %2952 = vmatprep.subr.bf16.mxu0 0
      %2953 = vmatpush1.bf16.msra.mxu0 0
      %2954 = vmatprep.subr.bf16.mxu0 0
      %2955 = vmatpush1.bf16.msra.mxu0 0
      %2956 = vmatprep.subr.bf16.mxu0 0
      %2957 = vmatpush1.bf16.msra.mxu0 0
      %2958 = vmatprep.subr.bf16.mxu0 0
      %2959 = vmatpush1.bf16.msra.mxu0 0
      %2960 = vmatprep.mubr.bf16.mxu0 0
      %2961 = vmatmul.mubr.bf16.gmra.mrb[0].mxu0 %v2926
      %v2962 = vpop.f32.mrb[0].mxu0
      %v2963 = vadd.f32 %v1094, %v2962
      %v2964 = vpop.f32.mrb[0].mxu0
      %v2965 = vpop.f32.mrb[0].mxu0
      %v2966 = vadd.f32 %v1095, %v2965
      %v2967 = vpop.f32.mrb[0].mxu0
      %2968 = vdwg.mxu0
      %v2970 = vsel %vm2880, %v1204, 0
      %2972 = vmatprep.subr.bf16.mxu0 0
      %2973 = vmatpush1.bf16.msra.mxu0 %v2858
      %2974 = vmatprep.subr.bf16.mxu0 0
      %2975 = vmatpush1.bf16.msra.mxu0 %v2874
      %2976 = vmatprep.subr.bf16.mxu0 0
      %2977 = vmatpush1.bf16.msra.mxu0 0
      %2978 = vmatprep.subr.bf16.mxu0 0
      %2979 = vmatpush1.bf16.msra.mxu0 0
      %2980 = vmatprep.subr.bf16.mxu0 0
      %2981 = vmatpush1.bf16.msra.mxu0 0
      %2982 = vmatprep.subr.bf16.mxu0 0
      %2983 = vmatpush1.bf16.msra.mxu0 0
      %2984 = vmatprep.subr.bf16.mxu0 0
      %2985 = vmatpush1.bf16.msra.mxu0 0
      %2986 = vmatprep.subr.bf16.mxu0 0
      %2987 = vmatpush1.bf16.msra.mxu0 0
      %2988 = vmatprep.subr.bf16.mxu0 0
      %2989 = vmatpush1.bf16.msra.mxu0 0
      %2990 = vmatprep.subr.bf16.mxu0 0
      %2991 = vmatpush1.bf16.msra.mxu0 0
      %2992 = vmatprep.subr.bf16.mxu0 0
      %2993 = vmatpush1.bf16.msra.mxu0 0
      %2994 = vmatprep.subr.bf16.mxu0 0
      %2995 = vmatpush1.bf16.msra.mxu0 0
      %2996 = vmatprep.subr.bf16.mxu0 0
      %2997 = vmatpush1.bf16.msra.mxu0 0
      %2998 = vmatprep.subr.bf16.mxu0 0
      %2999 = vmatpush1.bf16.msra.mxu0 0
      %3000 = vmatprep.subr.bf16.mxu0 0
      %3001 = vmatpush1.bf16.msra.mxu0 0
      %3002 = vmatprep.subr.bf16.mxu0 0
      %3003 = vmatpush1.bf16.msra.mxu0 0
      %3004 = vmatprep.mubr.bf16.mxu0 0
      %3005 = vmatmul.mubr.bf16.gmra.mrb[0].mxu0 %v2970
      %v3006 = vpop.f32.mrb[0].mxu0
      %v3007 = vadd.f32 %v1094, %v3006
      %v3008 = vpop.f32.mrb[0].mxu0
      %v3009 = vpop.f32.mrb[0].mxu0
      %v3010 = vadd.f32 %v1095, %v3009
      %v3011 = vpop.f32.mrb[0].mxu0
      %3012 = vdwg.mxu0
      %v3014 = vsel %vm2880, %v1207, 0
      %3016 = vmatprep.subr.bf16.mxu0 0
      %3017 = vmatpush1.bf16.msra.mxu0 %v2862
      %3018 = vmatprep.subr.bf16.mxu0 0
      %3019 = vmatpush1.bf16.msra.mxu0 %v2878
      %3020 = vmatprep.subr.bf16.mxu0 0
      %3021 = vmatpush1.bf16.msra.mxu0 0
      %3022 = vmatprep.subr.bf16.mxu0 0
      %3023 = vmatpush1.bf16.msra.mxu0 0
      %3024 = vmatprep.subr.bf16.mxu0 0
      %3025 = vmatpush1.bf16.msra.mxu0 0
      %3026 = vmatprep.subr.bf16.mxu0 0
      %3027 = vmatpush1.bf16.msra.mxu0 0
      %3028 = vmatprep.subr.bf16.mxu0 0
      %3029 = vmatpush1.bf16.msra.mxu0 0
      %3030 = vmatprep.subr.bf16.mxu0 0
      %3031 = vmatpush1.bf16.msra.mxu0 0
      %3032 = vmatprep.subr.bf16.mxu0 0
      %3033 = vmatpush1.bf16.msra.mxu0 0
      %3034 = vmatprep.subr.bf16.mxu0 0
      %3035 = vmatpush1.bf16.msra.mxu0 0
      %3036 = vmatprep.subr.bf16.mxu0 0
      %3037 = vmatpush1.bf16.msra.mxu0 0
      %3038 = vmatprep.subr.bf16.mxu0 0
      %3039 = vmatpush1.bf16.msra.mxu0 0
      %3040 = vmatprep.subr.bf16.mxu0 0
      %3041 = vmatpush1.bf16.msra.mxu0 0
      %3042 = vmatprep.subr.bf16.mxu0 0
      %3043 = vmatpush1.bf16.msra.mxu0 0
      %3044 = vmatprep.subr.bf16.mxu0 0
      %3045 = vmatpush1.bf16.msra.mxu0 0
      %3046 = vmatprep.subr.bf16.mxu0 0
      %3047 = vmatpush1.bf16.msra.mxu0 0
      %3048 = vmatprep.mubr.bf16.mxu0 0
      %3049 = vmatmul.mubr.bf16.gmra.mrb[0].mxu0 %v3014
      %v3050 = vpop.f32.mrb[0].mxu0
      %v3051 = vadd.f32 %v1094, %v3050
      %v3052 = vpop.f32.mrb[0].mxu0
      %v3053 = vpop.f32.mrb[0].mxu0
      %v3054 = vadd.f32 %v1095, %v3053
      %v3055 = vpop.f32.mrb[0].mxu0
      %3056 = vdwg.mxu0
      %vm3057 = vcmask 130048
      %v3058 = vsel %vm3057, %v2919, -inf
      %3059 = vmax.xlane.f32.xlu0 %v3058
      %v3060 = vpop.xlane.xlu0 %3059
      %v3061 = vsel %vm3057, %v2922, -inf
      %3062 = vmax.xlane.f32.xlu0 %v3061
      %v3063 = vpop.xlane.xlu0 %3062
      %v3064 = vsel %vm3057, %v2963, -inf
      %3065 = vmax.xlane.f32.xlu0 %v3064
      %v3066 = vpop.xlane.xlu0 %3065
      %v3067 = vsel %vm3057, %v2966, -inf
      %3068 = vmax.xlane.f32.xlu0 %v3067
      %v3069 = vpop.xlane.xlu0 %3068
      %v3070 = vsel %vm3057, %v3007, -inf
      %3071 = vmax.xlane.f32.xlu0 %v3070
      %v3072 = vpop.xlane.xlu0 %3071
      %v3073 = vsel %vm3057, %v3010, -inf
      %3074 = vmax.xlane.f32.xlu0 %v3073
      %v3075 = vpop.xlane.xlu0 %3074
      %v3076 = vsel %vm3057, %v3051, -inf
      %3077 = vmax.xlane.f32.xlu0 %v3076
      %v3078 = vpop.xlane.xlu0 %3077
      %v3079 = vsel %vm3057, %v3054, -inf
      %3080 = vmax.xlane.f32.xlu0 %v3079
      %v3081 = vpop.xlane.xlu0 %3080
      %v3082 = vsub.f32 %v2919, %v3060
      %v3083 = vsub.f32 %v2922, %v3063
      %v3084 = vsub.f32 %v2963, %v3066
      %v3085 = vsub.f32 %v2966, %v3069
      %v3086 = vsub.f32 %v3007, %v3072
      %v3087 = vsub.f32 %v3010, %v3075
      %v3088 = vsub.f32 %v3051, %v3078
      %v3089 = vsub.f32 %v3054, %v3081
      %v3090 = vmul.f32 %v3082, 1.442695
      %v3091 = vpow.pop %v3090
      %v3092 = vmul.f32 %v3083, 1.442695
      %v3093 = vpow.pop %v3092
      %v3094 = vmul.f32 %v3084, 1.442695
      %v3095 = vpow.pop %v3094
      %v3096 = vmul.f32 %v3085, 1.442695
      %v3097 = vpow.pop %v3096
      %v3098 = vmul.f32 %v3086, 1.442695
      %v3099 = vpow.pop %v3098
      %v3100 = vmul.f32 %v3087, 1.442695
      %v3101 = vpow.pop %v3100
      %v3102 = vmul.f32 %v3088, 1.442695
      %v3103 = vpow.pop %v3102
      %v3104 = vmul.f32 %v3089, 1.442695
      %v3105 = vpow.pop %v3104
      %v3106 = vsel %vm3057, %v3091, 0.0
      %3107 = vadd.xlane.f32.xlu0 %v3106
      %v3108 = vpop.xlane.xlu0 %3107
      %v3109 = vsel %vm3057, %v3093, 0.0
      %3110 = vadd.xlane.f32.xlu0 %v3109
      %v3111 = vpop.xlane.xlu0 %3110
      %v3112 = vsel %vm3057, %v3095, 0.0
      %3113 = vadd.xlane.f32.xlu0 %v3112
      %v3114 = vpop.xlane.xlu0 %3113
      %v3115 = vsel %vm3057, %v3097, 0.0
      %3116 = vadd.xlane.f32.xlu0 %v3115
      %v3117 = vpop.xlane.xlu0 %3116
      %v3118 = vsel %vm3057, %v3099, 0.0
      %3119 = vadd.xlane.f32.xlu0 %v3118
      %v3120 = vpop.xlane.xlu0 %3119
      %v3121 = vsel %vm3057, %v3101, 0.0
      %3122 = vadd.xlane.f32.xlu0 %v3121
      %v3123 = vpop.xlane.xlu0 %3122
      %v3124 = vsel %vm3057, %v3103, 0.0
      %3125 = vadd.xlane.f32.xlu0 %v3124
      %v3126 = vpop.xlane.xlu0 %3125
      %v3127 = vsel %vm3057, %v3105, 0.0
      %3128 = vadd.xlane.f32.xlu0 %v3127
      %v3129 = vpop.xlane.xlu0 %3128
      %v3130 = vrcp.pop %v3108
      %v3131 = vrcp.pop %v3111
      %v3132 = vrcp.pop %v3114
      %v3133 = vrcp.pop %v3117
      %v3134 = vrcp.pop %v3120
      %v3135 = vrcp.pop %v3123
      %v3136 = vrcp.pop %v3126
      %v3137 = vrcp.pop %v3129
      %v3138 = vmul.f32 %v3091, %v3130
      %v3139 = vmul.f32 %v3093, %v3131
      %v3140 = vmul.f32 %v3095, %v3132
      %v3141 = vmul.f32 %v3097, %v3133
      %v3142 = vmul.f32 %v3099, %v3134
      %v3143 = vmul.f32 %v3101, %v3135
      %v3144 = vmul.f32 %v3103, %v3136
      %v3145 = vmul.f32 %v3105, %v3137
      %v3146 = vpack.c.bf16 %v3139, %v3138
      %v3147 = vpack.c.bf16 %v3141, %v3140
      %v3148 = vpack.c.bf16 %v3143, %v3142
      %v3149 = vpack.c.bf16 %v3145, %v3144
      %3150 = vxpose.xlu0.c.b16.start [1/8] %v1078, 128
      %3151 = vxpose.xlu0.c.b16.cont [2/8] 0, 128
      %3152 = vxpose.xlu0.c.b16.cont [3/8] 0, 128
      %3153 = vxpose.xlu0.c.b16.cont [4/8] 0, 128
      %3154 = vxpose.xlu0.c.b16.cont [5/8] 0, 128
      %3155 = vxpose.xlu0.c.b16.cont [6/8] 0, 128
      %3156 = vxpose.xlu0.c.b16.cont [7/8] 0, 128
      %3157 = vxpose.xlu0.c.b16.end [8/8] 0, 128
      %v3158 = vpop.trf.xlu0
      %v3159 = vpop.trf.xlu0
      %v3160 = vpop.trf.xlu0
      %v3161 = vpop.trf.xlu0
      %v3162 = vpop.trf.xlu0
      %v3163 = vpop.trf.xlu0
      %v3164 = vpop.trf.xlu0
      %v3165 = vpop.trf.xlu0
      %3166 = vxpose.xlu0.c.b16.start [1/8] %v1079, 128
      %3167 = vxpose.xlu0.c.b16.cont [2/8] 0, 128
      %3168 = vxpose.xlu0.c.b16.cont [3/8] 0, 128
      %3169 = vxpose.xlu0.c.b16.cont [4/8] 0, 128
      %3170 = vxpose.xlu0.c.b16.cont [5/8] 0, 128
      %3171 = vxpose.xlu0.c.b16.cont [6/8] 0, 128
      %3172 = vxpose.xlu0.c.b16.cont [7/8] 0, 128
      %3173 = vxpose.xlu0.c.b16.end [8/8] 0, 128
      %v3174 = vpop.trf.xlu0
      %v3175 = vpop.trf.xlu0
      %v3176 = vpop.trf.xlu0
      %v3177 = vpop.trf.xlu0
      %v3178 = vpop.trf.xlu0
      %v3179 = vpop.trf.xlu0
      %v3180 = vpop.trf.xlu0
      %v3181 = vpop.trf.xlu0
      %3182 = vxpose.xlu0.c.b16.start [1/8] %v1080, 128
      %3183 = vxpose.xlu0.c.b16.cont [2/8] 0, 128
      %3184 = vxpose.xlu0.c.b16.cont [3/8] 0, 128
      %3185 = vxpose.xlu0.c.b16.cont [4/8] 0, 128
      %3186 = vxpose.xlu0.c.b16.cont [5/8] 0, 128
      %3187 = vxpose.xlu0.c.b16.cont [6/8] 0, 128
      %3188 = vxpose.xlu0.c.b16.cont [7/8] 0, 128
      %3189 = vxpose.xlu0.c.b16.end [8/8] 0, 128
      %v3190 = vpop.trf.xlu0
      %v3191 = vpop.trf.xlu0
      %v3192 = vpop.trf.xlu0
      %v3193 = vpop.trf.xlu0
      %v3194 = vpop.trf.xlu0
      %v3195 = vpop.trf.xlu0
      %v3196 = vpop.trf.xlu0
      %v3197 = vpop.trf.xlu0
      %3198 = vxpose.xlu0.c.b16.start [1/8] %v1081, 128
      %3199 = vxpose.xlu0.c.b16.cont [2/8] 0, 128
      %3200 = vxpose.xlu0.c.b16.cont [3/8] 0, 128
      %3201 = vxpose.xlu0.c.b16.cont [4/8] 0, 128
      %3202 = vxpose.xlu0.c.b16.cont [5/8] 0, 128
      %3203 = vxpose.xlu0.c.b16.cont [6/8] 0, 128
      %3204 = vxpose.xlu0.c.b16.cont [7/8] 0, 128
      %3205 = vxpose.xlu0.c.b16.end [8/8] 0, 128
      %v3206 = vpop.trf.xlu0
      %v3207 = vpop.trf.xlu0
      %v3208 = vpop.trf.xlu0
      %v3209 = vpop.trf.xlu0
      %v3210 = vpop.trf.xlu0
      %v3211 = vpop.trf.xlu0
      %v3212 = vpop.trf.xlu0
      %v3213 = vpop.trf.xlu0
      %3214 = vxpose.xlu0.c.b16.start [1/8] %v1082, 128
      %3215 = vxpose.xlu0.c.b16.cont [2/8] 0, 128
      %3216 = vxpose.xlu0.c.b16.cont [3/8] 0, 128
      %3217 = vxpose.xlu0.c.b16.cont [4/8] 0, 128
      %3218 = vxpose.xlu0.c.b16.cont [5/8] 0, 128
      %3219 = vxpose.xlu0.c.b16.cont [6/8] 0, 128
      %3220 = vxpose.xlu0.c.b16.cont [7/8] 0, 128
      %3221 = vxpose.xlu0.c.b16.end [8/8] 0, 128
      %v3222 = vpop.trf.xlu0
      %v3223 = vpop.trf.xlu0
      %v3224 = vpop.trf.xlu0
      %v3225 = vpop.trf.xlu0
      %v3226 = vpop.trf.xlu0
      %v3227 = vpop.trf.xlu0
      %v3228 = vpop.trf.xlu0
      %v3229 = vpop.trf.xlu0
      %3230 = vxpose.xlu0.c.b16.start [1/8] %v1083, 128
      %3231 = vxpose.xlu0.c.b16.cont [2/8] 0, 128
      %3232 = vxpose.xlu0.c.b16.cont [3/8] 0, 128
      %3233 = vxpose.xlu0.c.b16.cont [4/8] 0, 128
      %3234 = vxpose.xlu0.c.b16.cont [5/8] 0, 128
      %3235 = vxpose.xlu0.c.b16.cont [6/8] 0, 128
      %3236 = vxpose.xlu0.c.b16.cont [7/8] 0, 128
      %3237 = vxpose.xlu0.c.b16.end [8/8] 0, 128
      %v3238 = vpop.trf.xlu0
      %v3239 = vpop.trf.xlu0
      %v3240 = vpop.trf.xlu0
      %v3241 = vpop.trf.xlu0
      %v3242 = vpop.trf.xlu0
      %v3243 = vpop.trf.xlu0
      %v3244 = vpop.trf.xlu0
      %v3245 = vpop.trf.xlu0
      %3246 = vxpose.xlu0.c.b16.start [1/8] %v1084, 128
      %3247 = vxpose.xlu0.c.b16.cont [2/8] 0, 128
      %3248 = vxpose.xlu0.c.b16.cont [3/8] 0, 128
      %3249 = vxpose.xlu0.c.b16.cont [4/8] 0, 128
      %3250 = vxpose.xlu0.c.b16.cont [5/8] 0, 128
      %3251 = vxpose.xlu0.c.b16.cont [6/8] 0, 128
      %3252 = vxpose.xlu0.c.b16.cont [7/8] 0, 128
      %3253 = vxpose.xlu0.c.b16.end [8/8] 0, 128
      %v3254 = vpop.trf.xlu0
      %v3255 = vpop.trf.xlu0
      %v3256 = vpop.trf.xlu0
      %v3257 = vpop.trf.xlu0
      %v3258 = vpop.trf.xlu0
      %v3259 = vpop.trf.xlu0
      %v3260 = vpop.trf.xlu0
      %v3261 = vpop.trf.xlu0
      %3262 = vxpose.xlu0.c.b16.start [1/8] %v1085, 128
      %3263 = vxpose.xlu0.c.b16.cont [2/8] 0, 128
      %3264 = vxpose.xlu0.c.b16.cont [3/8] 0, 128
      %3265 = vxpose.xlu0.c.b16.cont [4/8] 0, 128
      %3266 = vxpose.xlu0.c.b16.cont [5/8] 0, 128
      %3267 = vxpose.xlu0.c.b16.cont [6/8] 0, 128
      %3268 = vxpose.xlu0.c.b16.cont [7/8] 0, 128
      %3269 = vxpose.xlu0.c.b16.end [8/8] 0, 128
      %v3270 = vpop.trf.xlu0
      %v3271 = vpop.trf.xlu0
      %v3272 = vpop.trf.xlu0
      %v3273 = vpop.trf.xlu0
      %v3274 = vpop.trf.xlu0
      %v3275 = vpop.trf.xlu0
      %v3276 = vpop.trf.xlu0
      %v3277 = vpop.trf.xlu0
      %3278 = vxpose.xlu0.c.b16.start [1/8] %v1086, 128
      %3279 = vxpose.xlu0.c.b16.cont [2/8] 0, 128
      %3280 = vxpose.xlu0.c.b16.cont [3/8] 0, 128
      %3281 = vxpose.xlu0.c.b16.cont [4/8] 0, 128
      %3282 = vxpose.xlu0.c.b16.cont [5/8] 0, 128
      %3283 = vxpose.xlu0.c.b16.cont [6/8] 0, 128
      %3284 = vxpose.xlu0.c.b16.cont [7/8] 0, 128
      %3285 = vxpose.xlu0.c.b16.end [8/8] 0, 128
      %v3286 = vpop.trf.xlu0
      %v3287 = vpop.trf.xlu0
      %v3288 = vpop.trf.xlu0
      %v3289 = vpop.trf.xlu0
      %v3290 = vpop.trf.xlu0
      %v3291 = vpop.trf.xlu0
      %v3292 = vpop.trf.xlu0
      %v3293 = vpop.trf.xlu0
      %3294 = vxpose.xlu0.c.b16.start [1/8] %v1087, 128
      %3295 = vxpose.xlu0.c.b16.cont [2/8] 0, 128
      %3296 = vxpose.xlu0.c.b16.cont [3/8] 0, 128
      %3297 = vxpose.xlu0.c.b16.cont [4/8] 0, 128
      %3298 = vxpose.xlu0.c.b16.cont [5/8] 0, 128
      %3299 = vxpose.xlu0.c.b16.cont [6/8] 0, 128
      %3300 = vxpose.xlu0.c.b16.cont [7/8] 0, 128
      %3301 = vxpose.xlu0.c.b16.end [8/8] 0, 128
      %v3302 = vpop.trf.xlu0
      %v3303 = vpop.trf.xlu0
      %v3304 = vpop.trf.xlu0
      %v3305 = vpop.trf.xlu0
      %v3306 = vpop.trf.xlu0
      %v3307 = vpop.trf.xlu0
      %v3308 = vpop.trf.xlu0
      %v3309 = vpop.trf.xlu0
      %3310 = vxpose.xlu0.c.b16.start [1/8] %v1088, 128
      %3311 = vxpose.xlu0.c.b16.cont [2/8] 0, 128
      %3312 = vxpose.xlu0.c.b16.cont [3/8] 0, 128
      %3313 = vxpose.xlu0.c.b16.cont [4/8] 0, 128
      %3314 = vxpose.xlu0.c.b16.cont [5/8] 0, 128
      %3315 = vxpose.xlu0.c.b16.cont [6/8] 0, 128
      %3316 = vxpose.xlu0.c.b16.cont [7/8] 0, 128
      %3317 = vxpose.xlu0.c.b16.end [8/8] 0, 128
      %v3318 = vpop.trf.xlu0
      %v3319 = vpop.trf.xlu0
      %v3320 = vpop.trf.xlu0
      %v3321 = vpop.trf.xlu0
      %v3322 = vpop.trf.xlu0
      %v3323 = vpop.trf.xlu0
      %v3324 = vpop.trf.xlu0
      %v3325 = vpop.trf.xlu0
      %3326 = vxpose.xlu0.c.b16.start [1/8] %v1089, 128
      %3327 = vxpose.xlu0.c.b16.cont [2/8] 0, 128
      %3328 = vxpose.xlu0.c.b16.cont [3/8] 0, 128
      %3329 = vxpose.xlu0.c.b16.cont [4/8] 0, 128
      %3330 = vxpose.xlu0.c.b16.cont [5/8] 0, 128
      %3331 = vxpose.xlu0.c.b16.cont [6/8] 0, 128
      %3332 = vxpose.xlu0.c.b16.cont [7/8] 0, 128
      %3333 = vxpose.xlu0.c.b16.end [8/8] 0, 128
      %v3334 = vpop.trf.xlu0
      %v3335 = vpop.trf.xlu0
      %v3336 = vpop.trf.xlu0
      %v3337 = vpop.trf.xlu0
      %v3338 = vpop.trf.xlu0
      %v3339 = vpop.trf.xlu0
      %v3340 = vpop.trf.xlu0
      %v3341 = vpop.trf.xlu0
      %3342 = vxpose.xlu0.c.b16.start [1/8] %v1090, 128
      %3343 = vxpose.xlu0.c.b16.cont [2/8] 0, 128
      %3344 = vxpose.xlu0.c.b16.cont [3/8] 0, 128
      %3345 = vxpose.xlu0.c.b16.cont [4/8] 0, 128
      %3346 = vxpose.xlu0.c.b16.cont [5/8] 0, 128
      %3347 = vxpose.xlu0.c.b16.cont [6/8] 0, 128
      %3348 = vxpose.xlu0.c.b16.cont [7/8] 0, 128
      %3349 = vxpose.xlu0.c.b16.end [8/8] 0, 128
      %v3350 = vpop.trf.xlu0
      %v3351 = vpop.trf.xlu0
      %v3352 = vpop.trf.xlu0
      %v3353 = vpop.trf.xlu0
      %v3354 = vpop.trf.xlu0
      %v3355 = vpop.trf.xlu0
      %v3356 = vpop.trf.xlu0
      %v3357 = vpop.trf.xlu0
      %3358 = vxpose.xlu0.c.b16.start [1/8] %v1091, 128
      %3359 = vxpose.xlu0.c.b16.cont [2/8] 0, 128
      %3360 = vxpose.xlu0.c.b16.cont [3/8] 0, 128
      %3361 = vxpose.xlu0.c.b16.cont [4/8] 0, 128
      %3362 = vxpose.xlu0.c.b16.cont [5/8] 0, 128
      %3363 = vxpose.xlu0.c.b16.cont [6/8] 0, 128
      %3364 = vxpose.xlu0.c.b16.cont [7/8] 0, 128
      %3365 = vxpose.xlu0.c.b16.end [8/8] 0, 128
      %v3366 = vpop.trf.xlu0
      %v3367 = vpop.trf.xlu0
      %v3368 = vpop.trf.xlu0
      %v3369 = vpop.trf.xlu0
      %v3370 = vpop.trf.xlu0
      %v3371 = vpop.trf.xlu0
      %v3372 = vpop.trf.xlu0
      %v3373 = vpop.trf.xlu0
      %3374 = vxpose.xlu0.c.b16.start [1/8] %v1092, 128
      %3375 = vxpose.xlu0.c.b16.cont [2/8] 0, 128
      %3376 = vxpose.xlu0.c.b16.cont [3/8] 0, 128
      %3377 = vxpose.xlu0.c.b16.cont [4/8] 0, 128
      %3378 = vxpose.xlu0.c.b16.cont [5/8] 0, 128
      %3379 = vxpose.xlu0.c.b16.cont [6/8] 0, 128
      %3380 = vxpose.xlu0.c.b16.cont [7/8] 0, 128
      %3381 = vxpose.xlu0.c.b16.end [8/8] 0, 128
      %v3382 = vpop.trf.xlu0
      %v3383 = vpop.trf.xlu0
      %v3384 = vpop.trf.xlu0
      %v3385 = vpop.trf.xlu0
      %v3386 = vpop.trf.xlu0
      %v3387 = vpop.trf.xlu0
      %v3388 = vpop.trf.xlu0
      %v3389 = vpop.trf.xlu0
      %3390 = vxpose.xlu0.c.b16.start [1/8] %v1093, 128
      %3391 = vxpose.xlu0.c.b16.cont [2/8] 0, 128
      %3392 = vxpose.xlu0.c.b16.cont [3/8] 0, 128
      %3393 = vxpose.xlu0.c.b16.cont [4/8] 0, 128
      %3394 = vxpose.xlu0.c.b16.cont [5/8] 0, 128
      %3395 = vxpose.xlu0.c.b16.cont [6/8] 0, 128
      %3396 = vxpose.xlu0.c.b16.cont [7/8] 0, 128
      %3397 = vxpose.xlu0.c.b16.end [8/8] 0, 128
      %v3398 = vpop.trf.xlu0
      %v3399 = vpop.trf.xlu0
      %v3400 = vpop.trf.xlu0
      %v3401 = vpop.trf.xlu0
      %v3402 = vpop.trf.xlu0
      %v3403 = vpop.trf.xlu0
      %v3404 = vpop.trf.xlu0
      %v3405 = vpop.trf.xlu0
      %v3406 = vcombine.low %v3158, %v3222
      %v3407 = vcombine.high %v3158, %v3222
      %v3409 = vunpack.c.l.s4 1983009808
      %v3410 = vunpack.c.0.s8 %v3409
      %v3411 = vlaneseq
      %v3412 = vshrl.u32 %v3411, 7
      %v3413 = vsub.s32 %v3410, %v3412
      %v3414 = vrot.slane %v3406, %v3413
      %v3416 = vunpack.c.l.s4 1983009808
      %v3417 = vunpack.c.0.s8 %v3416
      %v3418 = vlaneseq
      %v3419 = vshrl.u32 %v3418, 7
      %v3420 = vsub.s32 %v3417, %v3419
      %v3421 = vrot.slane %v3407, %v3420
      %v3422 = vcombine.low %v3190, %v3254
      %v3423 = vcombine.high %v3190, %v3254
      %v3425 = vunpack.c.l.s4 1983009808
      %v3426 = vunpack.c.0.s8 %v3425
      %v3427 = vlaneseq
      %v3428 = vshrl.u32 %v3427, 7
      %v3429 = vsub.s32 %v3426, %v3428
      %v3430 = vrot.slane %v3422, %v3429
      %v3432 = vunpack.c.l.s4 1983009808
      %v3433 = vunpack.c.0.s8 %v3432
      %v3434 = vlaneseq
      %v3435 = vshrl.u32 %v3434, 7
      %v3436 = vsub.s32 %v3433, %v3435
      %v3437 = vrot.slane %v3423, %v3436
      %v3438 = vcombine.low %v3286, %v3350
      %v3439 = vcombine.high %v3286, %v3350
      %v3441 = vunpack.c.l.s4 1983009808
      %v3442 = vunpack.c.0.s8 %v3441
      %v3443 = vlaneseq
      %v3444 = vshrl.u32 %v3443, 7
      %v3445 = vsub.s32 %v3442, %v3444
      %v3446 = vrot.slane %v3438, %v3445
      %v3448 = vunpack.c.l.s4 1983009808
      %v3449 = vunpack.c.0.s8 %v3448
      %v3450 = vlaneseq
      %v3451 = vshrl.u32 %v3450, 7
      %v3452 = vsub.s32 %v3449, %v3451
      %v3453 = vrot.slane %v3439, %v3452
      %v3454 = vcombine.low %v3318, %v3382
      %v3455 = vcombine.high %v3318, %v3382
      %v3457 = vunpack.c.l.s4 1983009808
      %v3458 = vunpack.c.0.s8 %v3457
      %v3459 = vlaneseq
      %v3460 = vshrl.u32 %v3459, 7
      %v3461 = vsub.s32 %v3458, %v3460
      %v3462 = vrot.slane %v3454, %v3461
      %v3464 = vunpack.c.l.s4 1983009808
      %v3465 = vunpack.c.0.s8 %v3464
      %v3466 = vlaneseq
      %v3467 = vshrl.u32 %v3466, 7
      %v3468 = vsub.s32 %v3465, %v3467
      %v3469 = vrot.slane %v3455, %v3468
      %v3470 = vcombine.low %v3414, %v3430
      %v3471 = vcombine.high %v3414, %v3430
      %v3473 = vunpack.c.l.s4 1934713408
      %v3474 = vunpack.c.0.s8 %v3473
      %v3475 = vlaneseq
      %v3476 = vshrl.u32 %v3475, 7
      %v3477 = vsub.s32 %v3474, %v3476
      %v3478 = vrot.slane %v3470, %v3477
      %v3480 = vunpack.c.l.s4 1934713408
      %v3481 = vunpack.c.0.s8 %v3480
      %v3482 = vlaneseq
      %v3483 = vshrl.u32 %v3482, 7
      %v3484 = vsub.s32 %v3481, %v3483
      %v3485 = vrot.slane %v3471, %v3484
      %v3486 = vcombine.low %v3421, %v3437
      %v3487 = vcombine.high %v3421, %v3437
      %v3489 = vunpack.c.l.s4 1934713408
      %v3490 = vunpack.c.0.s8 %v3489
      %v3491 = vlaneseq
      %v3492 = vshrl.u32 %v3491, 7
      %v3493 = vsub.s32 %v3490, %v3492
      %v3494 = vrot.slane %v3486, %v3493
      %v3496 = vunpack.c.l.s4 1934713408
      %v3497 = vunpack.c.0.s8 %v3496
      %v3498 = vlaneseq
      %v3499 = vshrl.u32 %v3498, 7
      %v3500 = vsub.s32 %v3497, %v3499
      %v3501 = vrot.slane %v3487, %v3500
      %v3502 = vcombine.low %v3446, %v3462
      %v3503 = vcombine.high %v3446, %v3462
      %v3505 = vunpack.c.l.s4 1934713408
      %v3506 = vunpack.c.0.s8 %v3505
      %v3507 = vlaneseq
      %v3508 = vshrl.u32 %v3507, 7
      %v3509 = vsub.s32 %v3506, %v3508
      %v3510 = vrot.slane %v3502, %v3509
      %v3512 = vunpack.c.l.s4 1934713408
      %v3513 = vunpack.c.0.s8 %v3512
      %v3514 = vlaneseq
      %v3515 = vshrl.u32 %v3514, 7
      %v3516 = vsub.s32 %v3513, %v3515
      %v3517 = vrot.slane %v3503, %v3516
      %v3518 = vcombine.low %v3453, %v3469
      %v3519 = vcombine.high %v3453, %v3469
      %v3521 = vunpack.c.l.s4 1934713408
      %v3522 = vunpack.c.0.s8 %v3521
      %v3523 = vlaneseq
      %v3524 = vshrl.u32 %v3523, 7
      %v3525 = vsub.s32 %v3522, %v3524
      %v3526 = vrot.slane %v3518, %v3525
      %v3528 = vunpack.c.l.s4 1934713408
      %v3529 = vunpack.c.0.s8 %v3528
      %v3530 = vlaneseq
      %v3531 = vshrl.u32 %v3530, 7
      %v3532 = vsub.s32 %v3529, %v3531
      %v3533 = vrot.slane %v3519, %v3532
      %v3534 = vcombine.low %v3478, %v3510
      %v3535 = vcombine.high %v3478, %v3510
      %v3536 = vcombine.low %v3485, %v3517
      %v3537 = vcombine.high %v3485, %v3517
      %v3538 = vcombine.low %v3494, %v3526
      %v3539 = vcombine.high %v3494, %v3526
      %v3540 = vcombine.low %v3501, %v3533
      %v3541 = vcombine.high %v3501, %v3533
      %v3542 = vcombine.low %v3174, %v3238
      %v3543 = vcombine.high %v3174, %v3238
      %v3545 = vunpack.c.l.s4 1983009808
      %v3546 = vunpack.c.0.s8 %v3545
      %v3547 = vlaneseq
      %v3548 = vshrl.u32 %v3547, 7
      %v3549 = vsub.s32 %v3546, %v3548
      %v3550 = vrot.slane %v3542, %v3549
      %v3552 = vunpack.c.l.s4 1983009808
      %v3553 = vunpack.c.0.s8 %v3552
      %v3554 = vlaneseq
      %v3555 = vshrl.u32 %v3554, 7
      %v3556 = vsub.s32 %v3553, %v3555
      %v3557 = vrot.slane %v3543, %v3556
      %v3558 = vcombine.low %v3206, %v3270
      %v3559 = vcombine.high %v3206, %v3270
      %v3561 = vunpack.c.l.s4 1983009808
      %v3562 = vunpack.c.0.s8 %v3561
      %v3563 = vlaneseq
      %v3564 = vshrl.u32 %v3563, 7
      %v3565 = vsub.s32 %v3562, %v3564
      %v3566 = vrot.slane %v3558, %v3565
      %v3568 = vunpack.c.l.s4 1983009808
      %v3569 = vunpack.c.0.s8 %v3568
      %v3570 = vlaneseq
      %v3571 = vshrl.u32 %v3570, 7
      %v3572 = vsub.s32 %v3569, %v3571
      %v3573 = vrot.slane %v3559, %v3572
      %v3574 = vcombine.low %v3302, %v3366
      %v3575 = vcombine.high %v3302, %v3366
      %v3577 = vunpack.c.l.s4 1983009808
      %v3578 = vunpack.c.0.s8 %v3577
      %v3579 = vlaneseq
      %v3580 = vshrl.u32 %v3579, 7
      %v3581 = vsub.s32 %v3578, %v3580
      %v3582 = vrot.slane %v3574, %v3581
      %v3584 = vunpack.c.l.s4 1983009808
      %v3585 = vunpack.c.0.s8 %v3584
      %v3586 = vlaneseq
      %v3587 = vshrl.u32 %v3586, 7
      %v3588 = vsub.s32 %v3585, %v3587
      %v3589 = vrot.slane %v3575, %v3588
      %v3590 = vcombine.low %v3334, %v3398
      %v3591 = vcombine.high %v3334, %v3398
      %v3593 = vunpack.c.l.s4 1983009808
      %v3594 = vunpack.c.0.s8 %v3593
      %v3595 = vlaneseq
      %v3596 = vshrl.u32 %v3595, 7
      %v3597 = vsub.s32 %v3594, %v3596
      %v3598 = vrot.slane %v3590, %v3597
      %v3600 = vunpack.c.l.s4 1983009808
      %v3601 = vunpack.c.0.s8 %v3600
      %v3602 = vlaneseq
      %v3603 = vshrl.u32 %v3602, 7
      %v3604 = vsub.s32 %v3601, %v3603
      %v3605 = vrot.slane %v3591, %v3604
      %v3606 = vcombine.low %v3550, %v3566
      %v3607 = vcombine.high %v3550, %v3566
      %v3609 = vunpack.c.l.s4 1934713408
      %v3610 = vunpack.c.0.s8 %v3609
      %v3611 = vlaneseq
      %v3612 = vshrl.u32 %v3611, 7
      %v3613 = vsub.s32 %v3610, %v3612
      %v3614 = vrot.slane %v3606, %v3613
      %v3616 = vunpack.c.l.s4 1934713408
      %v3617 = vunpack.c.0.s8 %v3616
      %v3618 = vlaneseq
      %v3619 = vshrl.u32 %v3618, 7
      %v3620 = vsub.s32 %v3617, %v3619
      %v3621 = vrot.slane %v3607, %v3620
      %v3622 = vcombine.low %v3557, %v3573
      %v3623 = vcombine.high %v3557, %v3573
      %v3625 = vunpack.c.l.s4 1934713408
      %v3626 = vunpack.c.0.s8 %v3625
      %v3627 = vlaneseq
      %v3628 = vshrl.u32 %v3627, 7
      %v3629 = vsub.s32 %v3626, %v3628
      %v3630 = vrot.slane %v3622, %v3629
      %v3632 = vunpack.c.l.s4 1934713408
      %v3633 = vunpack.c.0.s8 %v3632
      %v3634 = vlaneseq
      %v3635 = vshrl.u32 %v3634, 7
      %v3636 = vsub.s32 %v3633, %v3635
      %v3637 = vrot.slane %v3623, %v3636
      %v3638 = vcombine.low %v3582, %v3598
      %v3639 = vcombine.high %v3582, %v3598
      %v3641 = vunpack.c.l.s4 1934713408
      %v3642 = vunpack.c.0.s8 %v3641
      %v3643 = vlaneseq
      %v3644 = vshrl.u32 %v3643, 7
      %v3645 = vsub.s32 %v3642, %v3644
      %v3646 = vrot.slane %v3638, %v3645
      %v3648 = vunpack.c.l.s4 1934713408
      %v3649 = vunpack.c.0.s8 %v3648
      %v3650 = vlaneseq
      %v3651 = vshrl.u32 %v3650, 7
      %v3652 = vsub.s32 %v3649, %v3651
      %v3653 = vrot.slane %v3639, %v3652
      %v3654 = vcombine.low %v3589, %v3605
      %v3655 = vcombine.high %v3589, %v3605
      %v3657 = vunpack.c.l.s4 1934713408
      %v3658 = vunpack.c.0.s8 %v3657
      %v3659 = vlaneseq
      %v3660 = vshrl.u32 %v3659, 7
      %v3661 = vsub.s32 %v3658, %v3660
      %v3662 = vrot.slane %v3654, %v3661
      %v3664 = vunpack.c.l.s4 1934713408
      %v3665 = vunpack.c.0.s8 %v3664
      %v3666 = vlaneseq
      %v3667 = vshrl.u32 %v3666, 7
      %v3668 = vsub.s32 %v3665, %v3667
      %v3669 = vrot.slane %v3655, %v3668
      %v3670 = vcombine.low %v3614, %v3646
      %v3671 = vcombine.high %v3614, %v3646
      %v3672 = vcombine.low %v3621, %v3653
      %v3673 = vcombine.high %v3621, %v3653
      %v3674 = vcombine.low %v3630, %v3662
      %v3675 = vcombine.high %v3630, %v3662
      %v3676 = vcombine.low %v3637, %v3669
      %v3677 = vcombine.high %v3637, %v3669
      %v3678 = vcombine.low %v3159, %v3223
      %v3679 = vcombine.high %v3159, %v3223
      %v3681 = vunpack.c.l.s4 1983009808
      %v3682 = vunpack.c.0.s8 %v3681
      %v3683 = vlaneseq
      %v3684 = vshrl.u32 %v3683, 7
      %v3685 = vsub.s32 %v3682, %v3684
      %v3686 = vrot.slane %v3678, %v3685
      %v3688 = vunpack.c.l.s4 1983009808
      %v3689 = vunpack.c.0.s8 %v3688
      %v3690 = vlaneseq
      %v3691 = vshrl.u32 %v3690, 7
      %v3692 = vsub.s32 %v3689, %v3691
      %v3693 = vrot.slane %v3679, %v3692
      %v3694 = vcombine.low %v3191, %v3255
      %v3695 = vcombine.high %v3191, %v3255
      %v3697 = vunpack.c.l.s4 1983009808
      %v3698 = vunpack.c.0.s8 %v3697
      %v3699 = vlaneseq
      %v3700 = vshrl.u32 %v3699, 7
      %v3701 = vsub.s32 %v3698, %v3700
      %v3702 = vrot.slane %v3694, %v3701
      %v3704 = vunpack.c.l.s4 1983009808
      %v3705 = vunpack.c.0.s8 %v3704
      %v3706 = vlaneseq
      %v3707 = vshrl.u32 %v3706, 7
      %v3708 = vsub.s32 %v3705, %v3707
      %v3709 = vrot.slane %v3695, %v3708
      %v3710 = vcombine.low %v3287, %v3351
      %v3711 = vcombine.high %v3287, %v3351
      %v3713 = vunpack.c.l.s4 1983009808
      %v3714 = vunpack.c.0.s8 %v3713
      %v3715 = vlaneseq
      %v3716 = vshrl.u32 %v3715, 7
      %v3717 = vsub.s32 %v3714, %v3716
      %v3718 = vrot.slane %v3710, %v3717
      %v3720 = vunpack.c.l.s4 1983009808
      %v3721 = vunpack.c.0.s8 %v3720
      %v3722 = vlaneseq
      %v3723 = vshrl.u32 %v3722, 7
      %v3724 = vsub.s32 %v3721, %v3723
      %v3725 = vrot.slane %v3711, %v3724
      %v3726 = vcombine.low %v3319, %v3383
      %v3727 = vcombine.high %v3319, %v3383
      %v3729 = vunpack.c.l.s4 1983009808
      %v3730 = vunpack.c.0.s8 %v3729
      %v3731 = vlaneseq
      %v3732 = vshrl.u32 %v3731, 7
      %v3733 = vsub.s32 %v3730, %v3732
      %v3734 = vrot.slane %v3726, %v3733
      %v3736 = vunpack.c.l.s4 1983009808
      %v3737 = vunpack.c.0.s8 %v3736
      %v3738 = vlaneseq
      %v3739 = vshrl.u32 %v3738, 7
      %v3740 = vsub.s32 %v3737, %v3739
      %v3741 = vrot.slane %v3727, %v3740
      %v3742 = vcombine.low %v3686, %v3702
      %v3743 = vcombine.high %v3686, %v3702
      %v3745 = vunpack.c.l.s4 1934713408
      %v3746 = vunpack.c.0.s8 %v3745
      %v3747 = vlaneseq
      %v3748 = vshrl.u32 %v3747, 7
      %v3749 = vsub.s32 %v3746, %v3748
      %v3750 = vrot.slane %v3742, %v3749
      %v3752 = vunpack.c.l.s4 1934713408
      %v3753 = vunpack.c.0.s8 %v3752
      %v3754 = vlaneseq
      %v3755 = vshrl.u32 %v3754, 7
      %v3756 = vsub.s32 %v3753, %v3755
      %v3757 = vrot.slane %v3743, %v3756
      %v3758 = vcombine.low %v3693, %v3709
      %v3759 = vcombine.high %v3693, %v3709
      %v3761 = vunpack.c.l.s4 1934713408
      %v3762 = vunpack.c.0.s8 %v3761
      %v3763 = vlaneseq
      %v3764 = vshrl.u32 %v3763, 7
      %v3765 = vsub.s32 %v3762, %v3764
      %v3766 = vrot.slane %v3758, %v3765
      %v3768 = vunpack.c.l.s4 1934713408
      %v3769 = vunpack.c.0.s8 %v3768
      %v3770 = vlaneseq
      %v3771 = vshrl.u32 %v3770, 7
      %v3772 = vsub.s32 %v3769, %v3771
      %v3773 = vrot.slane %v3759, %v3772
      %v3774 = vcombine.low %v3718, %v3734
      %v3775 = vcombine.high %v3718, %v3734
      %v3777 = vunpack.c.l.s4 1934713408
      %v3778 = vunpack.c.0.s8 %v3777
      %v3779 = vlaneseq
      %v3780 = vshrl.u32 %v3779, 7
      %v3781 = vsub.s32 %v3778, %v3780
      %v3782 = vrot.slane %v3774, %v3781
      %v3784 = vunpack.c.l.s4 1934713408
      %v3785 = vunpack.c.0.s8 %v3784
      %v3786 = vlaneseq
      %v3787 = vshrl.u32 %v3786, 7
      %v3788 = vsub.s32 %v3785, %v3787
      %v3789 = vrot.slane %v3775, %v3788
      %v3790 = vcombine.low %v3725, %v3741
      %v3791 = vcombine.high %v3725, %v3741
      %v3793 = vunpack.c.l.s4 1934713408
      %v3794 = vunpack.c.0.s8 %v3793
      %v3795 = vlaneseq
      %v3796 = vshrl.u32 %v3795, 7
      %v3797 = vsub.s32 %v3794, %v3796
      %v3798 = vrot.slane %v3790, %v3797
      %v3800 = vunpack.c.l.s4 1934713408
      %v3801 = vunpack.c.0.s8 %v3800
      %v3802 = vlaneseq
      %v3803 = vshrl.u32 %v3802, 7
      %v3804 = vsub.s32 %v3801, %v3803
      %v3805 = vrot.slane %v3791, %v3804
      %v3806 = vcombine.low %v3750, %v3782
      %v3807 = vcombine.high %v3750, %v3782
      %v3808 = vcombine.low %v3757, %v3789
      %v3809 = vcombine.high %v3757, %v3789
      %v3810 = vcombine.low %v3766, %v3798
      %v3811 = vcombine.high %v3766, %v3798
      %v3812 = vcombine.low %v3773, %v3805
      %v3813 = vcombine.high %v3773, %v3805
      %v3814 = vcombine.low %v3175, %v3239
      %v3815 = vcombine.high %v3175, %v3239
      %v3817 = vunpack.c.l.s4 1983009808
      %v3818 = vunpack.c.0.s8 %v3817
      %v3819 = vlaneseq
      %v3820 = vshrl.u32 %v3819, 7
      %v3821 = vsub.s32 %v3818, %v3820
      %v3822 = vrot.slane %v3814, %v3821
      %v3824 = vunpack.c.l.s4 1983009808
      %v3825 = vunpack.c.0.s8 %v3824
      %v3826 = vlaneseq
      %v3827 = vshrl.u32 %v3826, 7
      %v3828 = vsub.s32 %v3825, %v3827
      %v3829 = vrot.slane %v3815, %v3828
      %v3830 = vcombine.low %v3207, %v3271
      %v3831 = vcombine.high %v3207, %v3271
      %v3833 = vunpack.c.l.s4 1983009808
      %v3834 = vunpack.c.0.s8 %v3833
      %v3835 = vlaneseq
      %v3836 = vshrl.u32 %v3835, 7
      %v3837 = vsub.s32 %v3834, %v3836
      %v3838 = vrot.slane %v3830, %v3837
      %v3840 = vunpack.c.l.s4 1983009808
      %v3841 = vunpack.c.0.s8 %v3840
      %v3842 = vlaneseq
      %v3843 = vshrl.u32 %v3842, 7
      %v3844 = vsub.s32 %v3841, %v3843
      %v3845 = vrot.slane %v3831, %v3844
      %v3846 = vcombine.low %v3303, %v3367
      %v3847 = vcombine.high %v3303, %v3367
      %v3849 = vunpack.c.l.s4 1983009808
      %v3850 = vunpack.c.0.s8 %v3849
      %v3851 = vlaneseq
      %v3852 = vshrl.u32 %v3851, 7
      %v3853 = vsub.s32 %v3850, %v3852
      %v3854 = vrot.slane %v3846, %v3853
      %v3856 = vunpack.c.l.s4 1983009808
      %v3857 = vunpack.c.0.s8 %v3856
      %v3858 = vlaneseq
      %v3859 = vshrl.u32 %v3858, 7
      %v3860 = vsub.s32 %v3857, %v3859
      %v3861 = vrot.slane %v3847, %v3860
      %v3862 = vcombine.low %v3335, %v3399
      %v3863 = vcombine.high %v3335, %v3399
      %v3865 = vunpack.c.l.s4 1983009808
      %v3866 = vunpack.c.0.s8 %v3865
      %v3867 = vlaneseq
      %v3868 = vshrl.u32 %v3867, 7
      %v3869 = vsub.s32 %v3866, %v3868
      %v3870 = vrot.slane %v3862, %v3869
      %v3872 = vunpack.c.l.s4 1983009808
      %v3873 = vunpack.c.0.s8 %v3872
      %v3874 = vlaneseq
      %v3875 = vshrl.u32 %v3874, 7
      %v3876 = vsub.s32 %v3873, %v3875
      %v3877 = vrot.slane %v3863, %v3876
      %v3878 = vcombine.low %v3822, %v3838
      %v3879 = vcombine.high %v3822, %v3838
      %v3881 = vunpack.c.l.s4 1934713408
      %v3882 = vunpack.c.0.s8 %v3881
      %v3883 = vlaneseq
      %v3884 = vshrl.u32 %v3883, 7
      %v3885 = vsub.s32 %v3882, %v3884
      %v3886 = vrot.slane %v3878, %v3885
      %v3888 = vunpack.c.l.s4 1934713408
      %v3889 = vunpack.c.0.s8 %v3888
      %v3890 = vlaneseq
      %v3891 = vshrl.u32 %v3890, 7
      %v3892 = vsub.s32 %v3889, %v3891
      %v3893 = vrot.slane %v3879, %v3892
      %v3894 = vcombine.low %v3829, %v3845
      %v3895 = vcombine.high %v3829, %v3845
      %v3897 = vunpack.c.l.s4 1934713408
      %v3898 = vunpack.c.0.s8 %v3897
      %v3899 = vlaneseq
      %v3900 = vshrl.u32 %v3899, 7
      %v3901 = vsub.s32 %v3898, %v3900
      %v3902 = vrot.slane %v3894, %v3901
      %v3904 = vunpack.c.l.s4 1934713408
      %v3905 = vunpack.c.0.s8 %v3904
      %v3906 = vlaneseq
      %v3907 = vshrl.u32 %v3906, 7
      %v3908 = vsub.s32 %v3905, %v3907
      %v3909 = vrot.slane %v3895, %v3908
      %v3910 = vcombine.low %v3854, %v3870
      %v3911 = vcombine.high %v3854, %v3870
      %v3913 = vunpack.c.l.s4 1934713408
      %v3914 = vunpack.c.0.s8 %v3913
      %v3915 = vlaneseq
      %v3916 = vshrl.u32 %v3915, 7
      %v3917 = vsub.s32 %v3914, %v3916
      %v3918 = vrot.slane %v3910, %v3917
      %v3920 = vunpack.c.l.s4 1934713408
      %v3921 = vunpack.c.0.s8 %v3920
      %v3922 = vlaneseq
      %v3923 = vshrl.u32 %v3922, 7
      %v3924 = vsub.s32 %v3921, %v3923
      %v3925 = vrot.slane %v3911, %v3924
      %v3926 = vcombine.low %v3861, %v3877
      %v3927 = vcombine.high %v3861, %v3877
      %v3929 = vunpack.c.l.s4 1934713408
      %v3930 = vunpack.c.0.s8 %v3929
      %v3931 = vlaneseq
      %v3932 = vshrl.u32 %v3931, 7
      %v3933 = vsub.s32 %v3930, %v3932
      %v3934 = vrot.slane %v3926, %v3933
      %v3936 = vunpack.c.l.s4 1934713408
      %v3937 = vunpack.c.0.s8 %v3936
      %v3938 = vlaneseq
      %v3939 = vshrl.u32 %v3938, 7
      %v3940 = vsub.s32 %v3937, %v3939
      %v3941 = vrot.slane %v3927, %v3940
      %v3942 = vcombine.low %v3886, %v3918
      %v3943 = vcombine.high %v3886, %v3918
      %v3944 = vcombine.low %v3893, %v3925
      %v3945 = vcombine.high %v3893, %v3925
      %v3946 = vcombine.low %v3902, %v3934
      %v3947 = vcombine.high %v3902, %v3934
      %v3948 = vcombine.low %v3909, %v3941
      %v3949 = vcombine.high %v3909, %v3941
      %v3952 = vpack.i.b16 %v3670, %v3534
      %v3954 = vshrl.u32 %v3534, 16
      %v3955 = vshrl.u32 %v3670, 16
      %v3956 = vpack.i.b16 %v3955, %v3954
      %v3960 = vpack.i.b16 %v3671, %v3535
      %v3962 = vshrl.u32 %v3535, 16
      %v3963 = vshrl.u32 %v3671, 16
      %v3964 = vpack.i.b16 %v3963, %v3962
      %v3968 = vpack.i.b16 %v3672, %v3536
      %v3970 = vshrl.u32 %v3536, 16
      %v3971 = vshrl.u32 %v3672, 16
      %v3972 = vpack.i.b16 %v3971, %v3970
      %v3976 = vpack.i.b16 %v3673, %v3537
      %v3978 = vshrl.u32 %v3537, 16
      %v3979 = vshrl.u32 %v3673, 16
      %v3980 = vpack.i.b16 %v3979, %v3978
      %v3984 = vpack.i.b16 %v3674, %v3538
      %v3986 = vshrl.u32 %v3538, 16
      %v3987 = vshrl.u32 %v3674, 16
      %v3988 = vpack.i.b16 %v3987, %v3986
      %v3992 = vpack.i.b16 %v3675, %v3539
      %v3994 = vshrl.u32 %v3539, 16
      %v3995 = vshrl.u32 %v3675, 16
      %v3996 = vpack.i.b16 %v3995, %v3994
      %v4000 = vpack.i.b16 %v3676, %v3540
      %v4002 = vshrl.u32 %v3540, 16
      %v4003 = vshrl.u32 %v3676, 16
      %v4004 = vpack.i.b16 %v4003, %v4002
      %v4008 = vpack.i.b16 %v3677, %v3541
      %v4010 = vshrl.u32 %v3541, 16
      %v4011 = vshrl.u32 %v3677, 16
      %v4012 = vpack.i.b16 %v4011, %v4010
      %v4016 = vpack.i.b16 %v3942, %v3806
      %v4018 = vshrl.u32 %v3806, 16
      %v4019 = vshrl.u32 %v3942, 16
      %v4020 = vpack.i.b16 %v4019, %v4018
      %v4024 = vpack.i.b16 %v3943, %v3807
      %v4026 = vshrl.u32 %v3807, 16
      %v4027 = vshrl.u32 %v3943, 16
      %v4028 = vpack.i.b16 %v4027, %v4026
      %v4032 = vpack.i.b16 %v3944, %v3808
      %v4034 = vshrl.u32 %v3808, 16
      %v4035 = vshrl.u32 %v3944, 16
      %v4036 = vpack.i.b16 %v4035, %v4034
      %v4040 = vpack.i.b16 %v3945, %v3809
      %v4042 = vshrl.u32 %v3809, 16
      %v4043 = vshrl.u32 %v3945, 16
      %v4044 = vpack.i.b16 %v4043, %v4042
      %v4048 = vpack.i.b16 %v3946, %v3810
      %v4050 = vshrl.u32 %v3810, 16
      %v4051 = vshrl.u32 %v3946, 16
      %v4052 = vpack.i.b16 %v4051, %v4050
      %v4056 = vpack.i.b16 %v3947, %v3811
      %v4058 = vshrl.u32 %v3811, 16
      %v4059 = vshrl.u32 %v3947, 16
      %v4060 = vpack.i.b16 %v4059, %v4058
      %v4064 = vpack.i.b16 %v3948, %v3812
      %v4066 = vshrl.u32 %v3812, 16
      %v4067 = vshrl.u32 %v3948, 16
      %v4068 = vpack.i.b16 %v4067, %v4066
      %v4072 = vpack.i.b16 %v3949, %v3813
      %v4074 = vshrl.u32 %v3813, 16
      %v4075 = vshrl.u32 %v3949, 16
      %v4076 = vpack.i.b16 %v4075, %v4074
      %4078 = vxpose.xlu0.c.b16.start [1/8] %v3952, 128
      %4079 = vxpose.xlu0.c.b16.cont [2/8] 0, 128
      %4080 = vxpose.xlu0.c.b16.cont [3/8] 0, 128
      %4081 = vxpose.xlu0.c.b16.cont [4/8] 0, 128
      %4082 = vxpose.xlu0.c.b16.cont [5/8] 0, 128
      %4083 = vxpose.xlu0.c.b16.cont [6/8] 0, 128
      %4084 = vxpose.xlu0.c.b16.cont [7/8] 0, 128
      %4085 = vxpose.xlu0.c.b16.end [8/8] 0, 128
      %v4086 = vpop.trf.xlu0
      %v4087 = vpop.trf.xlu0
      %v4088 = vpop.trf.xlu0
      %v4089 = vpop.trf.xlu0
      %v4090 = vpop.trf.xlu0
      %v4091 = vpop.trf.xlu0
      %v4092 = vpop.trf.xlu0
      %v4093 = vpop.trf.xlu0
      %4094 = vxpose.xlu0.c.b16.start [1/8] %v3956, 128
      %4095 = vxpose.xlu0.c.b16.cont [2/8] 0, 128
      %4096 = vxpose.xlu0.c.b16.cont [3/8] 0, 128
      %4097 = vxpose.xlu0.c.b16.cont [4/8] 0, 128
      %4098 = vxpose.xlu0.c.b16.cont [5/8] 0, 128
      %4099 = vxpose.xlu0.c.b16.cont [6/8] 0, 128
      %4100 = vxpose.xlu0.c.b16.cont [7/8] 0, 128
      %4101 = vxpose.xlu0.c.b16.end [8/8] 0, 128
      %v4102 = vpop.trf.xlu0
      %v4103 = vpop.trf.xlu0
      %v4104 = vpop.trf.xlu0
      %v4105 = vpop.trf.xlu0
      %v4106 = vpop.trf.xlu0
      %v4107 = vpop.trf.xlu0
      %v4108 = vpop.trf.xlu0
      %v4109 = vpop.trf.xlu0
      %4110 = vxpose.xlu0.c.b16.start [1/8] %v3960, 128
      %4111 = vxpose.xlu0.c.b16.cont [2/8] 0, 128
      %4112 = vxpose.xlu0.c.b16.cont [3/8] 0, 128
      %4113 = vxpose.xlu0.c.b16.cont [4/8] 0, 128
      %4114 = vxpose.xlu0.c.b16.cont [5/8] 0, 128
      %4115 = vxpose.xlu0.c.b16.cont [6/8] 0, 128
      %4116 = vxpose.xlu0.c.b16.cont [7/8] 0, 128
      %4117 = vxpose.xlu0.c.b16.end [8/8] 0, 128
      %v4118 = vpop.trf.xlu0
      %v4119 = vpop.trf.xlu0
      %v4120 = vpop.trf.xlu0
      %v4121 = vpop.trf.xlu0
      %v4122 = vpop.trf.xlu0
      %v4123 = vpop.trf.xlu0
      %v4124 = vpop.trf.xlu0
      %v4125 = vpop.trf.xlu0
      %4126 = vxpose.xlu0.c.b16.start [1/8] %v3964, 128
      %4127 = vxpose.xlu0.c.b16.cont [2/8] 0, 128
      %4128 = vxpose.xlu0.c.b16.cont [3/8] 0, 128
      %4129 = vxpose.xlu0.c.b16.cont [4/8] 0, 128
      %4130 = vxpose.xlu0.c.b16.cont [5/8] 0, 128
      %4131 = vxpose.xlu0.c.b16.cont [6/8] 0, 128
      %4132 = vxpose.xlu0.c.b16.cont [7/8] 0, 128
      %4133 = vxpose.xlu0.c.b16.end [8/8] 0, 128
      %v4134 = vpop.trf.xlu0
      %v4135 = vpop.trf.xlu0
      %v4136 = vpop.trf.xlu0
      %v4137 = vpop.trf.xlu0
      %v4138 = vpop.trf.xlu0
      %v4139 = vpop.trf.xlu0
      %v4140 = vpop.trf.xlu0
      %v4141 = vpop.trf.xlu0
      %4142 = vxpose.xlu0.c.b16.start [1/8] %v3968, 128
      %4143 = vxpose.xlu0.c.b16.cont [2/8] 0, 128
      %4144 = vxpose.xlu0.c.b16.cont [3/8] 0, 128
      %4145 = vxpose.xlu0.c.b16.cont [4/8] 0, 128
      %4146 = vxpose.xlu0.c.b16.cont [5/8] 0, 128
      %4147 = vxpose.xlu0.c.b16.cont [6/8] 0, 128
      %4148 = vxpose.xlu0.c.b16.cont [7/8] 0, 128
      %4149 = vxpose.xlu0.c.b16.end [8/8] 0, 128
      %v4150 = vpop.trf.xlu0
      %v4151 = vpop.trf.xlu0
      %v4152 = vpop.trf.xlu0
      %v4153 = vpop.trf.xlu0
      %v4154 = vpop.trf.xlu0
      %v4155 = vpop.trf.xlu0
      %v4156 = vpop.trf.xlu0
      %v4157 = vpop.trf.xlu0
      %4158 = vxpose.xlu0.c.b16.start [1/8] %v3972, 128
      %4159 = vxpose.xlu0.c.b16.cont [2/8] 0, 128
      %4160 = vxpose.xlu0.c.b16.cont [3/8] 0, 128
      %4161 = vxpose.xlu0.c.b16.cont [4/8] 0, 128
      %4162 = vxpose.xlu0.c.b16.cont [5/8] 0, 128
      %4163 = vxpose.xlu0.c.b16.cont [6/8] 0, 128
      %4164 = vxpose.xlu0.c.b16.cont [7/8] 0, 128
      %4165 = vxpose.xlu0.c.b16.end [8/8] 0, 128
      %v4166 = vpop.trf.xlu0
      %v4167 = vpop.trf.xlu0
      %v4168 = vpop.trf.xlu0
      %v4169 = vpop.trf.xlu0
      %v4170 = vpop.trf.xlu0
      %v4171 = vpop.trf.xlu0
      %v4172 = vpop.trf.xlu0
      %v4173 = vpop.trf.xlu0
      %4174 = vxpose.xlu0.c.b16.start [1/8] %v3976, 128
      %4175 = vxpose.xlu0.c.b16.cont [2/8] 0, 128
      %4176 = vxpose.xlu0.c.b16.cont [3/8] 0, 128
      %4177 = vxpose.xlu0.c.b16.cont [4/8] 0, 128
      %4178 = vxpose.xlu0.c.b16.cont [5/8] 0, 128
      %4179 = vxpose.xlu0.c.b16.cont [6/8] 0, 128
      %4180 = vxpose.xlu0.c.b16.cont [7/8] 0, 128
      %4181 = vxpose.xlu0.c.b16.end [8/8] 0, 128
      %v4182 = vpop.trf.xlu0
      %v4183 = vpop.trf.xlu0
      %v4184 = vpop.trf.xlu0
      %v4185 = vpop.trf.xlu0
      %v4186 = vpop.trf.xlu0
      %v4187 = vpop.trf.xlu0
      %v4188 = vpop.trf.xlu0
      %v4189 = vpop.trf.xlu0
      %4190 = vxpose.xlu0.c.b16.start [1/8] %v3980, 128
      %4191 = vxpose.xlu0.c.b16.cont [2/8] 0, 128
      %4192 = vxpose.xlu0.c.b16.cont [3/8] 0, 128
      %4193 = vxpose.xlu0.c.b16.cont [4/8] 0, 128
      %4194 = vxpose.xlu0.c.b16.cont [5/8] 0, 128
      %4195 = vxpose.xlu0.c.b16.cont [6/8] 0, 128
      %4196 = vxpose.xlu0.c.b16.cont [7/8] 0, 128
      %4197 = vxpose.xlu0.c.b16.end [8/8] 0, 128
      %v4198 = vpop.trf.xlu0
      %v4199 = vpop.trf.xlu0
      %v4200 = vpop.trf.xlu0
      %v4201 = vpop.trf.xlu0
      %v4202 = vpop.trf.xlu0
      %v4203 = vpop.trf.xlu0
      %v4204 = vpop.trf.xlu0
      %v4205 = vpop.trf.xlu0
      %4206 = vxpose.xlu0.c.b16.start [1/8] %v3984, 128
      %4207 = vxpose.xlu0.c.b16.cont [2/8] 0, 128
      %4208 = vxpose.xlu0.c.b16.cont [3/8] 0, 128
      %4209 = vxpose.xlu0.c.b16.cont [4/8] 0, 128
      %4210 = vxpose.xlu0.c.b16.cont [5/8] 0, 128
      %4211 = vxpose.xlu0.c.b16.cont [6/8] 0, 128
      %4212 = vxpose.xlu0.c.b16.cont [7/8] 0, 128
      %4213 = vxpose.xlu0.c.b16.end [8/8] 0, 128
      %v4214 = vpop.trf.xlu0
      %v4215 = vpop.trf.xlu0
      %v4216 = vpop.trf.xlu0
      %v4217 = vpop.trf.xlu0
      %v4218 = vpop.trf.xlu0
      %v4219 = vpop.trf.xlu0
      %v4220 = vpop.trf.xlu0
      %v4221 = vpop.trf.xlu0
      %4222 = vxpose.xlu0.c.b16.start [1/8] %v3988, 128
      %4223 = vxpose.xlu0.c.b16.cont [2/8] 0, 128
      %4224 = vxpose.xlu0.c.b16.cont [3/8] 0, 128
      %4225 = vxpose.xlu0.c.b16.cont [4/8] 0, 128
      %4226 = vxpose.xlu0.c.b16.cont [5/8] 0, 128
      %4227 = vxpose.xlu0.c.b16.cont [6/8] 0, 128
      %4228 = vxpose.xlu0.c.b16.cont [7/8] 0, 128
      %4229 = vxpose.xlu0.c.b16.end [8/8] 0, 128
      %v4230 = vpop.trf.xlu0
      %v4231 = vpop.trf.xlu0
      %v4232 = vpop.trf.xlu0
      %v4233 = vpop.trf.xlu0
      %v4234 = vpop.trf.xlu0
      %v4235 = vpop.trf.xlu0
      %v4236 = vpop.trf.xlu0
      %v4237 = vpop.trf.xlu0
      %4238 = vxpose.xlu0.c.b16.start [1/8] %v3992, 128
      %4239 = vxpose.xlu0.c.b16.cont [2/8] 0, 128
      %4240 = vxpose.xlu0.c.b16.cont [3/8] 0, 128
      %4241 = vxpose.xlu0.c.b16.cont [4/8] 0, 128
      %4242 = vxpose.xlu0.c.b16.cont [5/8] 0, 128
      %4243 = vxpose.xlu0.c.b16.cont [6/8] 0, 128
      %4244 = vxpose.xlu0.c.b16.cont [7/8] 0, 128
      %4245 = vxpose.xlu0.c.b16.end [8/8] 0, 128
      %v4246 = vpop.trf.xlu0
      %v4247 = vpop.trf.xlu0
      %v4248 = vpop.trf.xlu0
      %v4249 = vpop.trf.xlu0
      %v4250 = vpop.trf.xlu0
      %v4251 = vpop.trf.xlu0
      %v4252 = vpop.trf.xlu0
      %v4253 = vpop.trf.xlu0
      %4254 = vxpose.xlu0.c.b16.start [1/8] %v3996, 128
      %4255 = vxpose.xlu0.c.b16.cont [2/8] 0, 128
      %4256 = vxpose.xlu0.c.b16.cont [3/8] 0, 128
      %4257 = vxpose.xlu0.c.b16.cont [4/8] 0, 128
      %4258 = vxpose.xlu0.c.b16.cont [5/8] 0, 128
      %4259 = vxpose.xlu0.c.b16.cont [6/8] 0, 128
      %4260 = vxpose.xlu0.c.b16.cont [7/8] 0, 128
      %4261 = vxpose.xlu0.c.b16.end [8/8] 0, 128
      %v4262 = vpop.trf.xlu0
      %v4263 = vpop.trf.xlu0
      %v4264 = vpop.trf.xlu0
      %v4265 = vpop.trf.xlu0
      %v4266 = vpop.trf.xlu0
      %v4267 = vpop.trf.xlu0
      %v4268 = vpop.trf.xlu0
      %v4269 = vpop.trf.xlu0
      %4270 = vxpose.xlu0.c.b16.start [1/8] %v4000, 128
      %4271 = vxpose.xlu0.c.b16.cont [2/8] 0, 128
      %4272 = vxpose.xlu0.c.b16.cont [3/8] 0, 128
      %4273 = vxpose.xlu0.c.b16.cont [4/8] 0, 128
      %4274 = vxpose.xlu0.c.b16.cont [5/8] 0, 128
      %4275 = vxpose.xlu0.c.b16.cont [6/8] 0, 128
      %4276 = vxpose.xlu0.c.b16.cont [7/8] 0, 128
      %4277 = vxpose.xlu0.c.b16.end [8/8] 0, 128
      %v4278 = vpop.trf.xlu0
      %v4279 = vpop.trf.xlu0
      %v4280 = vpop.trf.xlu0
      %v4281 = vpop.trf.xlu0
      %v4282 = vpop.trf.xlu0
      %v4283 = vpop.trf.xlu0
      %v4284 = vpop.trf.xlu0
      %v4285 = vpop.trf.xlu0
      %4286 = vxpose.xlu0.c.b16.start [1/8] %v4004, 128
      %4287 = vxpose.xlu0.c.b16.cont [2/8] 0, 128
      %4288 = vxpose.xlu0.c.b16.cont [3/8] 0, 128
      %4289 = vxpose.xlu0.c.b16.cont [4/8] 0, 128
      %4290 = vxpose.xlu0.c.b16.cont [5/8] 0, 128
      %4291 = vxpose.xlu0.c.b16.cont [6/8] 0, 128
      %4292 = vxpose.xlu0.c.b16.cont [7/8] 0, 128
      %4293 = vxpose.xlu0.c.b16.end [8/8] 0, 128
      %v4294 = vpop.trf.xlu0
      %v4295 = vpop.trf.xlu0
      %v4296 = vpop.trf.xlu0
      %v4297 = vpop.trf.xlu0
      %v4298 = vpop.trf.xlu0
      %v4299 = vpop.trf.xlu0
      %v4300 = vpop.trf.xlu0
      %v4301 = vpop.trf.xlu0
      %4302 = vxpose.xlu0.c.b16.start [1/8] %v4008, 128
      %4303 = vxpose.xlu0.c.b16.cont [2/8] 0, 128
      %4304 = vxpose.xlu0.c.b16.cont [3/8] 0, 128
      %4305 = vxpose.xlu0.c.b16.cont [4/8] 0, 128
      %4306 = vxpose.xlu0.c.b16.cont [5/8] 0, 128
      %4307 = vxpose.xlu0.c.b16.cont [6/8] 0, 128
      %4308 = vxpose.xlu0.c.b16.cont [7/8] 0, 128
      %4309 = vxpose.xlu0.c.b16.end [8/8] 0, 128
      %v4310 = vpop.trf.xlu0
      %v4311 = vpop.trf.xlu0
      %v4312 = vpop.trf.xlu0
      %v4313 = vpop.trf.xlu0
      %v4314 = vpop.trf.xlu0
      %v4315 = vpop.trf.xlu0
      %v4316 = vpop.trf.xlu0
      %v4317 = vpop.trf.xlu0
      %4318 = vxpose.xlu0.c.b16.start [1/8] %v4012, 128
      %4319 = vxpose.xlu0.c.b16.cont [2/8] 0, 128
      %4320 = vxpose.xlu0.c.b16.cont [3/8] 0, 128
      %4321 = vxpose.xlu0.c.b16.cont [4/8] 0, 128
      %4322 = vxpose.xlu0.c.b16.cont [5/8] 0, 128
      %4323 = vxpose.xlu0.c.b16.cont [6/8] 0, 128
      %4324 = vxpose.xlu0.c.b16.cont [7/8] 0, 128
      %4325 = vxpose.xlu0.c.b16.end [8/8] 0, 128
      %v4326 = vpop.trf.xlu0
      %v4327 = vpop.trf.xlu0
      %v4328 = vpop.trf.xlu0
      %v4329 = vpop.trf.xlu0
      %v4330 = vpop.trf.xlu0
      %v4331 = vpop.trf.xlu0
      %v4332 = vpop.trf.xlu0
      %v4333 = vpop.trf.xlu0
      %4334 = vxpose.xlu0.c.b16.start [1/8] %v4016, 128
      %4335 = vxpose.xlu0.c.b16.cont [2/8] 0, 128
      %4336 = vxpose.xlu0.c.b16.cont [3/8] 0, 128
      %4337 = vxpose.xlu0.c.b16.cont [4/8] 0, 128
      %4338 = vxpose.xlu0.c.b16.cont [5/8] 0, 128
      %4339 = vxpose.xlu0.c.b16.cont [6/8] 0, 128
      %4340 = vxpose.xlu0.c.b16.cont [7/8] 0, 128
      %4341 = vxpose.xlu0.c.b16.end [8/8] 0, 128
      %v4342 = vpop.trf.xlu0
      %v4343 = vpop.trf.xlu0
      %v4344 = vpop.trf.xlu0
      %v4345 = vpop.trf.xlu0
      %v4346 = vpop.trf.xlu0
      %v4347 = vpop.trf.xlu0
      %v4348 = vpop.trf.xlu0
      %v4349 = vpop.trf.xlu0
      %4350 = vxpose.xlu0.c.b16.start [1/8] %v4020, 128
      %4351 = vxpose.xlu0.c.b16.cont [2/8] 0, 128
      %4352 = vxpose.xlu0.c.b16.cont [3/8] 0, 128
      %4353 = vxpose.xlu0.c.b16.cont [4/8] 0, 128
      %4354 = vxpose.xlu0.c.b16.cont [5/8] 0, 128
      %4355 = vxpose.xlu0.c.b16.cont [6/8] 0, 128
      %4356 = vxpose.xlu0.c.b16.cont [7/8] 0, 128
      %4357 = vxpose.xlu0.c.b16.end [8/8] 0, 128
      %v4358 = vpop.trf.xlu0
      %v4359 = vpop.trf.xlu0
      %v4360 = vpop.trf.xlu0
      %v4361 = vpop.trf.xlu0
      %v4362 = vpop.trf.xlu0
      %v4363 = vpop.trf.xlu0
      %v4364 = vpop.trf.xlu0
      %v4365 = vpop.trf.xlu0
      %4366 = vxpose.xlu0.c.b16.start [1/8] %v4024, 128
      %4367 = vxpose.xlu0.c.b16.cont [2/8] 0, 128
      %4368 = vxpose.xlu0.c.b16.cont [3/8] 0, 128
      %4369 = vxpose.xlu0.c.b16.cont [4/8] 0, 128
      %4370 = vxpose.xlu0.c.b16.cont [5/8] 0, 128
      %4371 = vxpose.xlu0.c.b16.cont [6/8] 0, 128
      %4372 = vxpose.xlu0.c.b16.cont [7/8] 0, 128
      %4373 = vxpose.xlu0.c.b16.end [8/8] 0, 128
      %v4374 = vpop.trf.xlu0
      %v4375 = vpop.trf.xlu0
      %v4376 = vpop.trf.xlu0
      %v4377 = vpop.trf.xlu0
      %v4378 = vpop.trf.xlu0
      %v4379 = vpop.trf.xlu0
      %v4380 = vpop.trf.xlu0
      %v4381 = vpop.trf.xlu0
      %4382 = vxpose.xlu0.c.b16.start [1/8] %v4028, 128
      %4383 = vxpose.xlu0.c.b16.cont [2/8] 0, 128
      %4384 = vxpose.xlu0.c.b16.cont [3/8] 0, 128
      %4385 = vxpose.xlu0.c.b16.cont [4/8] 0, 128
      %4386 = vxpose.xlu0.c.b16.cont [5/8] 0, 128
      %4387 = vxpose.xlu0.c.b16.cont [6/8] 0, 128
      %4388 = vxpose.xlu0.c.b16.cont [7/8] 0, 128
      %4389 = vxpose.xlu0.c.b16.end [8/8] 0, 128
      %v4390 = vpop.trf.xlu0
      %v4391 = vpop.trf.xlu0
      %v4392 = vpop.trf.xlu0
      %v4393 = vpop.trf.xlu0
      %v4394 = vpop.trf.xlu0
      %v4395 = vpop.trf.xlu0
      %v4396 = vpop.trf.xlu0
      %v4397 = vpop.trf.xlu0
      %4398 = vxpose.xlu0.c.b16.start [1/8] %v4032, 128
      %4399 = vxpose.xlu0.c.b16.cont [2/8] 0, 128
      %4400 = vxpose.xlu0.c.b16.cont [3/8] 0, 128
      %4401 = vxpose.xlu0.c.b16.cont [4/8] 0, 128
      %4402 = vxpose.xlu0.c.b16.cont [5/8] 0, 128
      %4403 = vxpose.xlu0.c.b16.cont [6/8] 0, 128
      %4404 = vxpose.xlu0.c.b16.cont [7/8] 0, 128
      %4405 = vxpose.xlu0.c.b16.end [8/8] 0, 128
      %v4406 = vpop.trf.xlu0
      %v4407 = vpop.trf.xlu0
      %v4408 = vpop.trf.xlu0
      %v4409 = vpop.trf.xlu0
      %v4410 = vpop.trf.xlu0
      %v4411 = vpop.trf.xlu0
      %v4412 = vpop.trf.xlu0
      %v4413 = vpop.trf.xlu0
      %4414 = vxpose.xlu0.c.b16.start [1/8] %v4036, 128
      %4415 = vxpose.xlu0.c.b16.cont [2/8] 0, 128
      %4416 = vxpose.xlu0.c.b16.cont [3/8] 0, 128
      %4417 = vxpose.xlu0.c.b16.cont [4/8] 0, 128
      %4418 = vxpose.xlu0.c.b16.cont [5/8] 0, 128
      %4419 = vxpose.xlu0.c.b16.cont [6/8] 0, 128
      %4420 = vxpose.xlu0.c.b16.cont [7/8] 0, 128
      %4421 = vxpose.xlu0.c.b16.end [8/8] 0, 128
      %v4422 = vpop.trf.xlu0
      %v4423 = vpop.trf.xlu0
      %v4424 = vpop.trf.xlu0
      %v4425 = vpop.trf.xlu0
      %v4426 = vpop.trf.xlu0
      %v4427 = vpop.trf.xlu0
      %v4428 = vpop.trf.xlu0
      %v4429 = vpop.trf.xlu0
      %4430 = vxpose.xlu0.c.b16.start [1/8] %v4040, 128
      %4431 = vxpose.xlu0.c.b16.cont [2/8] 0, 128
      %4432 = vxpose.xlu0.c.b16.cont [3/8] 0, 128
      %4433 = vxpose.xlu0.c.b16.cont [4/8] 0, 128
      %4434 = vxpose.xlu0.c.b16.cont [5/8] 0, 128
      %4435 = vxpose.xlu0.c.b16.cont [6/8] 0, 128
      %4436 = vxpose.xlu0.c.b16.cont [7/8] 0, 128
      %4437 = vxpose.xlu0.c.b16.end [8/8] 0, 128
      %v4438 = vpop.trf.xlu0
      %v4439 = vpop.trf.xlu0
      %v4440 = vpop.trf.xlu0
      %v4441 = vpop.trf.xlu0
      %v4442 = vpop.trf.xlu0
      %v4443 = vpop.trf.xlu0
      %v4444 = vpop.trf.xlu0
      %v4445 = vpop.trf.xlu0
      %4446 = vxpose.xlu0.c.b16.start [1/8] %v4044, 128
      %4447 = vxpose.xlu0.c.b16.cont [2/8] 0, 128
      %4448 = vxpose.xlu0.c.b16.cont [3/8] 0, 128
      %4449 = vxpose.xlu0.c.b16.cont [4/8] 0, 128
      %4450 = vxpose.xlu0.c.b16.cont [5/8] 0, 128
      %4451 = vxpose.xlu0.c.b16.cont [6/8] 0, 128
      %4452 = vxpose.xlu0.c.b16.cont [7/8] 0, 128
      %4453 = vxpose.xlu0.c.b16.end [8/8] 0, 128
      %v4454 = vpop.trf.xlu0
      %v4455 = vpop.trf.xlu0
      %v4456 = vpop.trf.xlu0
      %v4457 = vpop.trf.xlu0
      %v4458 = vpop.trf.xlu0
      %v4459 = vpop.trf.xlu0
      %v4460 = vpop.trf.xlu0
      %v4461 = vpop.trf.xlu0
      %4462 = vxpose.xlu0.c.b16.start [1/8] %v4048, 128
      %4463 = vxpose.xlu0.c.b16.cont [2/8] 0, 128
      %4464 = vxpose.xlu0.c.b16.cont [3/8] 0, 128
      %4465 = vxpose.xlu0.c.b16.cont [4/8] 0, 128
      %4466 = vxpose.xlu0.c.b16.cont [5/8] 0, 128
      %4467 = vxpose.xlu0.c.b16.cont [6/8] 0, 128
      %4468 = vxpose.xlu0.c.b16.cont [7/8] 0, 128
      %4469 = vxpose.xlu0.c.b16.end [8/8] 0, 128
      %v4470 = vpop.trf.xlu0
      %v4471 = vpop.trf.xlu0
      %v4472 = vpop.trf.xlu0
      %v4473 = vpop.trf.xlu0
      %v4474 = vpop.trf.xlu0
      %v4475 = vpop.trf.xlu0
      %v4476 = vpop.trf.xlu0
      %v4477 = vpop.trf.xlu0
      %4478 = vxpose.xlu0.c.b16.start [1/8] %v4052, 128
      %4479 = vxpose.xlu0.c.b16.cont [2/8] 0, 128
      %4480 = vxpose.xlu0.c.b16.cont [3/8] 0, 128
      %4481 = vxpose.xlu0.c.b16.cont [4/8] 0, 128
      %4482 = vxpose.xlu0.c.b16.cont [5/8] 0, 128
      %4483 = vxpose.xlu0.c.b16.cont [6/8] 0, 128
      %4484 = vxpose.xlu0.c.b16.cont [7/8] 0, 128
      %4485 = vxpose.xlu0.c.b16.end [8/8] 0, 128
      %v4486 = vpop.trf.xlu0
      %v4487 = vpop.trf.xlu0
      %v4488 = vpop.trf.xlu0
      %v4489 = vpop.trf.xlu0
      %v4490 = vpop.trf.xlu0
      %v4491 = vpop.trf.xlu0
      %v4492 = vpop.trf.xlu0
      %v4493 = vpop.trf.xlu0
      %4494 = vxpose.xlu0.c.b16.start [1/8] %v4056, 128
      %4495 = vxpose.xlu0.c.b16.cont [2/8] 0, 128
      %4496 = vxpose.xlu0.c.b16.cont [3/8] 0, 128
      %4497 = vxpose.xlu0.c.b16.cont [4/8] 0, 128
      %4498 = vxpose.xlu0.c.b16.cont [5/8] 0, 128
      %4499 = vxpose.xlu0.c.b16.cont [6/8] 0, 128
      %4500 = vxpose.xlu0.c.b16.cont [7/8] 0, 128
      %4501 = vxpose.xlu0.c.b16.end [8/8] 0, 128
      %v4502 = vpop.trf.xlu0
      %v4503 = vpop.trf.xlu0
      %v4504 = vpop.trf.xlu0
      %v4505 = vpop.trf.xlu0
      %v4506 = vpop.trf.xlu0
      %v4507 = vpop.trf.xlu0
      %v4508 = vpop.trf.xlu0
      %v4509 = vpop.trf.xlu0
      %4510 = vxpose.xlu0.c.b16.start [1/8] %v4060, 128
      %4511 = vxpose.xlu0.c.b16.cont [2/8] 0, 128
      %4512 = vxpose.xlu0.c.b16.cont [3/8] 0, 128
      %4513 = vxpose.xlu0.c.b16.cont [4/8] 0, 128
      %4514 = vxpose.xlu0.c.b16.cont [5/8] 0, 128
      %4515 = vxpose.xlu0.c.b16.cont [6/8] 0, 128
      %4516 = vxpose.xlu0.c.b16.cont [7/8] 0, 128
      %4517 = vxpose.xlu0.c.b16.end [8/8] 0, 128
      %v4518 = vpop.trf.xlu0
      %v4519 = vpop.trf.xlu0
      %v4520 = vpop.trf.xlu0
      %v4521 = vpop.trf.xlu0
      %v4522 = vpop.trf.xlu0
      %v4523 = vpop.trf.xlu0
      %v4524 = vpop.trf.xlu0
      %v4525 = vpop.trf.xlu0
      %4526 = vxpose.xlu0.c.b16.start [1/8] %v4064, 128
      %4527 = vxpose.xlu0.c.b16.cont [2/8] 0, 128
      %4528 = vxpose.xlu0.c.b16.cont [3/8] 0, 128
      %4529 = vxpose.xlu0.c.b16.cont [4/8] 0, 128
      %4530 = vxpose.xlu0.c.b16.cont [5/8] 0, 128
      %4531 = vxpose.xlu0.c.b16.cont [6/8] 0, 128
      %4532 = vxpose.xlu0.c.b16.cont [7/8] 0, 128
      %4533 = vxpose.xlu0.c.b16.end [8/8] 0, 128
      %v4534 = vpop.trf.xlu0
      %v4535 = vpop.trf.xlu0
      %v4536 = vpop.trf.xlu0
      %v4537 = vpop.trf.xlu0
      %v4538 = vpop.trf.xlu0
      %v4539 = vpop.trf.xlu0
      %v4540 = vpop.trf.xlu0
      %v4541 = vpop.trf.xlu0
      %4542 = vxpose.xlu0.c.b16.start [1/8] %v4068, 128
      %4543 = vxpose.xlu0.c.b16.cont [2/8] 0, 128
      %4544 = vxpose.xlu0.c.b16.cont [3/8] 0, 128
      %4545 = vxpose.xlu0.c.b16.cont [4/8] 0, 128
      %4546 = vxpose.xlu0.c.b16.cont [5/8] 0, 128
      %4547 = vxpose.xlu0.c.b16.cont [6/8] 0, 128
      %4548 = vxpose.xlu0.c.b16.cont [7/8] 0, 128
      %4549 = vxpose.xlu0.c.b16.end [8/8] 0, 128
      %v4550 = vpop.trf.xlu0
      %v4551 = vpop.trf.xlu0
      %v4552 = vpop.trf.xlu0
      %v4553 = vpop.trf.xlu0
      %v4554 = vpop.trf.xlu0
      %v4555 = vpop.trf.xlu0
      %v4556 = vpop.trf.xlu0
      %v4557 = vpop.trf.xlu0
      %4558 = vxpose.xlu0.c.b16.start [1/8] %v4072, 128
      %4559 = vxpose.xlu0.c.b16.cont [2/8] 0, 128
      %4560 = vxpose.xlu0.c.b16.cont [3/8] 0, 128
      %4561 = vxpose.xlu0.c.b16.cont [4/8] 0, 128
      %4562 = vxpose.xlu0.c.b16.cont [5/8] 0, 128
      %4563 = vxpose.xlu0.c.b16.cont [6/8] 0, 128
      %4564 = vxpose.xlu0.c.b16.cont [7/8] 0, 128
      %4565 = vxpose.xlu0.c.b16.end [8/8] 0, 128
      %v4566 = vpop.trf.xlu0
      %v4567 = vpop.trf.xlu0
      %v4568 = vpop.trf.xlu0
      %v4569 = vpop.trf.xlu0
      %v4570 = vpop.trf.xlu0
      %v4571 = vpop.trf.xlu0
      %v4572 = vpop.trf.xlu0
      %v4573 = vpop.trf.xlu0
      %4574 = vxpose.xlu0.c.b16.start [1/8] %v4076, 128
      %4575 = vxpose.xlu0.c.b16.cont [2/8] 0, 128
      %4576 = vxpose.xlu0.c.b16.cont [3/8] 0, 128
      %4577 = vxpose.xlu0.c.b16.cont [4/8] 0, 128
      %4578 = vxpose.xlu0.c.b16.cont [5/8] 0, 128
      %4579 = vxpose.xlu0.c.b16.cont [6/8] 0, 128
      %4580 = vxpose.xlu0.c.b16.cont [7/8] 0, 128
      %4581 = vxpose.xlu0.c.b16.end [8/8] 0, 128
      %v4582 = vpop.trf.xlu0
      %v4583 = vpop.trf.xlu0
      %v4584 = vpop.trf.xlu0
      %v4585 = vpop.trf.xlu0
      %v4586 = vpop.trf.xlu0
      %v4587 = vpop.trf.xlu0
      %v4588 = vpop.trf.xlu0
      %v4589 = vpop.trf.xlu0
      %v4590 = vcombine.low %v4086, %v4150
      %v4592 = vunpack.c.l.s4 1983009808
      %v4593 = vunpack.c.0.s8 %v4592
      %v4594 = vlaneseq
      %v4595 = vshrl.u32 %v4594, 7
      %v4596 = vsub.s32 %v4593, %v4595
      %v4597 = vrot.slane %v4590, %v4596
      %v4598 = vcombine.low %v4118, %v4182
      %v4600 = vunpack.c.l.s4 1983009808
      %v4601 = vunpack.c.0.s8 %v4600
      %v4602 = vlaneseq
      %v4603 = vshrl.u32 %v4602, 7
      %v4604 = vsub.s32 %v4601, %v4603
      %v4605 = vrot.slane %v4598, %v4604
      %v4606 = vcombine.low %v4214, %v4278
      %v4608 = vunpack.c.l.s4 1983009808
      %v4609 = vunpack.c.0.s8 %v4608
      %v4610 = vlaneseq
      %v4611 = vshrl.u32 %v4610, 7
      %v4612 = vsub.s32 %v4609, %v4611
      %v4613 = vrot.slane %v4606, %v4612
      %v4614 = vcombine.low %v4246, %v4310
      %v4616 = vunpack.c.l.s4 1983009808
      %v4617 = vunpack.c.0.s8 %v4616
      %v4618 = vlaneseq
      %v4619 = vshrl.u32 %v4618, 7
      %v4620 = vsub.s32 %v4617, %v4619
      %v4621 = vrot.slane %v4614, %v4620
      %v4622 = vcombine.low %v4597, %v4605
      %v4624 = vunpack.c.l.s4 1934713408
      %v4625 = vunpack.c.0.s8 %v4624
      %v4626 = vlaneseq
      %v4627 = vshrl.u32 %v4626, 7
      %v4628 = vsub.s32 %v4625, %v4627
      %v4629 = vrot.slane %v4622, %v4628
      %v4630 = vcombine.low %v4613, %v4621
      %v4632 = vunpack.c.l.s4 1934713408
      %v4633 = vunpack.c.0.s8 %v4632
      %v4634 = vlaneseq
      %v4635 = vshrl.u32 %v4634, 7
      %v4636 = vsub.s32 %v4633, %v4635
      %v4637 = vrot.slane %v4630, %v4636
      %v4638 = vcombine.low %v4629, %v4637
      %v4639 = vcombine.high %v4629, %v4637
      %v4640 = vcombine.low %v4102, %v4166
      %v4642 = vunpack.c.l.s4 1983009808
      %v4643 = vunpack.c.0.s8 %v4642
      %v4644 = vlaneseq
      %v4645 = vshrl.u32 %v4644, 7
      %v4646 = vsub.s32 %v4643, %v4645
      %v4647 = vrot.slane %v4640, %v4646
      %v4648 = vcombine.low %v4134, %v4198
      %v4650 = vunpack.c.l.s4 1983009808
      %v4651 = vunpack.c.0.s8 %v4650
      %v4652 = vlaneseq
      %v4653 = vshrl.u32 %v4652, 7
      %v4654 = vsub.s32 %v4651, %v4653
      %v4655 = vrot.slane %v4648, %v4654
      %v4656 = vcombine.low %v4230, %v4294
      %v4658 = vunpack.c.l.s4 1983009808
      %v4659 = vunpack.c.0.s8 %v4658
      %v4660 = vlaneseq
      %v4661 = vshrl.u32 %v4660, 7
      %v4662 = vsub.s32 %v4659, %v4661
      %v4663 = vrot.slane %v4656, %v4662
      %v4664 = vcombine.low %v4262, %v4326
      %v4666 = vunpack.c.l.s4 1983009808
      %v4667 = vunpack.c.0.s8 %v4666
      %v4668 = vlaneseq
      %v4669 = vshrl.u32 %v4668, 7
      %v4670 = vsub.s32 %v4667, %v4669
      %v4671 = vrot.slane %v4664, %v4670
      %v4672 = vcombine.low %v4647, %v4655
      %v4674 = vunpack.c.l.s4 1934713408
      %v4675 = vunpack.c.0.s8 %v4674
      %v4676 = vlaneseq
      %v4677 = vshrl.u32 %v4676, 7
      %v4678 = vsub.s32 %v4675, %v4677
      %v4679 = vrot.slane %v4672, %v4678
      %v4680 = vcombine.low %v4663, %v4671
      %v4682 = vunpack.c.l.s4 1934713408
      %v4683 = vunpack.c.0.s8 %v4682
      %v4684 = vlaneseq
      %v4685 = vshrl.u32 %v4684, 7
      %v4686 = vsub.s32 %v4683, %v4685
      %v4687 = vrot.slane %v4680, %v4686
      %v4688 = vcombine.low %v4679, %v4687
      %v4689 = vcombine.high %v4679, %v4687
      %v4690 = vcombine.low %v4342, %v4406
      %v4692 = vunpack.c.l.s4 1983009808
      %v4693 = vunpack.c.0.s8 %v4692
      %v4694 = vlaneseq
      %v4695 = vshrl.u32 %v4694, 7
      %v4696 = vsub.s32 %v4693, %v4695
      %v4697 = vrot.slane %v4690, %v4696
      %v4698 = vcombine.low %v4374, %v4438
      %v4700 = vunpack.c.l.s4 1983009808
      %v4701 = vunpack.c.0.s8 %v4700
      %v4702 = vlaneseq
      %v4703 = vshrl.u32 %v4702, 7
      %v4704 = vsub.s32 %v4701, %v4703
      %v4705 = vrot.slane %v4698, %v4704
      %v4706 = vcombine.low %v4470, %v4534
      %v4708 = vunpack.c.l.s4 1983009808
      %v4709 = vunpack.c.0.s8 %v4708
      %v4710 = vlaneseq
      %v4711 = vshrl.u32 %v4710, 7
      %v4712 = vsub.s32 %v4709, %v4711
      %v4713 = vrot.slane %v4706, %v4712
      %v4714 = vcombine.low %v4502, %v4566
      %v4716 = vunpack.c.l.s4 1983009808
      %v4717 = vunpack.c.0.s8 %v4716
      %v4718 = vlaneseq
      %v4719 = vshrl.u32 %v4718, 7
      %v4720 = vsub.s32 %v4717, %v4719
      %v4721 = vrot.slane %v4714, %v4720
      %v4722 = vcombine.low %v4697, %v4705
      %v4724 = vunpack.c.l.s4 1934713408
      %v4725 = vunpack.c.0.s8 %v4724
      %v4726 = vlaneseq
      %v4727 = vshrl.u32 %v4726, 7
      %v4728 = vsub.s32 %v4725, %v4727
      %v4729 = vrot.slane %v4722, %v4728
      %v4730 = vcombine.low %v4713, %v4721
      %v4732 = vunpack.c.l.s4 1934713408
      %v4733 = vunpack.c.0.s8 %v4732
      %v4734 = vlaneseq
      %v4735 = vshrl.u32 %v4734, 7
      %v4736 = vsub.s32 %v4733, %v4735
      %v4737 = vrot.slane %v4730, %v4736
      %v4738 = vcombine.low %v4729, %v4737
      %v4739 = vcombine.high %v4729, %v4737
      %v4740 = vcombine.low %v4358, %v4422
      %v4742 = vunpack.c.l.s4 1983009808
      %v4743 = vunpack.c.0.s8 %v4742
      %v4744 = vlaneseq
      %v4745 = vshrl.u32 %v4744, 7
      %v4746 = vsub.s32 %v4743, %v4745
      %v4747 = vrot.slane %v4740, %v4746
      %v4748 = vcombine.low %v4390, %v4454
      %v4750 = vunpack.c.l.s4 1983009808
      %v4751 = vunpack.c.0.s8 %v4750
      %v4752 = vlaneseq
      %v4753 = vshrl.u32 %v4752, 7
      %v4754 = vsub.s32 %v4751, %v4753
      %v4755 = vrot.slane %v4748, %v4754
      %v4756 = vcombine.low %v4486, %v4550
      %v4758 = vunpack.c.l.s4 1983009808
      %v4759 = vunpack.c.0.s8 %v4758
      %v4760 = vlaneseq
      %v4761 = vshrl.u32 %v4760, 7
      %v4762 = vsub.s32 %v4759, %v4761
      %v4763 = vrot.slane %v4756, %v4762
      %v4764 = vcombine.low %v4518, %v4582
      %v4766 = vunpack.c.l.s4 1983009808
      %v4767 = vunpack.c.0.s8 %v4766
      %v4768 = vlaneseq
      %v4769 = vshrl.u32 %v4768, 7
      %v4770 = vsub.s32 %v4767, %v4769
      %v4771 = vrot.slane %v4764, %v4770
      %v4772 = vcombine.low %v4747, %v4755
      %v4774 = vunpack.c.l.s4 1934713408
      %v4775 = vunpack.c.0.s8 %v4774
      %v4776 = vlaneseq
      %v4777 = vshrl.u32 %v4776, 7
      %v4778 = vsub.s32 %v4775, %v4777
      %v4779 = vrot.slane %v4772, %v4778
      %v4780 = vcombine.low %v4763, %v4771
      %v4782 = vunpack.c.l.s4 1934713408
      %v4783 = vunpack.c.0.s8 %v4782
      %v4784 = vlaneseq
      %v4785 = vshrl.u32 %v4784, 7
      %v4786 = vsub.s32 %v4783, %v4785
      %v4787 = vrot.slane %v4780, %v4786
      %v4788 = vcombine.low %v4779, %v4787
      %v4789 = vcombine.high %v4779, %v4787
      %v4792 = vpack.i.b16 %v4688, %v4638
      %v4793 = vshrl.u32 %v4638, 16
      %v4794 = vshrl.u32 %v4688, 16
      %v4795 = vpack.i.b16 %v4794, %v4793
      %v4798 = vpack.i.b16 %v4689, %v4639
      %v4799 = vshrl.u32 %v4639, 16
      %v4800 = vshrl.u32 %v4689, 16
      %v4801 = vpack.i.b16 %v4800, %v4799
      %v4804 = vpack.i.b16 %v4788, %v4738
      %v4805 = vshrl.u32 %v4738, 16
      %v4806 = vshrl.u32 %v4788, 16
      %v4807 = vpack.i.b16 %v4806, %v4805
      %v4810 = vpack.i.b16 %v4789, %v4739
      %v4811 = vshrl.u32 %v4739, 16
      %v4812 = vshrl.u32 %v4789, 16
      %v4813 = vpack.i.b16 %v4812, %v4811
      %v4815 = vsel %vm3057, %v4792, 0
      %v4818 = vsel %vm3057, %v4804, 0
      %v4821 = vsel %vm3057, %v3146, 0
      %4823 = vmatprep.subr.bf16.mxu0 0
      %4824 = vmatpush1.bf16.xpose.msra.mxu0 %v4821
      %4825 = vmatprep.subr.bf16.mxu0 0
      %4826 = vmatpush1.bf16.xpose.msra.mxu0 0
      %4827 = vmatprep.subr.bf16.mxu0 0
      %4828 = vmatpush1.bf16.xpose.msra.mxu0 0
      %4829 = vmatprep.subr.bf16.mxu0 0
      %4830 = vmatpush1.bf16.xpose.msra.mxu0 0
      %4831 = vmatprep.subr.bf16.mxu0 0
      %4832 = vmatpush1.bf16.xpose.msra.mxu0 0
      %4833 = vmatprep.subr.bf16.mxu0 0
      %4834 = vmatpush1.bf16.xpose.msra.mxu0 0
      %4835 = vmatprep.subr.bf16.mxu0 0
      %4836 = vmatpush1.bf16.xpose.msra.mxu0 0
      %4837 = vmatprep.subr.bf16.mxu0 0
      %4838 = vmatpush1.bf16.xpose.msra.mxu0 0
      %4839 = vmatprep.subr.bf16.mxu0 0
      %4840 = vmatpush1.bf16.xpose.msra.mxu0 0
      %4841 = vmatprep.subr.bf16.mxu0 0
      %4842 = vmatpush1.bf16.xpose.msra.mxu0 0
      %4843 = vmatprep.subr.bf16.mxu0 0
      %4844 = vmatpush1.bf16.xpose.msra.mxu0 0
      %4845 = vmatprep.subr.bf16.mxu0 0
      %4846 = vmatpush1.bf16.xpose.msra.mxu0 0
      %4847 = vmatprep.subr.bf16.mxu0 0
      %4848 = vmatpush1.bf16.xpose.msra.mxu0 0
      %4849 = vmatprep.subr.bf16.mxu0 0
      %4850 = vmatpush1.bf16.xpose.msra.mxu0 0
      %4851 = vmatprep.subr.bf16.mxu0 0
      %4852 = vmatpush1.bf16.xpose.msra.mxu0 0
      %4853 = vmatprep.subr.bf16.mxu0 0
      %4854 = vmatpush1.bf16.xpose.msra.mxu0 0
      %4855 = vmatprep.mubr.bf16.mxu0 0
      %4856 = vmatmul.mubr.bf16.gmra.mrb[0].mxu0 %v4815
      %v4857 = vpop.f32.mrb[0].mxu0
      %v4858 = vadd.f32 0.0, %v4857
      %v4859 = vpop.f32.mrb[0].mxu0
      %v4860 = vpop.f32.mrb[0].mxu0
      %v4861 = vadd.f32 0.0, %v4860
      %v4862 = vpop.f32.mrb[0].mxu0
      %4863 = vmatprep.mubr.bf16.mxu0 0
      %4864 = vmatmul.mubr.bf16.gmra.mrb[0].mxu0 %v4818
      %v4865 = vpop.f32.mrb[0].mxu0
      %v4866 = vadd.f32 0.0, %v4865
      %v4867 = vpop.f32.mrb[0].mxu0
      %v4868 = vpop.f32.mrb[0].mxu0
      %v4869 = vadd.f32 0.0, %v4868
      %v4870 = vpop.f32.mrb[0].mxu0
      %4871 = vdwg.mxu0
      %v4873 = vsel %vm3057, %v4795, 0
      %v4876 = vsel %vm3057, %v4807, 0
      %v4879 = vsel %vm3057, %v3147, 0
      %4881 = vmatprep.subr.bf16.mxu0 0
      %4882 = vmatpush1.bf16.xpose.msra.mxu0 %v4879
      %4883 = vmatprep.subr.bf16.mxu0 0
      %4884 = vmatpush1.bf16.xpose.msra.mxu0 0
      %4885 = vmatprep.subr.bf16.mxu0 0
      %4886 = vmatpush1.bf16.xpose.msra.mxu0 0
      %4887 = vmatprep.subr.bf16.mxu0 0
      %4888 = vmatpush1.bf16.xpose.msra.mxu0 0
      %4889 = vmatprep.subr.bf16.mxu0 0
      %4890 = vmatpush1.bf16.xpose.msra.mxu0 0
      %4891 = vmatprep.subr.bf16.mxu0 0
      %4892 = vmatpush1.bf16.xpose.msra.mxu0 0
      %4893 = vmatprep.subr.bf16.mxu0 0
      %4894 = vmatpush1.bf16.xpose.msra.mxu0 0
      %4895 = vmatprep.subr.bf16.mxu0 0
      %4896 = vmatpush1.bf16.xpose.msra.mxu0 0
      %4897 = vmatprep.subr.bf16.mxu0 0
      %4898 = vmatpush1.bf16.xpose.msra.mxu0 0
      %4899 = vmatprep.subr.bf16.mxu0 0
      %4900 = vmatpush1.bf16.xpose.msra.mxu0 0
      %4901 = vmatprep.subr.bf16.mxu0 0
      %4902 = vmatpush1.bf16.xpose.msra.mxu0 0
      %4903 = vmatprep.subr.bf16.mxu0 0
      %4904 = vmatpush1.bf16.xpose.msra.mxu0 0
      %4905 = vmatprep.subr.bf16.mxu0 0
      %4906 = vmatpush1.bf16.xpose.msra.mxu0 0
      %4907 = vmatprep.subr.bf16.mxu0 0
      %4908 = vmatpush1.bf16.xpose.msra.mxu0 0
      %4909 = vmatprep.subr.bf16.mxu0 0
      %4910 = vmatpush1.bf16.xpose.msra.mxu0 0
      %4911 = vmatprep.subr.bf16.mxu0 0
      %4912 = vmatpush1.bf16.xpose.msra.mxu0 0
      %4913 = vmatprep.mubr.bf16.mxu0 0
      %4914 = vmatmul.mubr.bf16.gmra.mrb[0].mxu0 %v4873
      %v4915 = vpop.f32.mrb[0].mxu0
      %v4916 = vadd.f32 0.0, %v4915
      %v4917 = vpop.f32.mrb[0].mxu0
      %v4918 = vpop.f32.mrb[0].mxu0
      %v4919 = vadd.f32 0.0, %v4918
      %v4920 = vpop.f32.mrb[0].mxu0
      %4921 = vmatprep.mubr.bf16.mxu0 0
      %4922 = vmatmul.mubr.bf16.gmra.mrb[0].mxu0 %v4876
      %v4923 = vpop.f32.mrb[0].mxu0
      %v4924 = vadd.f32 0.0, %v4923
      %v4925 = vpop.f32.mrb[0].mxu0
      %v4926 = vpop.f32.mrb[0].mxu0
      %v4927 = vadd.f32 0.0, %v4926
      %v4928 = vpop.f32.mrb[0].mxu0
      %4929 = vdwg.mxu0
      %v4931 = vsel %vm3057, %v4798, 0
      %v4934 = vsel %vm3057, %v4810, 0
      %v4937 = vsel %vm3057, %v3148, 0
      %4939 = vmatprep.subr.bf16.mxu0 0
      %4940 = vmatpush1.bf16.xpose.msra.mxu0 %v4937
      %4941 = vmatprep.subr.bf16.mxu0 0
      %4942 = vmatpush1.bf16.xpose.msra.mxu0 0
      %4943 = vmatprep.subr.bf16.mxu0 0
      %4944 = vmatpush1.bf16.xpose.msra.mxu0 0
      %4945 = vmatprep.subr.bf16.mxu0 0
      %4946 = vmatpush1.bf16.xpose.msra.mxu0 0
      %4947 = vmatprep.subr.bf16.mxu0 0
      %4948 = vmatpush1.bf16.xpose.msra.mxu0 0
      %4949 = vmatprep.subr.bf16.mxu0 0
      %4950 = vmatpush1.bf16.xpose.msra.mxu0 0
      %4951 = vmatprep.subr.bf16.mxu0 0
      %4952 = vmatpush1.bf16.xpose.msra.mxu0 0
      %4953 = vmatprep.subr.bf16.mxu0 0
      %4954 = vmatpush1.bf16.xpose.msra.mxu0 0
      %4955 = vmatprep.subr.bf16.mxu0 0
      %4956 = vmatpush1.bf16.xpose.msra.mxu0 0
      %4957 = vmatprep.subr.bf16.mxu0 0
      %4958 = vmatpush1.bf16.xpose.msra.mxu0 0
      %4959 = vmatprep.subr.bf16.mxu0 0
      %4960 = vmatpush1.bf16.xpose.msra.mxu0 0
      %4961 = vmatprep.subr.bf16.mxu0 0
      %4962 = vmatpush1.bf16.xpose.msra.mxu0 0
      %4963 = vmatprep.subr.bf16.mxu0 0
      %4964 = vmatpush1.bf16.xpose.msra.mxu0 0
      %4965 = vmatprep.subr.bf16.mxu0 0
      %4966 = vmatpush1.bf16.xpose.msra.mxu0 0
      %4967 = vmatprep.subr.bf16.mxu0 0
      %4968 = vmatpush1.bf16.xpose.msra.mxu0 0
      %4969 = vmatprep.subr.bf16.mxu0 0
      %4970 = vmatpush1.bf16.xpose.msra.mxu0 0
      %4971 = vmatprep.mubr.bf16.mxu0 0
      %4972 = vmatmul.mubr.bf16.gmra.mrb[0].mxu0 %v4931
      %v4973 = vpop.f32.mrb[0].mxu0
      %v4974 = vadd.f32 0.0, %v4973
      %v4975 = vpop.f32.mrb[0].mxu0
      %v4976 = vpop.f32.mrb[0].mxu0
      %v4977 = vadd.f32 0.0, %v4976
      %v4978 = vpop.f32.mrb[0].mxu0
      %4979 = vmatprep.mubr.bf16.mxu0 0
      %4980 = vmatmul.mubr.bf16.gmra.mrb[0].mxu0 %v4934
      %v4981 = vpop.f32.mrb[0].mxu0
      %v4982 = vadd.f32 0.0, %v4981
      %v4983 = vpop.f32.mrb[0].mxu0
      %v4984 = vpop.f32.mrb[0].mxu0
      %v4985 = vadd.f32 0.0, %v4984
      %v4986 = vpop.f32.mrb[0].mxu0
      %4987 = vdwg.mxu0
      %v4989 = vsel %vm3057, %v4801, 0
      %v4992 = vsel %vm3057, %v4813, 0
      %v4995 = vsel %vm3057, %v3149, 0
      %4997 = vmatprep.subr.bf16.mxu0 0
      %4998 = vmatpush1.bf16.xpose.msra.mxu0 %v4995
      %4999 = vmatprep.subr.bf16.mxu0 0
      %5000 = vmatpush1.bf16.xpose.msra.mxu0 0
      %5001 = vmatprep.subr.bf16.mxu0 0
      %5002 = vmatpush1.bf16.xpose.msra.mxu0 0
      %5003 = vmatprep.subr.bf16.mxu0 0
      %5004 = vmatpush1.bf16.xpose.msra.mxu0 0
      %5005 = vmatprep.subr.bf16.mxu0 0
      %5006 = vmatpush1.bf16.xpose.msra.mxu0 0
      %5007 = vmatprep.subr.bf16.mxu0 0
      %5008 = vmatpush1.bf16.xpose.msra.mxu0 0
      %5009 = vmatprep.subr.bf16.mxu0 0
      %5010 = vmatpush1.bf16.xpose.msra.mxu0 0
      %5011 = vmatprep.subr.bf16.mxu0 0
      %5012 = vmatpush1.bf16.xpose.msra.mxu0 0
      %5013 = vmatprep.subr.bf16.mxu0 0
      %5014 = vmatpush1.bf16.xpose.msra.mxu0 0
      %5015 = vmatprep.subr.bf16.mxu0 0
      %5016 = vmatpush1.bf16.xpose.msra.mxu0 0
      %5017 = vmatprep.subr.bf16.mxu0 0
      %5018 = vmatpush1.bf16.xpose.msra.mxu0 0
      %5019 = vmatprep.subr.bf16.mxu0 0
      %5020 = vmatpush1.bf16.xpose.msra.mxu0 0
      %5021 = vmatprep.subr.bf16.mxu0 0
      %5022 = vmatpush1.bf16.xpose.msra.mxu0 0
      %5023 = vmatprep.subr.bf16.mxu0 0
      %5024 = vmatpush1.bf16.xpose.msra.mxu0 0
      %5025 = vmatprep.subr.bf16.mxu0 0
      %5026 = vmatpush1.bf16.xpose.msra.mxu0 0
      %5027 = vmatprep.subr.bf16.mxu0 0
      %5028 = vmatpush1.bf16.xpose.msra.mxu0 0
      %5029 = vmatprep.mubr.bf16.mxu0 0
      %5030 = vmatmul.mubr.bf16.gmra.mrb[0].mxu0 %v4989
      %v5031 = vpop.f32.mrb[0].mxu0
      %v5032 = vadd.f32 0.0, %v5031
      %v5033 = vpop.f32.mrb[0].mxu0
      %v5034 = vpop.f32.mrb[0].mxu0
      %v5035 = vadd.f32 0.0, %v5034
      %v5036 = vpop.f32.mrb[0].mxu0
      %5037 = vmatprep.mubr.bf16.mxu0 0
      %5038 = vmatmul.mubr.bf16.gmra.mrb[0].mxu0 %v4992
      %v5039 = vpop.f32.mrb[0].mxu0
      %v5040 = vadd.f32 0.0, %v5039
      %v5041 = vpop.f32.mrb[0].mxu0
      %v5042 = vpop.f32.mrb[0].mxu0
      %v5043 = vadd.f32 0.0, %v5042
      %v5044 = vpop.f32.mrb[0].mxu0
      %5045 = vdwg.mxu0
      %5046 = vxpose.xlu0.b32.start [1/16] %v4858, 128
      %5047 = vxpose.xlu0.b32.cont [2/16] %v4861, 128
      %5048 = vxpose.xlu0.b32.cont [3/16] %v4866, 128
      %5049 = vxpose.xlu0.b32.cont [4/16] %v4869, 128
      %5050 = vxpose.xlu0.b32.cont [5/16] 0.0, 128
      %5051 = vxpose.xlu0.b32.cont [6/16] 0.0, 128
      %5052 = vxpose.xlu0.b32.cont [7/16] 0.0, 128
      %5053 = vxpose.xlu0.b32.cont [8/16] 0.0, 128
      %5054 = vxpose.xlu0.b32.cont [9/16] 0.0, 128
      %5055 = vxpose.xlu0.b32.cont [10/16] 0.0, 128
      %5056 = vxpose.xlu0.b32.cont [11/16] 0.0, 128
      %5057 = vxpose.xlu0.b32.cont [12/16] 0.0, 128
      %5058 = vxpose.xlu0.b32.cont [13/16] 0.0, 128
      %5059 = vxpose.xlu0.b32.cont [14/16] 0.0, 128
      %5060 = vxpose.xlu0.b32.cont [15/16] 0.0, 128
      %5061 = vxpose.xlu0.b32.end [16/16] 0.0, 128
      %v5062 = vpop.trf.xlu0
      %v5063 = vpop.trf.xlu0
      %v5064 = vpop.trf.xlu0
      %v5065 = vpop.trf.xlu0
      %v5066 = vpop.trf.xlu0
      %v5067 = vpop.trf.xlu0
      %v5068 = vpop.trf.xlu0
      %v5069 = vpop.trf.xlu0
      %v5070 = vpop.trf.xlu0
      %v5071 = vpop.trf.xlu0
      %v5072 = vpop.trf.xlu0
      %v5073 = vpop.trf.xlu0
      %v5074 = vpop.trf.xlu0
      %v5075 = vpop.trf.xlu0
      %v5076 = vpop.trf.xlu0
      %v5077 = vpop.trf.xlu0
      %5078 = vxpose.xlu0.b32.start [1/16] %v4916, 128
      %5079 = vxpose.xlu0.b32.cont [2/16] %v4919, 128
      %5080 = vxpose.xlu0.b32.cont [3/16] %v4924, 128
      %5081 = vxpose.xlu0.b32.cont [4/16] %v4927, 128
      %5082 = vxpose.xlu0.b32.cont [5/16] 0.0, 128
      %5083 = vxpose.xlu0.b32.cont [6/16] 0.0, 128
      %5084 = vxpose.xlu0.b32.cont [7/16] 0.0, 128
      %5085 = vxpose.xlu0.b32.cont [8/16] 0.0, 128
      %5086 = vxpose.xlu0.b32.cont [9/16] 0.0, 128
      %5087 = vxpose.xlu0.b32.cont [10/16] 0.0, 128
      %5088 = vxpose.xlu0.b32.cont [11/16] 0.0, 128
      %5089 = vxpose.xlu0.b32.cont [12/16] 0.0, 128
      %5090 = vxpose.xlu0.b32.cont [13/16] 0.0, 128
      %5091 = vxpose.xlu0.b32.cont [14/16] 0.0, 128
      %5092 = vxpose.xlu0.b32.cont [15/16] 0.0, 128
      %5093 = vxpose.xlu0.b32.end [16/16] 0.0, 128
      %v5094 = vpop.trf.xlu0
      %v5095 = vpop.trf.xlu0
      %v5096 = vpop.trf.xlu0
      %v5097 = vpop.trf.xlu0
      %v5098 = vpop.trf.xlu0
      %v5099 = vpop.trf.xlu0
      %v5100 = vpop.trf.xlu0
      %v5101 = vpop.trf.xlu0
      %v5102 = vpop.trf.xlu0
      %v5103 = vpop.trf.xlu0
      %v5104 = vpop.trf.xlu0
      %v5105 = vpop.trf.xlu0
      %v5106 = vpop.trf.xlu0
      %v5107 = vpop.trf.xlu0
      %v5108 = vpop.trf.xlu0
      %v5109 = vpop.trf.xlu0
      %5110 = vxpose.xlu0.b32.start [1/16] %v4974, 128
      %5111 = vxpose.xlu0.b32.cont [2/16] %v4977, 128
      %5112 = vxpose.xlu0.b32.cont [3/16] %v4982, 128
      %5113 = vxpose.xlu0.b32.cont [4/16] %v4985, 128
      %5114 = vxpose.xlu0.b32.cont [5/16] 0.0, 128
      %5115 = vxpose.xlu0.b32.cont [6/16] 0.0, 128
      %5116 = vxpose.xlu0.b32.cont [7/16] 0.0, 128
      %5117 = vxpose.xlu0.b32.cont [8/16] 0.0, 128
      %5118 = vxpose.xlu0.b32.cont [9/16] 0.0, 128
      %5119 = vxpose.xlu0.b32.cont [10/16] 0.0, 128
      %5120 = vxpose.xlu0.b32.cont [11/16] 0.0, 128
      %5121 = vxpose.xlu0.b32.cont [12/16] 0.0, 128
      %5122 = vxpose.xlu0.b32.cont [13/16] 0.0, 128
      %5123 = vxpose.xlu0.b32.cont [14/16] 0.0, 128
      %5124 = vxpose.xlu0.b32.cont [15/16] 0.0, 128
      %5125 = vxpose.xlu0.b32.end [16/16] 0.0, 128
      %v5126 = vpop.trf.xlu0
      %v5127 = vpop.trf.xlu0
      %v5128 = vpop.trf.xlu0
      %v5129 = vpop.trf.xlu0
      %v5130 = vpop.trf.xlu0
      %v5131 = vpop.trf.xlu0
      %v5132 = vpop.trf.xlu0
      %v5133 = vpop.trf.xlu0
      %v5134 = vpop.trf.xlu0
      %v5135 = vpop.trf.xlu0
      %v5136 = vpop.trf.xlu0
      %v5137 = vpop.trf.xlu0
      %v5138 = vpop.trf.xlu0
      %v5139 = vpop.trf.xlu0
      %v5140 = vpop.trf.xlu0
      %v5141 = vpop.trf.xlu0
      %5142 = vxpose.xlu0.b32.start [1/16] %v5032, 128
      %5143 = vxpose.xlu0.b32.cont [2/16] %v5035, 128
      %5144 = vxpose.xlu0.b32.cont [3/16] %v5040, 128
      %5145 = vxpose.xlu0.b32.cont [4/16] %v5043, 128
      %5146 = vxpose.xlu0.b32.cont [5/16] 0.0, 128
      %5147 = vxpose.xlu0.b32.cont [6/16] 0.0, 128
      %5148 = vxpose.xlu0.b32.cont [7/16] 0.0, 128
      %5149 = vxpose.xlu0.b32.cont [8/16] 0.0, 128
      %5150 = vxpose.xlu0.b32.cont [9/16] 0.0, 128
      %5151 = vxpose.xlu0.b32.cont [10/16] 0.0, 128
      %5152 = vxpose.xlu0.b32.cont [11/16] 0.0, 128
      %5153 = vxpose.xlu0.b32.cont [12/16] 0.0, 128
      %5154 = vxpose.xlu0.b32.cont [13/16] 0.0, 128
      %5155 = vxpose.xlu0.b32.cont [14/16] 0.0, 128
      %5156 = vxpose.xlu0.b32.cont [15/16] 0.0, 128
      %5157 = vxpose.xlu0.b32.end [16/16] 0.0, 128
      %v5158 = vpop.trf.xlu0
      %v5159 = vpop.trf.xlu0
      %v5160 = vpop.trf.xlu0
      %v5161 = vpop.trf.xlu0
      %v5162 = vpop.trf.xlu0
      %v5163 = vpop.trf.xlu0
      %v5164 = vpop.trf.xlu0
      %v5165 = vpop.trf.xlu0
      %v5166 = vpop.trf.xlu0
      %v5167 = vpop.trf.xlu0
      %v5168 = vpop.trf.xlu0
      %v5169 = vpop.trf.xlu0
      %v5170 = vpop.trf.xlu0
      %v5171 = vpop.trf.xlu0
      %v5172 = vpop.trf.xlu0
      %v5173 = vpop.trf.xlu0
      %v5174 = vcombine.low %v5062, %v5126
      %v5175 = vcombine.high %v5062, %v5126
      %v5177 = vunpack.c.l.s4 1983009808
      %v5178 = vunpack.c.0.s8 %v5177
      %v5179 = vlaneseq
      %v5180 = vshrl.u32 %v5179, 7
      %v5181 = vsub.s32 %v5178, %v5180
      %v5182 = vrot.slane %v5174, %v5181
      %v5184 = vunpack.c.l.s4 1983009808
      %v5185 = vunpack.c.0.s8 %v5184
      %v5186 = vlaneseq
      %v5187 = vshrl.u32 %v5186, 7
      %v5188 = vsub.s32 %v5185, %v5187
      %v5189 = vrot.slane %v5175, %v5188
      %v5190 = vcombine.low %v5094, %v5158
      %v5191 = vcombine.high %v5094, %v5158
      %v5193 = vunpack.c.l.s4 1983009808
      %v5194 = vunpack.c.0.s8 %v5193
      %v5195 = vlaneseq
      %v5196 = vshrl.u32 %v5195, 7
      %v5197 = vsub.s32 %v5194, %v5196
      %v5198 = vrot.slane %v5190, %v5197
      %v5200 = vunpack.c.l.s4 1983009808
      %v5201 = vunpack.c.0.s8 %v5200
      %v5202 = vlaneseq
      %v5203 = vshrl.u32 %v5202, 7
      %v5204 = vsub.s32 %v5201, %v5203
      %v5205 = vrot.slane %v5191, %v5204
      %v5206 = vcombine.low %v5182, %v5198
      %v5207 = vcombine.high %v5182, %v5198
      %v5209 = vunpack.c.l.s4 1934713408
      %v5210 = vunpack.c.0.s8 %v5209
      %v5211 = vlaneseq
      %v5212 = vshrl.u32 %v5211, 7
      %v5213 = vsub.s32 %v5210, %v5212
      %v5214 = vrot.slane %v5206, %v5213
      %v5216 = vunpack.c.l.s4 1934713408
      %v5217 = vunpack.c.0.s8 %v5216
      %v5218 = vlaneseq
      %v5219 = vshrl.u32 %v5218, 7
      %v5220 = vsub.s32 %v5217, %v5219
      %v5221 = vrot.slane %v5207, %v5220
      %v5222 = vcombine.low %v5189, %v5205
      %v5223 = vcombine.high %v5189, %v5205
      %v5225 = vunpack.c.l.s4 1934713408
      %v5226 = vunpack.c.0.s8 %v5225
      %v5227 = vlaneseq
      %v5228 = vshrl.u32 %v5227, 7
      %v5229 = vsub.s32 %v5226, %v5228
      %v5230 = vrot.slane %v5222, %v5229
      %v5232 = vunpack.c.l.s4 1934713408
      %v5233 = vunpack.c.0.s8 %v5232
      %v5234 = vlaneseq
      %v5235 = vshrl.u32 %v5234, 7
      %v5236 = vsub.s32 %v5233, %v5235
      %v5237 = vrot.slane %v5223, %v5236
      %v5238 = vcombine.high %v5214, 0.0
      %v5239 = vcombine.high %v5221, 0.0
      %v5240 = vcombine.high %v5230, 0.0
      %v5241 = vcombine.high %v5237, 0.0
      %v5242 = vcombine.low %v5063, %v5127
      %v5243 = vcombine.high %v5063, %v5127
      %v5245 = vunpack.c.l.s4 1983009808
      %v5246 = vunpack.c.0.s8 %v5245
      %v5247 = vlaneseq
      %v5248 = vshrl.u32 %v5247, 7
      %v5249 = vsub.s32 %v5246, %v5248
      %v5250 = vrot.slane %v5242, %v5249
      %v5252 = vunpack.c.l.s4 1983009808
      %v5253 = vunpack.c.0.s8 %v5252
      %v5254 = vlaneseq
      %v5255 = vshrl.u32 %v5254, 7
      %v5256 = vsub.s32 %v5253, %v5255
      %v5257 = vrot.slane %v5243, %v5256
      %v5258 = vcombine.low %v5095, %v5159
      %v5259 = vcombine.high %v5095, %v5159
      %v5261 = vunpack.c.l.s4 1983009808
      %v5262 = vunpack.c.0.s8 %v5261
      %v5263 = vlaneseq
      %v5264 = vshrl.u32 %v5263, 7
      %v5265 = vsub.s32 %v5262, %v5264
      %v5266 = vrot.slane %v5258, %v5265
      %v5268 = vunpack.c.l.s4 1983009808
      %v5269 = vunpack.c.0.s8 %v5268
      %v5270 = vlaneseq
      %v5271 = vshrl.u32 %v5270, 7
      %v5272 = vsub.s32 %v5269, %v5271
      %v5273 = vrot.slane %v5259, %v5272
      %v5274 = vcombine.low %v5250, %v5266
      %v5275 = vcombine.high %v5250, %v5266
      %v5277 = vunpack.c.l.s4 1934713408
      %v5278 = vunpack.c.0.s8 %v5277
      %v5279 = vlaneseq
      %v5280 = vshrl.u32 %v5279, 7
      %v5281 = vsub.s32 %v5278, %v5280
      %v5282 = vrot.slane %v5274, %v5281
      %v5284 = vunpack.c.l.s4 1934713408
      %v5285 = vunpack.c.0.s8 %v5284
      %v5286 = vlaneseq
      %v5287 = vshrl.u32 %v5286, 7
      %v5288 = vsub.s32 %v5285, %v5287
      %v5289 = vrot.slane %v5275, %v5288
      %v5290 = vcombine.low %v5257, %v5273
      %v5291 = vcombine.high %v5257, %v5273
      %v5293 = vunpack.c.l.s4 1934713408
      %v5294 = vunpack.c.0.s8 %v5293
      %v5295 = vlaneseq
      %v5296 = vshrl.u32 %v5295, 7
      %v5297 = vsub.s32 %v5294, %v5296
      %v5298 = vrot.slane %v5290, %v5297
      %v5300 = vunpack.c.l.s4 1934713408
      %v5301 = vunpack.c.0.s8 %v5300
      %v5302 = vlaneseq
      %v5303 = vshrl.u32 %v5302, 7
      %v5304 = vsub.s32 %v5301, %v5303
      %v5305 = vrot.slane %v5291, %v5304
      %v5306 = vcombine.high %v5282, 0.0
      %v5307 = vcombine.high %v5289, 0.0
      %v5308 = vcombine.high %v5298, 0.0
      %v5309 = vcombine.high %v5305, 0.0
      %v5310 = vcombine.low %v5214, %v5221
      %v5312 = vunpack.c.l.s4 1983009808
      %v5313 = vunpack.c.0.s8 %v5312
      %v5314 = vlaneseq
      %v5315 = vshrl.u32 %v5314, 7
      %v5316 = vsub.s32 %v5313, %v5315
      %v5317 = vrot.slane %v5310, %v5316
      %v5318 = vcombine.low %v5238, %v5239
      %v5320 = vunpack.c.l.s4 1983009808
      %v5321 = vunpack.c.0.s8 %v5320
      %v5322 = vlaneseq
      %v5323 = vshrl.u32 %v5322, 7
      %v5324 = vsub.s32 %v5321, %v5323
      %v5325 = vrot.slane %v5318, %v5324
      %v5326 = vcombine.low %v5230, %v5237
      %v5328 = vunpack.c.l.s4 1983009808
      %v5329 = vunpack.c.0.s8 %v5328
      %v5330 = vlaneseq
      %v5331 = vshrl.u32 %v5330, 7
      %v5332 = vsub.s32 %v5329, %v5331
      %v5333 = vrot.slane %v5326, %v5332
      %v5334 = vcombine.low %v5240, %v5241
      %v5336 = vunpack.c.l.s4 1983009808
      %v5337 = vunpack.c.0.s8 %v5336
      %v5338 = vlaneseq
      %v5339 = vshrl.u32 %v5338, 7
      %v5340 = vsub.s32 %v5337, %v5339
      %v5341 = vrot.slane %v5334, %v5340
      %v5342 = vcombine.low %v5317, %v5325
      %v5343 = vcombine.high %v5317, %v5325
      %v5345 = vunpack.c.l.s4 1934713408
      %v5346 = vunpack.c.0.s8 %v5345
      %v5347 = vlaneseq
      %v5348 = vshrl.u32 %v5347, 7
      %v5349 = vsub.s32 %v5346, %v5348
      %v5350 = vrot.slane %v5342, %v5349
      %v5352 = vunpack.c.l.s4 1934713408
      %v5353 = vunpack.c.0.s8 %v5352
      %v5354 = vlaneseq
      %v5355 = vshrl.u32 %v5354, 7
      %v5356 = vsub.s32 %v5353, %v5355
      %v5357 = vrot.slane %v5343, %v5356
      %v5358 = vcombine.low %v5333, %v5341
      %v5359 = vcombine.high %v5333, %v5341
      %v5361 = vunpack.c.l.s4 1934713408
      %v5362 = vunpack.c.0.s8 %v5361
      %v5363 = vlaneseq
      %v5364 = vshrl.u32 %v5363, 7
      %v5365 = vsub.s32 %v5362, %v5364
      %v5366 = vrot.slane %v5358, %v5365
      %v5368 = vunpack.c.l.s4 1934713408
      %v5369 = vunpack.c.0.s8 %v5368
      %v5370 = vlaneseq
      %v5371 = vshrl.u32 %v5370, 7
      %v5372 = vsub.s32 %v5369, %v5371
      %v5373 = vrot.slane %v5359, %v5372
      %v5374 = vcombine.low %v5350, %v5366
      %v5375 = vcombine.high %v5350, %v5366
      %v5376 = vcombine.low %v5357, %v5373
      %v5377 = vcombine.high %v5357, %v5373
      %v5378 = vcombine.low %v5282, %v5289
      %v5380 = vunpack.c.l.s4 1983009808
      %v5381 = vunpack.c.0.s8 %v5380
      %v5382 = vlaneseq
      %v5383 = vshrl.u32 %v5382, 7
      %v5384 = vsub.s32 %v5381, %v5383
      %v5385 = vrot.slane %v5378, %v5384
      %v5386 = vcombine.low %v5306, %v5307
      %v5388 = vunpack.c.l.s4 1983009808
      %v5389 = vunpack.c.0.s8 %v5388
      %v5390 = vlaneseq
      %v5391 = vshrl.u32 %v5390, 7
      %v5392 = vsub.s32 %v5389, %v5391
      %v5393 = vrot.slane %v5386, %v5392
      %v5394 = vcombine.low %v5298, %v5305
      %v5396 = vunpack.c.l.s4 1983009808
      %v5397 = vunpack.c.0.s8 %v5396
      %v5398 = vlaneseq
      %v5399 = vshrl.u32 %v5398, 7
      %v5400 = vsub.s32 %v5397, %v5399
      %v5401 = vrot.slane %v5394, %v5400
      %v5402 = vcombine.low %v5308, %v5309
      %v5404 = vunpack.c.l.s4 1983009808
      %v5405 = vunpack.c.0.s8 %v5404
      %v5406 = vlaneseq
      %v5407 = vshrl.u32 %v5406, 7
      %v5408 = vsub.s32 %v5405, %v5407
      %v5409 = vrot.slane %v5402, %v5408
      %v5410 = vcombine.low %v5385, %v5393
      %v5411 = vcombine.high %v5385, %v5393
      %v5413 = vunpack.c.l.s4 1934713408
      %v5414 = vunpack.c.0.s8 %v5413
      %v5415 = vlaneseq
      %v5416 = vshrl.u32 %v5415, 7
      %v5417 = vsub.s32 %v5414, %v5416
      %v5418 = vrot.slane %v5410, %v5417
      %v5420 = vunpack.c.l.s4 1934713408
      %v5421 = vunpack.c.0.s8 %v5420
      %v5422 = vlaneseq
      %v5423 = vshrl.u32 %v5422, 7
      %v5424 = vsub.s32 %v5421, %v5423
      %v5425 = vrot.slane %v5411, %v5424
      %v5426 = vcombine.low %v5401, %v5409
      %v5427 = vcombine.high %v5401, %v5409
      %v5429 = vunpack.c.l.s4 1934713408
      %v5430 = vunpack.c.0.s8 %v5429
      %v5431 = vlaneseq
      %v5432 = vshrl.u32 %v5431, 7
      %v5433 = vsub.s32 %v5430, %v5432
      %v5434 = vrot.slane %v5426, %v5433
      %v5436 = vunpack.c.l.s4 1934713408
      %v5437 = vunpack.c.0.s8 %v5436
      %v5438 = vlaneseq
      %v5439 = vshrl.u32 %v5438, 7
      %v5440 = vsub.s32 %v5437, %v5439
      %v5441 = vrot.slane %v5427, %v5440
      %v5442 = vcombine.low %v5418, %v5434
      %v5443 = vcombine.high %v5418, %v5434
      %v5444 = vcombine.low %v5425, %v5441
      %v5445 = vcombine.high %v5425, %v5441
      %5448 = vrot.lane.b32.xlu0 %v5375, 32
      %v5449 = vpop.permute.xlu0 %5448
      %5450 = vrot.lane.b32.xlu0 %v5443, 32
      %v5451 = vpop.permute.xlu0 %5450
      %5456 = vrot.lane.b32.xlu0 %v5376, 64
      %v5457 = vpop.permute.xlu0 %5456
      %5458 = vrot.lane.b32.xlu0 %v5444, 64
      %v5459 = vpop.permute.xlu0 %5458
      %5464 = vrot.lane.b32.xlu0 %v5377, 96
      %v5465 = vpop.permute.xlu0 %5464
      %5466 = vrot.lane.b32.xlu0 %v5445, 96
      %v5467 = vpop.permute.xlu0 %5466
      %v5470 = vsel %vm2880, %v5374, %v5449
      %v5471 = vsel %vm2880, %v5442, %v5451
      %vm5472 = vcmask 523264
      %v5473 = vsel %vm5472, %v5470, %v5457
      %v5474 = vsel %vm5472, %v5471, %v5459
      %vm5475 = vcmask 785408
      %v5476 = vsel %vm5475, %v5473, %v5465
      %v5477 = vsel %vm5475, %v5474, %v5467
      %v5478 = vpack.c.bf16 %v5477, %v5476
      %v5479 = vld [vmem:[%s5] sm:$0xf]
      %v5480 = vld [vmem:[%s5 + $0x4] sm:$0xf]
      %v5481 = vld [vmem:[%s5 + $0x8] sm:$0xf]
      %v5482 = vld [vmem:[%s5 + $0xc] sm:$0xf]
      %v5483 = vld [vmem:[%s5 + $0x10] sm:$0xf]
      %v5484 = vld [vmem:[%s5 + $0x14] sm:$0xf]
      %v5485 = vld [vmem:[%s5 + $0x18] sm:$0xf]
      %v5486 = vld [vmem:[%s5 + $0x1c] sm:$0xf]
      %v5487 = vld [vmem:[%s5 + $0x20] sm:$0xf]
      %v5488 = vld [vmem:[%s5 + $0x24] sm:$0xf]
      %v5489 = vld [vmem:[%s5 + $0x28] sm:$0xf]
      %v5490 = vld [vmem:[%s5 + $0x2c] sm:$0xf]
      %v5491 = vld [vmem:[%s5 + $0x30] sm:$0xf]
      %v5492 = vld [vmem:[%s5 + $0x34] sm:$0xf]
      %v5493 = vld [vmem:[%s5 + $0x38] sm:$0xf]
      %v5494 = vld [vmem:[%s5 + $0x3c] sm:$0xf]
      %v5511 = vunpack.c.l.b16 %v5479
      %v5512 = vunpack.c.l.b16 %v5480
      %v5513 = vunpack.c.l.b16 %v5481
      %v5514 = vunpack.c.l.b16 %v5482
      %v5515 = vunpack.c.l.b16 %v5483
      %v5516 = vunpack.c.l.b16 %v5484
      %v5517 = vunpack.c.l.b16 %v5485
      %v5518 = vunpack.c.l.b16 %v5486
      %v5519 = vunpack.c.l.b16 %v5487
      %v5520 = vunpack.c.l.b16 %v5488
      %v5521 = vunpack.c.l.b16 %v5489
      %v5522 = vunpack.c.l.b16 %v5490
      %v5523 = vunpack.c.l.b16 %v5491
      %v5524 = vunpack.c.l.b16 %v5492
      %v5525 = vunpack.c.l.b16 %v5493
      %v5526 = vunpack.c.l.b16 %v5494
      %v5527 = vpack.c.b16 %v5512, %v5511
      %v5528 = vpack.c.b16 %v5514, %v5513
      %v5529 = vpack.c.b16 %v5516, %v5515
      %v5530 = vpack.c.b16 %v5518, %v5517
      %v5531 = vpack.c.b16 %v5520, %v5519
      %v5532 = vpack.c.b16 %v5522, %v5521
      %v5533 = vpack.c.b16 %v5524, %v5523
      %v5534 = vpack.c.b16 %v5526, %v5525
      %5543 = vmatprep.subr.bf16.mxu0 0
      %5544 = vmatpush1.bf16.msra.mxu0 %v5527
      %5545 = vmatprep.subr.bf16.mxu0 0
      %5546 = vmatpush1.bf16.msra.mxu0 %v5528
      %5547 = vmatprep.subr.bf16.mxu0 0
      %5548 = vmatpush1.bf16.msra.mxu0 %v5529
      %5549 = vmatprep.subr.bf16.mxu0 0
      %5550 = vmatpush1.bf16.msra.mxu0 %v5530
      %5551 = vmatprep.subr.bf16.mxu0 0
      %5552 = vmatpush1.bf16.msra.mxu0 %v5531
      %5553 = vmatprep.subr.bf16.mxu0 0
      %5554 = vmatpush1.bf16.msra.mxu0 %v5532
      %5555 = vmatprep.subr.bf16.mxu0 0
      %5556 = vmatpush1.bf16.msra.mxu0 %v5533
      %5557 = vmatprep.subr.bf16.mxu0 0
      %5558 = vmatpush1.bf16.msra.mxu0 %v5534
      %5559 = vmatprep.subr.bf16.mxu0 0
      %5560 = vmatpush1.bf16.msra.mxu0 0
      %5561 = vmatprep.subr.bf16.mxu0 0
      %5562 = vmatpush1.bf16.msra.mxu0 0
      %5563 = vmatprep.subr.bf16.mxu0 0
      %5564 = vmatpush1.bf16.msra.mxu0 0
      %5565 = vmatprep.subr.bf16.mxu0 0
      %5566 = vmatpush1.bf16.msra.mxu0 0
      %5567 = vmatprep.subr.bf16.mxu0 0
      %5568 = vmatpush1.bf16.msra.mxu0 0
      %5569 = vmatprep.subr.bf16.mxu0 0
      %5570 = vmatpush1.bf16.msra.mxu0 0
      %5571 = vmatprep.subr.bf16.mxu0 0
      %5572 = vmatpush1.bf16.msra.mxu0 0
      %5573 = vmatprep.subr.bf16.mxu0 0
      %5574 = vmatpush1.bf16.msra.mxu0 0
      %5575 = vmatprep.mubr.bf16.mxu0 0
      %5576 = vmatmul.mubr.bf16.gmra.mrb[0].mxu0 %v5478
      %v5577 = vpop.f32.mrb[0].mxu0
      %v5578 = vadd.f32 0.0, %v5577
      %v5579 = vpop.f32.mrb[0].mxu0
      %v5580 = vpop.f32.mrb[0].mxu0
      %v5581 = vadd.f32 0.0, %v5580
      %v5582 = vpop.f32.mrb[0].mxu0
      %5583 = vdwg.mxu0
      %v5584 = vadd.f32 %v307, %v5578
      %v5585 = vadd.f32 %v308, %v5581
      %v5586 = vld [vmem:[%s3] sm:$0x1]
      %v5587 = vmul.f32 %v5584, %v5584
      %v5588 = vmul.f32 %v5585, %v5585
      %5589 = vadd.xlane.f32.xlu0 %v5587
      %v5590 = vpop.xlane.xlu0 %5589
      %5591 = vadd.xlane.f32.xlu0 %v5588
      %v5592 = vpop.xlane.xlu0 %5591
      %v5593 = vmul.f32 %v5590, %v316
      %v5594 = vmul.f32 %v5592, %v316
      %v5595 = vadd.f32 %v5593, 1e-05
      %v5596 = vadd.f32 %v5594, 1e-05
      %v5597 = vrsqrt.pop %v5595
      %v5598 = vrsqrt.pop %v5596
      %v5599 = vmul.f32 %v5584, %v5597
      %v5600 = vmul.f32 %v5585, %v5598
      %v5602 = vlaneseq
      %v5603 = vshrl.u32 %v5602, 7
      %v5604 = vsub.s32 0, %v5603
      %v5605 = vrot.slane %v5586, %v5604
      %v5607 = vmul.f32 %v5599, %v5605
      %v5608 = vmul.f32 %v5600, %v5605
      %v5609 = vpack.c.bf16 %v5608, %v5607
      %v5610 = vld [vmem:[%s6] sm:$0xff]
      %v5611 = vld [vmem:[%s6 + $0x8] sm:$0xff]
      %v5612 = vld [vmem:[%s6 + $0x10] sm:$0xff]
      %v5613 = vld [vmem:[%s6 + $0x18] sm:$0xff]
      %v5614 = vld [vmem:[%s6 + $0x20] sm:$0xff]
      %v5615 = vld [vmem:[%s6 + $0x28] sm:$0xff]
      %v5616 = vld [vmem:[%s6 + $0x30] sm:$0xff]
      %v5617 = vld [vmem:[%s6 + $0x38] sm:$0xff]
      %v5618 = vld [vmem:[%s6 + $0x40] sm:$0xff]
      %v5619 = vld [vmem:[%s6 + $0x48] sm:$0xff]
      %v5620 = vld [vmem:[%s6 + $0x50] sm:$0xff]
      %v5621 = vld [vmem:[%s6 + $0x58] sm:$0xff]
      %v5622 = vld [vmem:[%s6 + $0x60] sm:$0xff]
      %v5623 = vld [vmem:[%s6 + $0x68] sm:$0xff]
      %v5624 = vld [vmem:[%s6 + $0x70] sm:$0xff]
      %v5625 = vld [vmem:[%s6 + $0x78] sm:$0xff]
      %v5642 = vunpack.c.l.b16 %v5610
      %v5643 = vunpack.c.h.b16 %v5610
      %v5644 = vunpack.c.l.b16 %v5611
      %v5645 = vunpack.c.h.b16 %v5611
      %v5646 = vunpack.c.l.b16 %v5612
      %v5647 = vunpack.c.h.b16 %v5612
      %v5648 = vunpack.c.l.b16 %v5613
      %v5649 = vunpack.c.h.b16 %v5613
      %v5650 = vunpack.c.l.b16 %v5614
      %v5651 = vunpack.c.h.b16 %v5614
      %v5652 = vunpack.c.l.b16 %v5615
      %v5653 = vunpack.c.h.b16 %v5615
      %v5654 = vunpack.c.l.b16 %v5616
      %v5655 = vunpack.c.h.b16 %v5616
      %v5656 = vunpack.c.l.b16 %v5617
      %v5657 = vunpack.c.h.b16 %v5617
      %v5658 = vunpack.c.l.b16 %v5618
      %v5659 = vunpack.c.h.b16 %v5618
      %v5660 = vunpack.c.l.b16 %v5619
      %v5661 = vunpack.c.h.b16 %v5619
      %v5662 = vunpack.c.l.b16 %v5620
      %v5663 = vunpack.c.h.b16 %v5620
      %v5664 = vunpack.c.l.b16 %v5621
      %v5665 = vunpack.c.h.b16 %v5621
      %v5666 = vunpack.c.l.b16 %v5622
      %v5667 = vunpack.c.h.b16 %v5622
      %v5668 = vunpack.c.l.b16 %v5623
      %v5669 = vunpack.c.h.b16 %v5623
      %v5670 = vunpack.c.l.b16 %v5624
      %v5671 = vunpack.c.h.b16 %v5624
      %v5672 = vunpack.c.l.b16 %v5625
      %v5673 = vunpack.c.h.b16 %v5625
      %v5674 = vpack.c.b16 %v5644, %v5642
      %v5675 = vpack.c.b16 %v5645, %v5643
      %v5676 = vpack.c.b16 %v5648, %v5646
      %v5677 = vpack.c.b16 %v5649, %v5647
      %v5678 = vpack.c.b16 %v5652, %v5650
      %v5679 = vpack.c.b16 %v5653, %v5651
      %v5680 = vpack.c.b16 %v5656, %v5654
      %v5681 = vpack.c.b16 %v5657, %v5655
      %v5682 = vpack.c.b16 %v5660, %v5658
      %v5683 = vpack.c.b16 %v5661, %v5659
      %v5684 = vpack.c.b16 %v5664, %v5662
      %v5685 = vpack.c.b16 %v5665, %v5663
      %v5686 = vpack.c.b16 %v5668, %v5666
      %v5687 = vpack.c.b16 %v5669, %v5667
      %v5688 = vpack.c.b16 %v5672, %v5670
      %v5689 = vpack.c.b16 %v5673, %v5671
      %5706 = vmatprep.subr.bf16.mxu0 %v5675
      %5707 = vmatpush1.bf16.msra.mxu0 %v5674
      %5708 = vmatprep.subr.bf16.mxu0 %v5677
      %5709 = vmatpush1.bf16.msra.mxu0 %v5676
      %5710 = vmatprep.subr.bf16.mxu0 %v5679
      %5711 = vmatpush1.bf16.msra.mxu0 %v5678
      %5712 = vmatprep.subr.bf16.mxu0 %v5681
      %5713 = vmatpush1.bf16.msra.mxu0 %v5680
      %5714 = vmatprep.subr.bf16.mxu0 %v5683
      %5715 = vmatpush1.bf16.msra.mxu0 %v5682
      %5716 = vmatprep.subr.bf16.mxu0 %v5685
      %5717 = vmatpush1.bf16.msra.mxu0 %v5684
      %5718 = vmatprep.subr.bf16.mxu0 %v5687
      %5719 = vmatpush1.bf16.msra.mxu0 %v5686
      %5720 = vmatprep.subr.bf16.mxu0 %v5689
      %5721 = vmatpush1.bf16.msra.mxu0 %v5688
      %5722 = vmatprep.subr.bf16.mxu0 0
      %5723 = vmatpush1.bf16.msra.mxu0 0
      %5724 = vmatprep.subr.bf16.mxu0 0
      %5725 = vmatpush1.bf16.msra.mxu0 0
      %5726 = vmatprep.subr.bf16.mxu0 0
      %5727 = vmatpush1.bf16.msra.mxu0 0
      %5728 = vmatprep.subr.bf16.mxu0 0
      %5729 = vmatpush1.bf16.msra.mxu0 0
      %5730 = vmatprep.subr.bf16.mxu0 0
      %5731 = vmatpush1.bf16.msra.mxu0 0
      %5732 = vmatprep.subr.bf16.mxu0 0
      %5733 = vmatpush1.bf16.msra.mxu0 0
      %5734 = vmatprep.subr.bf16.mxu0 0
      %5735 = vmatpush1.bf16.msra.mxu0 0
      %5736 = vmatprep.subr.bf16.mxu0 0
      %5737 = vmatpush1.bf16.msra.mxu0 0
      %5738 = vmatprep.mubr.bf16.mxu0 0
      %5739 = vmatmul.mubr.bf16.gmra.mrb[0].mxu0 %v5609
      %v5740 = vpop.f32.mrb[0].mxu0
      %v5741 = vadd.f32 0.0, %v5740
      %v5742 = vpop.f32.mrb[0].mxu0
      %v5743 = vadd.f32 0.0, %v5742
      %v5744 = vpop.f32.mrb[0].mxu0
      %v5745 = vadd.f32 0.0, %v5744
      %v5746 = vpop.f32.mrb[0].mxu0
      %v5747 = vadd.f32 0.0, %v5746
      %5748 = vdwg.mxu0
      %v5749 = vmul.f32 %v5741, 0.70710677
      %v5750 = vmul.f32 %v5743, 0.70710677
      %v5751 = vmul.f32 %v5745, 0.70710677
      %v5752 = vmul.f32 %v5747, 0.70710677
      %v5753 = verf.f32.pop %v5749
      %v5754 = verf.f32.pop %v5750
      %v5755 = verf.f32.pop %v5751
      %v5756 = verf.f32.pop %v5752
      %v5757 = vadd.f32 %v5753, 1.0
      %v5758 = vadd.f32 %v5754, 1.0
      %v5759 = vadd.f32 %v5755, 1.0
      %v5760 = vadd.f32 %v5756, 1.0
      %v5761 = vmul.f32 %v5741, %v5757
      %v5762 = vmul.f32 %v5743, %v5758
      %v5763 = vmul.f32 %v5745, %v5759
      %v5764 = vmul.f32 %v5747, %v5760
      %v5765 = vmul.f32 %v5761, 0.5
      %v5766 = vmul.f32 %v5762, 0.5
      %v5767 = vmul.f32 %v5763, 0.5
      %v5768 = vmul.f32 %v5764, 0.5
      %v5769 = vpack.c.bf16 %v5767, %v5765
      %v5770 = vpack.c.bf16 %v5768, %v5766
      %v5771 = vld [vmem:[%s7] sm:$0xf]
      %v5772 = vld [vmem:[%s7 + $0x4] sm:$0xf]
      %v5773 = vld [vmem:[%s7 + $0x8] sm:$0xf]
      %v5774 = vld [vmem:[%s7 + $0xc] sm:$0xf]
      %v5775 = vld [vmem:[%s7 + $0x10] sm:$0xf]
      %v5776 = vld [vmem:[%s7 + $0x14] sm:$0xf]
      %v5777 = vld [vmem:[%s7 + $0x18] sm:$0xf]
      %v5778 = vld [vmem:[%s7 + $0x1c] sm:$0xf]
      %v5779 = vld [vmem:[%s7 + $0x20] sm:$0xf]
      %v5780 = vld [vmem:[%s7 + $0x24] sm:$0xf]
      %v5781 = vld [vmem:[%s7 + $0x28] sm:$0xf]
      %v5782 = vld [vmem:[%s7 + $0x2c] sm:$0xf]
      %v5783 = vld [vmem:[%s7 + $0x30] sm:$0xf]
      %v5784 = vld [vmem:[%s7 + $0x34] sm:$0xf]
      %v5785 = vld [vmem:[%s7 + $0x38] sm:$0xf]
      %v5786 = vld [vmem:[%s7 + $0x3c] sm:$0xf]
      %v5787 = vld [vmem:[%s7 + $0x40] sm:$0xf]
      %v5788 = vld [vmem:[%s7 + $0x44] sm:$0xf]
      %v5789 = vld [vmem:[%s7 + $0x48] sm:$0xf]
      %v5790 = vld [vmem:[%s7 + $0x4c] sm:$0xf]
      %v5791 = vld [vmem:[%s7 + $0x50] sm:$0xf]
      %v5792 = vld [vmem:[%s7 + $0x54] sm:$0xf]
      %v5793 = vld [vmem:[%s7 + $0x58] sm:$0xf]
      %v5794 = vld [vmem:[%s7 + $0x5c] sm:$0xf]
      %v5795 = vld [vmem:[%s7 + $0x60] sm:$0xf]
      %v5796 = vld [vmem:[%s7 + $0x64] sm:$0xf]
      %v5797 = vld [vmem:[%s7 + $0x68] sm:$0xf]
      %v5798 = vld [vmem:[%s7 + $0x6c] sm:$0xf]
      %v5799 = vld [vmem:[%s7 + $0x70] sm:$0xf]
      %v5800 = vld [vmem:[%s7 + $0x74] sm:$0xf]
      %v5801 = vld [vmem:[%s7 + $0x78] sm:$0xf]
      %v5802 = vld [vmem:[%s7 + $0x7c] sm:$0xf]
      %v5835 = vunpack.c.l.b16 %v5771
      %v5836 = vunpack.c.l.b16 %v5772
      %v5837 = vunpack.c.l.b16 %v5773
      %v5838 = vunpack.c.l.b16 %v5774
      %v5839 = vunpack.c.l.b16 %v5775
      %v5840 = vunpack.c.l.b16 %v5776
      %v5841 = vunpack.c.l.b16 %v5777
      %v5842 = vunpack.c.l.b16 %v5778
      %v5843 = vunpack.c.l.b16 %v5779
      %v5844 = vunpack.c.l.b16 %v5780
      %v5845 = vunpack.c.l.b16 %v5781
      %v5846 = vunpack.c.l.b16 %v5782
      %v5847 = vunpack.c.l.b16 %v5783
      %v5848 = vunpack.c.l.b16 %v5784
      %v5849 = vunpack.c.l.b16 %v5785
      %v5850 = vunpack.c.l.b16 %v5786
      %v5851 = vunpack.c.l.b16 %v5787
      %v5852 = vunpack.c.l.b16 %v5788
      %v5853 = vunpack.c.l.b16 %v5789
      %v5854 = vunpack.c.l.b16 %v5790
      %v5855 = vunpack.c.l.b16 %v5791
      %v5856 = vunpack.c.l.b16 %v5792
      %v5857 = vunpack.c.l.b16 %v5793
      %v5858 = vunpack.c.l.b16 %v5794
      %v5859 = vunpack.c.l.b16 %v5795
      %v5860 = vunpack.c.l.b16 %v5796
      %v5861 = vunpack.c.l.b16 %v5797
      %v5862 = vunpack.c.l.b16 %v5798
      %v5863 = vunpack.c.l.b16 %v5799
      %v5864 = vunpack.c.l.b16 %v5800
      %v5865 = vunpack.c.l.b16 %v5801
      %v5866 = vunpack.c.l.b16 %v5802
      %v5867 = vpack.c.b16 %v5836, %v5835
      %v5868 = vpack.c.b16 %v5838, %v5837
      %v5869 = vpack.c.b16 %v5840, %v5839
      %v5870 = vpack.c.b16 %v5842, %v5841
      %v5871 = vpack.c.b16 %v5844, %v5843
      %v5872 = vpack.c.b16 %v5846, %v5845
      %v5873 = vpack.c.b16 %v5848, %v5847
      %v5874 = vpack.c.b16 %v5850, %v5849
      %v5875 = vpack.c.b16 %v5852, %v5851
      %v5876 = vpack.c.b16 %v5854, %v5853
      %v5877 = vpack.c.b16 %v5856, %v5855
      %v5878 = vpack.c.b16 %v5858, %v5857
      %v5879 = vpack.c.b16 %v5860, %v5859
      %v5880 = vpack.c.b16 %v5862, %v5861
      %v5881 = vpack.c.b16 %v5864, %v5863
      %v5882 = vpack.c.b16 %v5866, %v5865
      %5899 = vmatprep.subr.bf16.mxu0 0
      %5900 = vmatpush1.bf16.msra.mxu0 %v5867
      %5901 = vmatprep.subr.bf16.mxu0 0
      %5902 = vmatpush1.bf16.msra.mxu0 %v5868
      %5903 = vmatprep.subr.bf16.mxu0 0
      %5904 = vmatpush1.bf16.msra.mxu0 %v5869
      %5905 = vmatprep.subr.bf16.mxu0 0
      %5906 = vmatpush1.bf16.msra.mxu0 %v5870
      %5907 = vmatprep.subr.bf16.mxu0 0
      %5908 = vmatpush1.bf16.msra.mxu0 %v5871
      %5909 = vmatprep.subr.bf16.mxu0 0
      %5910 = vmatpush1.bf16.msra.mxu0 %v5872
      %5911 = vmatprep.subr.bf16.mxu0 0
      %5912 = vmatpush1.bf16.msra.mxu0 %v5873
      %5913 = vmatprep.subr.bf16.mxu0 0
      %5914 = vmatpush1.bf16.msra.mxu0 %v5874
      %5915 = vmatprep.subr.bf16.mxu0 0
      %5916 = vmatpush1.bf16.msra.mxu0 %v5875
      %5917 = vmatprep.subr.bf16.mxu0 0
      %5918 = vmatpush1.bf16.msra.mxu0 %v5876
      %5919 = vmatprep.subr.bf16.mxu0 0
      %5920 = vmatpush1.bf16.msra.mxu0 %v5877
      %5921 = vmatprep.subr.bf16.mxu0 0
      %5922 = vmatpush1.bf16.msra.mxu0 %v5878
      %5923 = vmatprep.subr.bf16.mxu0 0
      %5924 = vmatpush1.bf16.msra.mxu0 %v5879
      %5925 = vmatprep.subr.bf16.mxu0 0
      %5926 = vmatpush1.bf16.msra.mxu0 %v5880
      %5927 = vmatprep.subr.bf16.mxu0 0
      %5928 = vmatpush1.bf16.msra.mxu0 %v5881
      %5929 = vmatprep.subr.bf16.mxu0 0
      %5930 = vmatpush1.bf16.msra.mxu0 %v5882
      %5931 = vmatprep.mubr.bf16.mxu0 %v5770
      %5932 = vmatmul.mubr.bf16.gmra.mrb[0].mxu0 %v5769
      %v5933 = vpop.f32.mrb[0].mxu0
      %v5934 = vadd.f32 0.0, %v5933
      %v5935 = vpop.f32.mrb[0].mxu0
      %v5936 = vpop.f32.mrb[0].mxu0
      %v5937 = vadd.f32 0.0, %v5936
      %v5938 = vpop.f32.mrb[0].mxu0
      %5939 = vdwg.mxu0
      %v5940 = vadd.f32 %v5584, %v5934
      %v5941 = vadd.f32 %v5585, %v5937
      %5942 = vst [vmem:[%s305] sm:$0xff] %v5940
      %5943 = vst [vmem:[%s305 + $0x8] sm:$0xff] %v5941
      %p5944 = scmp.lt.s32.totalorder %s19, 1
      %s5945 = scalar_select %p5944, %s19, 1
      %s5946 = smul.addr %s5945, 2
      %s5947 = smul.addr %s5946, 8
      %s5948 = scalar_lea.vmem %s8, %s5947
      // Predicated region
      $region53: #{transformer_lm_forward.3} parent=51 // pred_check
        %p5949 = pneg %p210
      $region54: #{transformer_lm_forward.3} parent=51 // pred_check_branch
        %5951 = sbr.rel (%p5949) target = $region56
      $region55: #{transformer_lm_forward.3} parent=51 // pred_region
        _
      $region56: #{transformer_lm_forward.3} parent=51 // pred_fallthru
        _
    $region52: #{transformer_lm_forward.3} parent=5 // pred_fallthru
      _
    %p5952 = scmp.le.s32.totalorder 2, %s14
    // Predicated region
    $region57: #{transformer_lm_forward.3} parent=5 // pred_check
      %p5953 = pneg %p5952
    $region58: #{transformer_lm_forward.3} parent=5 // pred_check_branch
      %5955 = sbr.rel (%p5953) target = $region60
    $region59: #{transformer_lm_forward.3} parent=5 // pred_region
      %s5956 = ssub.s32 %s14, 2
      // Predicated region
      $region61: #{transformer_lm_forward.3} parent=59 // pred_check
        %p5957 = pneg %p216
      $region62: #{transformer_lm_forward.3} parent=59 // pred_check_branch
        %5959 = sbr.rel (%p5957) target = $region64
      $region63: #{transformer_lm_forward.3} parent=59 // pred_region
        %p5960 = scmp.lt.s32.totalorder %s20, 1
        %s5961 = scalar_select %p5960, %s20, 1
        %s5962 = smul.addr %s5961, 2
        %s5963 = smul.addr %s5962, 8
        %s5964 = scalar_lea.vmem %s8, %s5963
      $region64: #{transformer_lm_forward.3} parent=59 // pred_fallthru
        _
    $region60: #{transformer_lm_forward.3} parent=5 // pred_fallthru
      _
  $region6: #{transformer_lm_forward.3} parent=0 // loop_footer
    %s18 = sadd.s32 1, %s14
  $region7: #{transformer_lm_forward.3} parent=0 // loop_footer_branch
    %13 = sbr.rel target = $region3
  $region8: #{transformer_lm_forward.3} parent=0 // loop_exit
    _

</llo_original>
